<compile_context>
chip_gen: v7x
topology: tpu7x:2x2x1
jax: 0.10.0
libtpu: 0.0.40
codegen_flags: <defaults>
</compile_context>

<pallas_src>
import math

import jax
import jax.numpy as jnp
from jax.experimental import pallas as pl
from jax.experimental.pallas import tpu as pltpu

D_IN = 784            # flattened MNIST image (decoder output width, NOT padded)
D_H = 400             # logical hidden width
D_H_PAD = 512         # lane-dense hidden width (weight-side zero padding only)
D_Z = 20              # latent width
HEAD_OFF = 128        # lane-aligned offset of the logvar half in the fused head
D_HEAD = 2 * HEAD_OFF # fused fc21||fc22 width: mu @ [0:20], logvar @ [128:148]


# -----------------------------------------------------------------------------
# Kernel: one batch tile of the full VAE forward.
# x arrives already in the weight dtype; biases/eps/exp/tanh stay f32; matmuls
# accumulate in f32 on the MXU.
# -----------------------------------------------------------------------------
def vae_fwd_kernel(
    x_ref, eps_ref,
    w1_ref, b1_ref,
    w2_ref, b2_ref,
    w3_ref, b3_ref,
    w4_ref, b4_ref,
    rx_ref, mu_ref, logvar_ref,
):
    wdt = w1_ref.dtype                          # f32 or bf16 (weights + x)

    # ----- encode -----
    h1 = jnp.dot(x_ref[...], w1_ref[...],
                 preferred_element_type=jnp.float32) + b1_ref[...]
    h1 = jnp.maximum(h1, 0.0)                   # (TM, 512) f32, lane-dense

    y2 = jnp.dot(h1.astype(wdt), w2_ref[...],
                 preferred_element_type=jnp.float32) + b2_ref[...]   # (TM, 256)
    mu = y2[:, :D_Z]                            # (TM, 20)
    logvar = y2[:, HEAD_OFF:HEAD_OFF + D_Z]     # (TM, 20)

    # ----- reparameterize (f32 elementwise; exp on EUP) -----
    z = eps_ref[...] * jnp.exp(0.5 * logvar) + mu            # (TM, 20) f32

    # ----- decode -----
    h3 = jnp.dot(z.astype(wdt), w3_ref[...],
                 preferred_element_type=jnp.float32) + b3_ref[...]
    h3 = jnp.maximum(h3, 0.0)                   # (TM, 512) f32, lane-dense
    rx = jnp.tanh(jnp.dot(h3.astype(wdt), w4_ref[...],
                          preferred_element_type=jnp.float32) + b4_ref[...])  # (TM, 784)

    rx_ref[...] = rx.astype(rx_ref.dtype)
    mu_ref[...] = mu
    logvar_ref[...] = logvar


# -----------------------------------------------------------------------------
# Batch-tile selection: prefer tiles that (a) divide B exactly (no jnp.pad),
# (b) leave >= 4 grid steps (2 per v7x core, pipeline overlap), then >= 2.
# -----------------------------------------------------------------------------
_TM_CANDIDATES = (1024, 512, 256, 128)


def _pick_block_m(batch):
    for min_steps in (4, 2):
        for tm in _TM_CANDIDATES:
            if batch % tm == 0 and batch // tm >= min_steps:
                return tm
    # Tiny batches: single grid step but no padding.
    for tm in _TM_CANDIDATES + (64, 32, 16, 8):
        if batch % tm == 0:
            return tm
    # Ragged fallback (rare): pad up to 128-row tiles.
    return 256 if batch >= 1024 else 128


# -----------------------------------------------------------------------------
# Wrapper
# -----------------------------------------------------------------------------
def vae_forward(x, eps, params, *, block_m=None, rx_dtype=None):
    """x: (B, 784), eps: (B, 20), params: dict from prepare_params().

    Returns (rx, mu, logvar) with rx in `rx_dtype` (defaults to the weight
    dtype: bf16 weights -> bf16 rx, halving the largest output stream).
    """
    f32 = jnp.float32
    B = x.shape[0]
    wdt = params["w1"].dtype
    if rx_dtype is None:
        rx_dtype = wdt

    tm = block_m if block_m is not None else _pick_block_m(B)
    n_blocks = pl.cdiv(B, tm)
    b_pad = n_blocks * tm

    # Feed x in the weight dtype (no in-kernel cast; halves x HBM traffic for
    # bf16). Callers should pass bf16 x directly to avoid this wrapper cast.
    x = x.astype(wdt)
    eps = eps.astype(f32)
    if b_pad != B:                              # rare ragged-tail fallback
        x = jnp.pad(x, ((0, b_pad - B), (0, 0)))
        eps = jnp.pad(eps, ((0, b_pad - B), (0, 0)))

    weights = (
        params["w1"], params["b1"],
        params["w2"], params["b2"],
        params["w3"], params["b3"],
        params["w4"], params["b4"],
    )

    # Activation tiles walk the batch; weights/biases use a constant index_map
    # so they are copied in once and stay VMEM-resident across the grid.
    act_specs = [
        pl.BlockSpec((tm, D_IN), lambda i: (i, 0)),   # x
        pl.BlockSpec((tm, D_Z), lambda i: (i, 0)),    # eps
    ]
    w_specs = [pl.BlockSpec(w.shape, lambda i: (0, 0)) for w in weights]

    out_shapes = (
        jax.ShapeDtypeStruct((b_pad, D_IN), rx_dtype),   # rx (unpadded 784 wide)
        jax.ShapeDtypeStruct((b_pad, D_Z), f32),         # mu
        jax.ShapeDtypeStruct((b_pad, D_Z), f32),         # logvar
    )
    out_specs = (
        pl.BlockSpec((tm, D_IN), lambda i: (i, 0)),
        pl.BlockSpec((tm, D_Z), lambda i: (i, 0)),
        pl.BlockSpec((tm, D_Z), lambda i: (i, 0)),
    )

    flops = 2 * b_pad * (D_IN * D_H_PAD + D_H_PAD * D_HEAD
                         + D_Z * D_H_PAD + D_H_PAD * D_IN)
    transcendentals = b_pad * (D_Z + D_IN)               # exp + tanh
    bytes_accessed = (
        int(x.size) * x.dtype.itemsize + int(eps.size) * 4
        + sum(int(w.size) * w.dtype.itemsize for w in weights)
        + b_pad * D_IN * jnp.dtype(rx_dtype).itemsize
        + 2 * b_pad * D_Z * 4
    )

    rx, mu, logvar = pl.pallas_call(
        vae_fwd_kernel,
        out_shape=out_shapes,
        grid=(n_blocks,),
        in_specs=act_specs + w_specs,
        out_specs=out_specs,
        compiler_params=pltpu.CompilerParams(
            dimension_semantics=("parallel",),     # shard batch across v7x cores
            vmem_limit_bytes=32 * 1024 * 1024,     # footprint <= ~20 MiB at tm=1024
        ),
        cost_estimate=pl.CostEstimate(
            flops=flops,
            transcendentals=transcendentals,
            bytes_accessed=bytes_accessed,
        ),
    )(x, eps, *weights)

    if b_pad != B:
        return rx[:B], mu[:B], logvar[:B]
    return rx, mu, logvar


# -----------------------------------------------------------------------------
# Parameter init (PyTorch nn.Linear layout: W (out, in), b (out,)) and kernel prep
# -----------------------------------------------------------------------------
def init_params(key):
    layer_dims = {
        "fc1": (D_IN, D_H),
        "fc21": (D_H, D_Z),
        "fc22": (D_H, D_Z),
        "fc3": (D_Z, D_H),
        "fc4": (D_H, D_IN),
    }
    raw = {}
    for name, (fan_in, fan_out) in layer_dims.items():
        key, kw, kb = jax.random.split(key, 3)
        bound = 1.0 / jnp.sqrt(fan_in)
        raw[f"{name}_w"] = jax.random.uniform(
            kw, (fan_out, fan_in), jnp.float32, -bound, bound)
        raw[f"{name}_b"] = jax.random.uniform(
            kb, (fan_out,), jnp.float32, -bound, bound)
    return raw


def prepare_params(raw, weight_dtype=jnp.bfloat16):
    """Transpose to (in, out), fuse fc21/fc22 into one lane-aligned 256-wide head,
    zero-pad the hidden width 400 -> 512 on the weight side only, and cast the
    weight matrices (not the biases) to weight_dtype."""
    f32 = jnp.float32

    def wcast(w):
        return w.astype(weight_dtype)

    # fc1: (784, 400) -> (784, 512); extra output columns are zero (relu(0)=0).
    w1 = jnp.zeros((D_IN, D_H_PAD), f32).at[:, :D_H].set(raw["fc1_w"].T)
    b1 = jnp.zeros((1, D_H_PAD), f32).at[0, :D_H].set(raw["fc1_b"])

    # Fused encoder head: K padded to 512 (zero rows), mu columns at lanes
    # [0:20], logvar at [128:148].
    w2 = jnp.zeros((D_H_PAD, D_HEAD), f32)
    w2 = w2.at[:D_H, :D_Z].set(raw["fc21_w"].T)
    w2 = w2.at[:D_H, HEAD_OFF:HEAD_OFF + D_Z].set(raw["fc22_w"].T)
    b2 = jnp.zeros((1, D_HEAD), f32)
    b2 = b2.at[0, :D_Z].set(raw["fc21_b"])
    b2 = b2.at[0, HEAD_OFF:HEAD_OFF + D_Z].set(raw["fc22_b"])

    # fc3: (20, 400) -> (20, 512); fc4: (400, 784) -> (512, 784) with zero rows
    # for the padded hidden columns. Decoder output stays 784 wide (no lane pad).
    w3 = jnp.zeros((D_Z, D_H_PAD), f32).at[:, :D_H].set(raw["fc3_w"].T)
    b3 = jnp.zeros((1, D_H_PAD), f32).at[0, :D_H].set(raw["fc3_b"])
    w4 = jnp.zeros((D_H_PAD, D_IN), f32).at[:D_H, :].set(raw["fc4_w"].T)
    b4 = raw["fc4_b"].reshape(1, D_IN).astype(f32)

    return {
        "w1": wcast(w1), "b1": b1,
        "w2": wcast(w2), "b2": b2,
        "w3": wcast(w3), "b3": b3,
        "w4": wcast(w4), "b4": b4,
    }


# -----------------------------------------------------------------------------
# Pure-JAX reference (PyTorch layout) for correctness checks
# -----------------------------------------------------------------------------
def vae_forward_ref(x, eps, raw):
    h1 = jnp.maximum(x @ raw["fc1_w"].T + raw["fc1_b"], 0.0)
    mu = h1 @ raw["fc21_w"].T + raw["fc21_b"]
    logvar = h1 @ raw["fc22_w"].T + raw["fc22_b"]
    z = eps * jnp.exp(0.5 * logvar) + mu
    h3 = jnp.maximum(z @ raw["fc3_w"].T + raw["fc3_b"], 0.0)
    rx = jnp.tanh(h3 @ raw["fc4_w"].T + raw["fc4_b"])
    return rx, mu, logvar


if __name__ == "__main__":
    key = jax.random.PRNGKey(0)
    key, kx, keps, kp = jax.random.split(key, 4)

    B = 256                                             # small MNIST-sized batch
    x = jax.random.uniform(kx, (B, D_IN), jnp.float32)  # fake MNIST batch
    eps = jax.random.normal(keps, (B, D_Z), jnp.float32)
    raw = init_params(kp)

    rx_r, mu_r, lv_r = vae_forward_ref(x, eps, raw)

    # --- f32-weight path (f32 rx): tight check, 2-step grid, no batch padding ---
    p_f32 = prepare_params(raw, jnp.float32)
    rx, mu, lv = vae_forward(x, eps, p_f32)
    jax.block_until_ready((rx, mu, lv))
    assert rx.shape == (B, D_IN) and mu.shape == (B, D_Z)
    assert jnp.allclose(rx, rx_r, atol=1e-4, rtol=1e-4)
    assert jnp.allclose(mu, mu_r, atol=1e-4, rtol=1e-4)
    assert jnp.allclose(lv, lv_r, atol=1e-4, rtol=1e-4)

    # --- bf16 weights + bf16 x + bf16 rx (f32 accumulation): relaxed check ---
    p_bf16 = prepare_params(raw, jnp.bfloat16)
    rx_b, mu_b, lv_b = vae_forward(x, eps, p_bf16)
    jax.block_until_ready((rx_b, mu_b, lv_b))
    assert rx_b.dtype == jnp.bfloat16
    assert jnp.allclose(rx_b.astype(jnp.float32), rx_r, atol=5e-2, rtol=5e-2)
    assert jnp.allclose(mu_b, mu_r, atol=5e-2, rtol=5e-2)
    assert jnp.allclose(lv_b, lv_r, atol=5e-2, rtol=5e-2)

    # --- ragged-batch fallback path (pads 50 -> 128, slices rows back) ---
    rx_g, mu_g, lv_g = vae_forward(x[:50], eps[:50], p_f32)
    jax.block_until_ready((rx_g, mu_g, lv_g))
    assert rx_g.shape == (50, D_IN)
    assert jnp.allclose(rx_g, rx_r[:50], atol=1e-4, rtol=1e-4)
    assert jnp.allclose(mu_g, mu_r[:50], atol=1e-4, rtol=1e-4)

    print("KERNEL_OK")
</pallas_src>

<mosaic_0001>
module attributes {stable_mosaic.version = 11 : i64} {
  func.func @vae_fwd_kernel(%arg0: i32, %arg1: memref<128x784xf32, #tpu.memory_space<vmem>>, %arg2: memref<128x20xf32, #tpu.memory_space<vmem>>, %arg3: memref<784x512xf32, #tpu.memory_space<vmem>>, %arg4: memref<1x512xf32, #tpu.memory_space<vmem>>, %arg5: memref<512x256xf32, #tpu.memory_space<vmem>>, %arg6: memref<1x256xf32, #tpu.memory_space<vmem>>, %arg7: memref<20x512xf32, #tpu.memory_space<vmem>>, %arg8: memref<1x512xf32, #tpu.memory_space<vmem>>, %arg9: memref<512x784xf32, #tpu.memory_space<vmem>>, %arg10: memref<1x784xf32, #tpu.memory_space<vmem>>, %arg11: memref<128x784xf32, #tpu.memory_space<vmem>>, %arg12: memref<128x20xf32, #tpu.memory_space<vmem>>, %arg13: memref<128x20xf32, #tpu.memory_space<vmem>>) attributes {dimension_semantics = [#tpu.dimension_semantics<parallel>], iteration_bounds = array<i64: 2>, scalar_prefetch = 0 : i64, scratch_operands = 0 : i64, tpu.core_type = #tpu.core_type<tc>, window_params = [{transform_indices = @transform_0, window_bounds = array<i64: 128, 784>}, {transform_indices = @transform_1, window_bounds = array<i64: 128, 20>}, {pipeline_mode = #tpu.pipeline_mode<synchronous>, transform_indices = @transform_2, window_bounds = array<i64: 784, 512>}, {pipeline_mode = #tpu.pipeline_mode<synchronous>, transform_indices = @transform_3, window_bounds = array<i64: 1, 512>}, {pipeline_mode = #tpu.pipeline_mode<synchronous>, transform_indices = @transform_4, window_bounds = array<i64: 512, 256>}, {pipeline_mode = #tpu.pipeline_mode<synchronous>, transform_indices = @transform_5, window_bounds = array<i64: 1, 256>}, {pipeline_mode = #tpu.pipeline_mode<synchronous>, transform_indices = @transform_6, window_bounds = array<i64: 20, 512>}, {pipeline_mode = #tpu.pipeline_mode<synchronous>, transform_indices = @transform_7, window_bounds = array<i64: 1, 512>}, {pipeline_mode = #tpu.pipeline_mode<synchronous>, transform_indices = @transform_8, window_bounds = array<i64: 512, 784>}, {pipeline_mode = #tpu.pipeline_mode<synchronous>, transform_indices = @transform_9, window_bounds = array<i64: 1, 784>}, {transform_indices = @transform_10, window_bounds = array<i64: 128, 784>}, {transform_indices = @transform_11, window_bounds = array<i64: 128, 20>}, {transform_indices = @transform_12, window_bounds = array<i64: 128, 20>}]} {
    %c0 = arith.constant 0 : index
    %c0_0 = arith.constant 0 : index
    %0 = vector.load %arg1[%c0, %c0_0] : memref<128x784xf32, #tpu.memory_space<vmem>>, vector<128x784xf32>
    %c0_1 = arith.constant 0 : index
    %c0_2 = arith.constant 0 : index
    %1 = vector.load %arg3[%c0_1, %c0_2] : memref<784x512xf32, #tpu.memory_space<vmem>>, vector<784x512xf32>
    %cst = arith.constant dense<0.000000e+00> : vector<128x512xf32>
    %2 = tpu.matmul %0, %1, %cst {dimension_numbers = #tpu.dot_dimension_numbers<[1], [0], [0], [1], [0, 0, 1, 1], [], []>} : vector<128x784xf32>, vector<784x512xf32>, vector<128x512xf32> -> vector<128x512xf32>
    %c0_3 = arith.constant 0 : index
    %c0_4 = arith.constant 0 : index
    %3 = vector.load %arg4[%c0_3, %c0_4] : memref<1x512xf32, #tpu.memory_space<vmem>>, vector<1x512xf32>
    %4 = vector.broadcast %3 : vector<1x512xf32> to vector<128x512xf32>
    %5 = arith.addf %2, %4 : vector<128x512xf32>
    %cst_5 = arith.constant 0.000000e+00 : f32
    %6 = vector.broadcast %cst_5 : f32 to vector<128x512xf32>
    %7 = arith.maximumf %5, %6 : vector<128x512xf32>
    %c0_6 = arith.constant 0 : index
    %c0_7 = arith.constant 0 : index
    %8 = vector.load %arg5[%c0_6, %c0_7] : memref<512x256xf32, #tpu.memory_space<vmem>>, vector<512x256xf32>
    %cst_8 = arith.constant dense<0.000000e+00> : vector<128x256xf32>
    %9 = tpu.matmul %7, %8, %cst_8 {dimension_numbers = #tpu.dot_dimension_numbers<[1], [0], [0], [1], [0, 0, 1, 1], [], []>} : vector<128x512xf32>, vector<512x256xf32>, vector<128x256xf32> -> vector<128x256xf32>
    %c0_9 = arith.constant 0 : index
    %c0_10 = arith.constant 0 : index
    %10 = vector.load %arg6[%c0_9, %c0_10] : memref<1x256xf32, #tpu.memory_space<vmem>>, vector<1x256xf32>
    %11 = vector.broadcast %10 : vector<1x256xf32> to vector<128x256xf32>
    %12 = arith.addf %9, %11 : vector<128x256xf32>
    %13 = vector.extract_strided_slice %12 {offsets = [0, 0], sizes = [128, 20], strides = [1, 1]} : vector<128x256xf32> to vector<128x20xf32>
    %14 = vector.extract_strided_slice %12 {offsets = [0, 128], sizes = [128, 20], strides = [1, 1]} : vector<128x256xf32> to vector<128x20xf32>
    %c0_11 = arith.constant 0 : index
    %c0_12 = arith.constant 0 : index
    %15 = vector.load %arg2[%c0_11, %c0_12] : memref<128x20xf32, #tpu.memory_space<vmem>>, vector<128x20xf32>
    %cst_13 = arith.constant 5.000000e-01 : f32
    %16 = vector.broadcast %cst_13 : f32 to vector<128x20xf32>
    %17 = arith.mulf %16, %14 : vector<128x20xf32>
    %18 = math.exp %17 : vector<128x20xf32>
    %19 = arith.mulf %15, %18 : vector<128x20xf32>
    %20 = arith.addf %19, %13 : vector<128x20xf32>
    %c0_14 = arith.constant 0 : index
    %c0_15 = arith.constant 0 : index
    %21 = vector.load %arg7[%c0_14, %c0_15] : memref<20x512xf32, #tpu.memory_space<vmem>>, vector<20x512xf32>
    %cst_16 = arith.constant dense<0.000000e+00> : vector<128x512xf32>
    %22 = tpu.matmul %20, %21, %cst_16 {dimension_numbers = #tpu.dot_dimension_numbers<[1], [0], [0], [1], [0, 0, 1, 1], [], []>} : vector<128x20xf32>, vector<20x512xf32>, vector<128x512xf32> -> vector<128x512xf32>
    %c0_17 = arith.constant 0 : index
    %c0_18 = arith.constant 0 : index
    %23 = vector.load %arg8[%c0_17, %c0_18] : memref<1x512xf32, #tpu.memory_space<vmem>>, vector<1x512xf32>
    %24 = vector.broadcast %23 : vector<1x512xf32> to vector<128x512xf32>
    %25 = arith.addf %22, %24 : vector<128x512xf32>
    %cst_19 = arith.constant 0.000000e+00 : f32
    %26 = vector.broadcast %cst_19 : f32 to vector<128x512xf32>
    %27 = arith.maximumf %25, %26 : vector<128x512xf32>
    %c0_20 = arith.constant 0 : index
    %c0_21 = arith.constant 0 : index
    %28 = vector.load %arg9[%c0_20, %c0_21] : memref<512x784xf32, #tpu.memory_space<vmem>>, vector<512x784xf32>
    %cst_22 = arith.constant dense<0.000000e+00> : vector<128x784xf32>
    %29 = tpu.matmul %27, %28, %cst_22 {dimension_numbers = #tpu.dot_dimension_numbers<[1], [0], [0], [1], [0, 0, 1, 1], [], []>} : vector<128x512xf32>, vector<512x784xf32>, vector<128x784xf32> -> vector<128x784xf32>
    %c0_23 = arith.constant 0 : index
    %c0_24 = arith.constant 0 : index
    %30 = vector.load %arg10[%c0_23, %c0_24] : memref<1x784xf32, #tpu.memory_space<vmem>>, vector<1x784xf32>
    %31 = vector.broadcast %30 : vector<1x784xf32> to vector<128x784xf32>
    %32 = arith.addf %29, %31 : vector<128x784xf32>
    %33 = math.tanh %32 : vector<128x784xf32>
    %c0_25 = arith.constant 0 : index
    %c0_26 = arith.constant 0 : index
    %34 = vector.load %arg11[%c0_25, %c0_26] : memref<128x784xf32, #tpu.memory_space<vmem>>, vector<128x784xf32>
    tpu.vector_store %arg11[%c0_25, %c0_26], %33 {strides = array<i32>} : memref<128x784xf32, #tpu.memory_space<vmem>>, vector<128x784xf32>,
    %c0_27 = arith.constant 0 : index
    %c0_28 = arith.constant 0 : index
    %35 = vector.load %arg12[%c0_27, %c0_28] : memref<128x20xf32, #tpu.memory_space<vmem>>, vector<128x20xf32>
    tpu.vector_store %arg12[%c0_27, %c0_28], %13 {strides = array<i32>} : memref<128x20xf32, #tpu.memory_space<vmem>>, vector<128x20xf32>,
    %c0_29 = arith.constant 0 : index
    %c0_30 = arith.constant 0 : index
    %36 = vector.load %arg13[%c0_29, %c0_30] : memref<128x20xf32, #tpu.memory_space<vmem>>, vector<128x20xf32>
    tpu.vector_store %arg13[%c0_29, %c0_30], %14 {strides = array<i32>} : memref<128x20xf32, #tpu.memory_space<vmem>>, vector<128x20xf32>,
    return
  }
  func.func @transform_0(%arg0: i32) -> (i32, i32) {
    %c0_i32 = arith.constant 0 : i32
    %c0_i32_0 = arith.constant 0 : i32
    return %arg0, %c0_i32 : i32, i32
  }
  func.func @transform_1(%arg0: i32) -> (i32, i32) {
    %c0_i32 = arith.constant 0 : i32
    %c0_i32_0 = arith.constant 0 : i32
    return %arg0, %c0_i32 : i32, i32
  }
  func.func @transform_2(%arg0: i32) -> (i32, i32) {
    %c0_i32 = arith.constant 0 : i32
    %c0_i32_0 = arith.constant 0 : i32
    %c0_i32_1 = arith.constant 0 : i32
    return %c0_i32, %c0_i32_0 : i32, i32
  }
  func.func @transform_3(%arg0: i32) -> (i32, i32) {
    %c0_i32 = arith.constant 0 : i32
    %c0_i32_0 = arith.constant 0 : i32
    %c0_i32_1 = arith.constant 0 : i32
    return %c0_i32, %c0_i32_0 : i32, i32
  }
  func.func @transform_4(%arg0: i32) -> (i32, i32) {
    %c0_i32 = arith.constant 0 : i32
    %c0_i32_0 = arith.constant 0 : i32
    %c0_i32_1 = arith.constant 0 : i32
    return %c0_i32, %c0_i32_0 : i32, i32
  }
  func.func @transform_5(%arg0: i32) -> (i32, i32) {
    %c0_i32 = arith.constant 0 : i32
    %c0_i32_0 = arith.constant 0 : i32
    %c0_i32_1 = arith.constant 0 : i32
    return %c0_i32, %c0_i32_0 : i32, i32
  }
  func.func @transform_6(%arg0: i32) -> (i32, i32) {
    %c0_i32 = arith.constant 0 : i32
    %c0_i32_0 = arith.constant 0 : i32
    %c0_i32_1 = arith.constant 0 : i32
    return %c0_i32, %c0_i32_0 : i32, i32
  }
  func.func @transform_7(%arg0: i32) -> (i32, i32) {
    %c0_i32 = arith.constant 0 : i32
    %c0_i32_0 = arith.constant 0 : i32
    %c0_i32_1 = arith.constant 0 : i32
    return %c0_i32, %c0_i32_0 : i32, i32
  }
  func.func @transform_8(%arg0: i32) -> (i32, i32) {
    %c0_i32 = arith.constant 0 : i32
    %c0_i32_0 = arith.constant 0 : i32
    %c0_i32_1 = arith.constant 0 : i32
    return %c0_i32, %c0_i32_0 : i32, i32
  }
  func.func @transform_9(%arg0: i32) -> (i32, i32) {
    %c0_i32 = arith.constant 0 : i32
    %c0_i32_0 = arith.constant 0 : i32
    %c0_i32_1 = arith.constant 0 : i32
    return %c0_i32, %c0_i32_0 : i32, i32
  }
  func.func @transform_10(%arg0: i32) -> (i32, i32) {
    %c0_i32 = arith.constant 0 : i32
    %c0_i32_0 = arith.constant 0 : i32
    return %arg0, %c0_i32 : i32, i32
  }
  func.func @transform_11(%arg0: i32) -> (i32, i32) {
    %c0_i32 = arith.constant 0 : i32
    %c0_i32_0 = arith.constant 0 : i32
    return %arg0, %c0_i32 : i32, i32
  }
  func.func @transform_12(%arg0: i32) -> (i32, i32) {
    %c0_i32 = arith.constant 0 : i32
    %c0_i32_0 = arith.constant 0 : i32
    return %arg0, %c0_i32 : i32, i32
  }
}

</mosaic_0001>

<llo_original>
// kernel: tpu_custom_call.1
$region0: #{tpu_custom_call.1}
  #allocation0 [shape = 'u32[]', space=smem, size = 0x4, offset = 0x4, fixed_abs, tag = 'smem constant byte address 0x4 - core index']
  #allocation1 [shape = 'u32[144,128]{1,0:T(1,128)}', space=vmem, size = 0x12000, scoped, tag = 'internal scratch']
  %s0 = inlined_call_operand.vmem [shape: f32[256,784], index: 0, kind: input, shape index: {}]
  %s1 = inlined_call_operand.vmem [shape: f32[256,20], index: 1, kind: input, shape index: {}]
  %s2 = inlined_call_operand.vmem [shape: f32[784,512], index: 2, kind: input, shape index: {}]
  %s3 = inlined_call_operand.vmem [shape: f32[1,512], index: 3, kind: input, shape index: {}]
  %s4 = inlined_call_operand.vmem [shape: f32[512,256], index: 4, kind: input, shape index: {}]
  %s5 = inlined_call_operand.vmem [shape: f32[1,256], index: 5, kind: input, shape index: {}]
  %s6 = inlined_call_operand.vmem [shape: f32[20,512], index: 6, kind: input, shape index: {}]
  %s7 = inlined_call_operand.vmem [shape: f32[1,512], index: 7, kind: input, shape index: {}]
  %s8 = inlined_call_operand.vmem [shape: f32[512,784], index: 8, kind: input, shape index: {}]
  %s9 = inlined_call_operand.vmem [shape: f32[1,784], index: 9, kind: input, shape index: {}]
  %s10 = inlined_call_operand.vmem [shape: f32[256,784], index: 10, kind: output, shape index: {0}]
  %s11 = inlined_call_operand.vmem [shape: f32[256,20], index: 11, kind: output, shape index: {1}]
  %s12 = inlined_call_operand.vmem [shape: f32[256,20], index: 12, kind: output, shape index: {2}]
  %13 = xla_tuple %s10, %s11, %s12
  %s14 = sld [smem:[#allocation0]]
  $region89: #{tpu_custom_call.1} parent=0
    _
  %s16 = ssub.s32 1, %s14
  %s17 = scalar_select 0, %s16, %s14
  loop: start=0, step=1, limit=4
  $region2: #{tpu_custom_call.1} parent=0 // loop_pre_header
    _
  $region3: #{tpu_custom_call.1} parent=0 // loop_header
    %s19 = sphi 0, %s23
    %p20 = scmp.ge.s32.totalorder %s19, 4
    %s29 = sphi 0, %s31
    %s32 = sphi 0, %s29
    %s33 = sphi 0, %s32
    %s49 = sphi 0, %s33
    %s55 = sphi 0, %s57
    %s58 = sphi 0, %s55
    %s59 = sphi 0, %s58
    %s75 = sphi 0, %s59
    %s79 = sphi 0, %s79
    %s81 = sphi 0, %s79
    %s82 = sphi 0, %s81
    %s96 = sphi 0, %s82
    %s100 = sphi 0, %s100
    %s102 = sphi 0, %s100
    %s103 = sphi 0, %s102
    %s117 = sphi 0, %s103
    %s121 = sphi 0, %s121
    %s123 = sphi 0, %s121
    %s124 = sphi 0, %s123
    %s138 = sphi 0, %s124
    %s142 = sphi 0, %s142
    %s144 = sphi 0, %s142
    %s145 = sphi 0, %s144
    %s159 = sphi 0, %s145
    %s163 = sphi 0, %s163
    %s165 = sphi 0, %s163
    %s166 = sphi 0, %s165
    %s180 = sphi 0, %s166
    %s184 = sphi 0, %s184
    %s186 = sphi 0, %s184
    %s187 = sphi 0, %s186
    %s201 = sphi 0, %s187
    %s205 = sphi 0, %s205
    %s207 = sphi 0, %s205
    %s208 = sphi 0, %s207
    %s222 = sphi 0, %s208
    %s226 = sphi 0, %s226
    %s228 = sphi 0, %s226
    %s229 = sphi 0, %s228
    %s243 = sphi 0, %s229
    %s249 = sphi 0, %s251
    %s252 = sphi 0, %s249
    %s253 = sphi 0, %s252
    %s269 = sphi 0, %s253
    %s275 = sphi 0, %s277
    %s278 = sphi 0, %s275
    %s279 = sphi 0, %s278
    %s295 = sphi 0, %s279
    %s301 = sphi 0, %s303
    %s304 = sphi 0, %s301
    %s305 = sphi 0, %s304
    %s321 = sphi 0, %s305
  $region4: #{tpu_custom_call.1} parent=0 // loop_header_branch
    %22 = sbr.rel (%p20) target = $region8
  $region5: #{tpu_custom_call.1} parent=0 // loop_body
    %s24 = ssub.s32 %s19, 1
    %s25 = ssub.s32 %s19, 2
    %s26 = sadd.s32 %s19, 1
    %s27 = ssub.s32 %s19, %s26
    %p28 = scmp.eq.s32.totalorder %s27, 0
    %s30 = sadd.s32 %s29, 1
    %s31 = scalar_select %p28, %s29, %s30
    %p34 = pneg %p28
    %p35 = scmp.eq.s32.totalorder %s19, 1
    %p36 = por %p34, %p35
    %p37 = scmp.ne.s32.totalorder %s29, %s32
    %p38 = scmp.eq.s32.totalorder %s19, 0
    %p39 = por %p37, %p38
    %p40 = scmp.ne.s32.totalorder %s29, %s32
    %p41 = scmp.eq.s32.totalorder %s24, 1
    %p42 = por %p40, %p41
    %p43 = scmp.ne.s32.totalorder %s32, %s33
    %p44 = scmp.eq.s32.totalorder %s24, 0
    %p45 = por %p43, %p44
    %p46 = scmp.ne.s32.totalorder %s32, %s33
    %p47 = scmp.eq.s32.totalorder %s25, 1
    %p48 = por %p46, %p47
    %p50 = scmp.ne.s32.totalorder %s33, %s49
    %p51 = scmp.eq.s32.totalorder %s25, 0
    %p52 = por %p50, %p51
    %s53 = ssub.s32 %s19, %s26
    %p54 = scmp.eq.s32.totalorder %s53, 0
    %s56 = sadd.s32 %s55, 1
    %s57 = scalar_select %p54, %s55, %s56
    %p60 = pneg %p54
    %p61 = scmp.eq.s32.totalorder %s19, 1
    %p62 = por %p60, %p61
    %p63 = scmp.ne.s32.totalorder %s55, %s58
    %p64 = scmp.eq.s32.totalorder %s19, 0
    %p65 = por %p63, %p64
    %p66 = scmp.ne.s32.totalorder %s55, %s58
    %p67 = scmp.eq.s32.totalorder %s24, 1
    %p68 = por %p66, %p67
    %p69 = scmp.ne.s32.totalorder %s58, %s59
    %p70 = scmp.eq.s32.totalorder %s24, 0
    %p71 = por %p69, %p70
    %p72 = scmp.ne.s32.totalorder %s58, %s59
    %p73 = scmp.eq.s32.totalorder %s25, 1
    %p74 = por %p72, %p73
    %p76 = scmp.ne.s32.totalorder %s59, %s75
    %p77 = scmp.eq.s32.totalorder %s25, 0
    %p78 = por %p76, %p77
    %s80 = sadd.s32 %s79, 1
    %p83 = scmp.eq.s32.totalorder %s19, 1
    %p84 = scmp.ne.s32.totalorder %s79, %s81
    %p85 = scmp.eq.s32.totalorder %s19, 0
    %p86 = por %p84, %p85
    %p87 = scmp.ne.s32.totalorder %s79, %s81
    %p88 = scmp.eq.s32.totalorder %s24, 1
    %p89 = por %p87, %p88
    %p90 = scmp.ne.s32.totalorder %s81, %s82
    %p91 = scmp.eq.s32.totalorder %s24, 0
    %p92 = por %p90, %p91
    %p93 = scmp.ne.s32.totalorder %s81, %s82
    %p94 = scmp.eq.s32.totalorder %s25, 1
    %p95 = por %p93, %p94
    %p97 = scmp.ne.s32.totalorder %s82, %s96
    %p98 = scmp.eq.s32.totalorder %s25, 0
    %p99 = por %p97, %p98
    %s101 = sadd.s32 %s100, 1
    %p104 = scmp.eq.s32.totalorder %s19, 1
    %p105 = scmp.ne.s32.totalorder %s100, %s102
    %p106 = scmp.eq.s32.totalorder %s19, 0
    %p107 = por %p105, %p106
    %p108 = scmp.ne.s32.totalorder %s100, %s102
    %p109 = scmp.eq.s32.totalorder %s24, 1
    %p110 = por %p108, %p109
    %p111 = scmp.ne.s32.totalorder %s102, %s103
    %p112 = scmp.eq.s32.totalorder %s24, 0
    %p113 = por %p111, %p112
    %p114 = scmp.ne.s32.totalorder %s102, %s103
    %p115 = scmp.eq.s32.totalorder %s25, 1
    %p116 = por %p114, %p115
    %p118 = scmp.ne.s32.totalorder %s103, %s117
    %p119 = scmp.eq.s32.totalorder %s25, 0
    %p120 = por %p118, %p119
    %s122 = sadd.s32 %s121, 1
    %p125 = scmp.eq.s32.totalorder %s19, 1
    %p126 = scmp.ne.s32.totalorder %s121, %s123
    %p127 = scmp.eq.s32.totalorder %s19, 0
    %p128 = por %p126, %p127
    %p129 = scmp.ne.s32.totalorder %s121, %s123
    %p130 = scmp.eq.s32.totalorder %s24, 1
    %p131 = por %p129, %p130
    %p132 = scmp.ne.s32.totalorder %s123, %s124
    %p133 = scmp.eq.s32.totalorder %s24, 0
    %p134 = por %p132, %p133
    %p135 = scmp.ne.s32.totalorder %s123, %s124
    %p136 = scmp.eq.s32.totalorder %s25, 1
    %p137 = por %p135, %p136
    %p139 = scmp.ne.s32.totalorder %s124, %s138
    %p140 = scmp.eq.s32.totalorder %s25, 0
    %p141 = por %p139, %p140
    %s143 = sadd.s32 %s142, 1
    %p146 = scmp.eq.s32.totalorder %s19, 1
    %p147 = scmp.ne.s32.totalorder %s142, %s144
    %p148 = scmp.eq.s32.totalorder %s19, 0
    %p149 = por %p147, %p148
    %p150 = scmp.ne.s32.totalorder %s142, %s144
    %p151 = scmp.eq.s32.totalorder %s24, 1
    %p152 = por %p150, %p151
    %p153 = scmp.ne.s32.totalorder %s144, %s145
    %p154 = scmp.eq.s32.totalorder %s24, 0
    %p155 = por %p153, %p154
    %p156 = scmp.ne.s32.totalorder %s144, %s145
    %p157 = scmp.eq.s32.totalorder %s25, 1
    %p158 = por %p156, %p157
    %p160 = scmp.ne.s32.totalorder %s145, %s159
    %p161 = scmp.eq.s32.totalorder %s25, 0
    %p162 = por %p160, %p161
    %s164 = sadd.s32 %s163, 1
    %p167 = scmp.eq.s32.totalorder %s19, 1
    %p168 = scmp.ne.s32.totalorder %s163, %s165
    %p169 = scmp.eq.s32.totalorder %s19, 0
    %p170 = por %p168, %p169
    %p171 = scmp.ne.s32.totalorder %s163, %s165
    %p172 = scmp.eq.s32.totalorder %s24, 1
    %p173 = por %p171, %p172
    %p174 = scmp.ne.s32.totalorder %s165, %s166
    %p175 = scmp.eq.s32.totalorder %s24, 0
    %p176 = por %p174, %p175
    %p177 = scmp.ne.s32.totalorder %s165, %s166
    %p178 = scmp.eq.s32.totalorder %s25, 1
    %p179 = por %p177, %p178
    %p181 = scmp.ne.s32.totalorder %s166, %s180
    %p182 = scmp.eq.s32.totalorder %s25, 0
    %p183 = por %p181, %p182
    %s185 = sadd.s32 %s184, 1
    %p188 = scmp.eq.s32.totalorder %s19, 1
    %p189 = scmp.ne.s32.totalorder %s184, %s186
    %p190 = scmp.eq.s32.totalorder %s19, 0
    %p191 = por %p189, %p190
    %p192 = scmp.ne.s32.totalorder %s184, %s186
    %p193 = scmp.eq.s32.totalorder %s24, 1
    %p194 = por %p192, %p193
    %p195 = scmp.ne.s32.totalorder %s186, %s187
    %p196 = scmp.eq.s32.totalorder %s24, 0
    %p197 = por %p195, %p196
    %p198 = scmp.ne.s32.totalorder %s186, %s187
    %p199 = scmp.eq.s32.totalorder %s25, 1
    %p200 = por %p198, %p199
    %p202 = scmp.ne.s32.totalorder %s187, %s201
    %p203 = scmp.eq.s32.totalorder %s25, 0
    %p204 = por %p202, %p203
    %s206 = sadd.s32 %s205, 1
    %p209 = scmp.eq.s32.totalorder %s19, 1
    %p210 = scmp.ne.s32.totalorder %s205, %s207
    %p211 = scmp.eq.s32.totalorder %s19, 0
    %p212 = por %p210, %p211
    %p213 = scmp.ne.s32.totalorder %s205, %s207
    %p214 = scmp.eq.s32.totalorder %s24, 1
    %p215 = por %p213, %p214
    %p216 = scmp.ne.s32.totalorder %s207, %s208
    %p217 = scmp.eq.s32.totalorder %s24, 0
    %p218 = por %p216, %p217
    %p219 = scmp.ne.s32.totalorder %s207, %s208
    %p220 = scmp.eq.s32.totalorder %s25, 1
    %p221 = por %p219, %p220
    %p223 = scmp.ne.s32.totalorder %s208, %s222
    %p224 = scmp.eq.s32.totalorder %s25, 0
    %p225 = por %p223, %p224
    %s227 = sadd.s32 %s226, 1
    %p230 = scmp.eq.s32.totalorder %s19, 1
    %p231 = scmp.ne.s32.totalorder %s226, %s228
    %p232 = scmp.eq.s32.totalorder %s19, 0
    %p233 = por %p231, %p232
    %p234 = scmp.ne.s32.totalorder %s226, %s228
    %p235 = scmp.eq.s32.totalorder %s24, 1
    %p236 = por %p234, %p235
    %p237 = scmp.ne.s32.totalorder %s228, %s229
    %p238 = scmp.eq.s32.totalorder %s24, 0
    %p239 = por %p237, %p238
    %p240 = scmp.ne.s32.totalorder %s228, %s229
    %p241 = scmp.eq.s32.totalorder %s25, 1
    %p242 = por %p240, %p241
    %p244 = scmp.ne.s32.totalorder %s229, %s243
    %p245 = scmp.eq.s32.totalorder %s25, 0
    %p246 = por %p244, %p245
    %s247 = ssub.s32 %s19, %s26
    %p248 = scmp.eq.s32.totalorder %s247, 0
    %s250 = sadd.s32 %s249, 1
    %s251 = scalar_select %p248, %s249, %s250
    %p254 = pneg %p248
    %p255 = scmp.eq.s32.totalorder %s19, 1
    %p256 = por %p254, %p255
    %p257 = scmp.ne.s32.totalorder %s249, %s252
    %p258 = scmp.eq.s32.totalorder %s19, 0
    %p259 = por %p257, %p258
    %p260 = scmp.ne.s32.totalorder %s249, %s252
    %p261 = scmp.eq.s32.totalorder %s24, 1
    %p262 = por %p260, %p261
    %p263 = scmp.ne.s32.totalorder %s252, %s253
    %p264 = scmp.eq.s32.totalorder %s24, 0
    %p265 = por %p263, %p264
    %p266 = scmp.ne.s32.totalorder %s252, %s253
    %p267 = scmp.eq.s32.totalorder %s25, 1
    %p268 = por %p266, %p267
    %p270 = scmp.ne.s32.totalorder %s253, %s269
    %p271 = scmp.eq.s32.totalorder %s25, 0
    %p272 = por %p270, %p271
    %s273 = ssub.s32 %s19, %s26
    %p274 = scmp.eq.s32.totalorder %s273, 0
    %s276 = sadd.s32 %s275, 1
    %s277 = scalar_select %p274, %s275, %s276
    %p280 = pneg %p274
    %p281 = scmp.eq.s32.totalorder %s19, 1
    %p282 = por %p280, %p281
    %p283 = scmp.ne.s32.totalorder %s275, %s278
    %p284 = scmp.eq.s32.totalorder %s19, 0
    %p285 = por %p283, %p284
    %p286 = scmp.ne.s32.totalorder %s275, %s278
    %p287 = scmp.eq.s32.totalorder %s24, 1
    %p288 = por %p286, %p287
    %p289 = scmp.ne.s32.totalorder %s278, %s279
    %p290 = scmp.eq.s32.totalorder %s24, 0
    %p291 = por %p289, %p290
    %p292 = scmp.ne.s32.totalorder %s278, %s279
    %p293 = scmp.eq.s32.totalorder %s25, 1
    %p294 = por %p292, %p293
    %p296 = scmp.ne.s32.totalorder %s279, %s295
    %p297 = scmp.eq.s32.totalorder %s25, 0
    %p298 = por %p296, %p297
    %s299 = ssub.s32 %s19, %s26
    %p300 = scmp.eq.s32.totalorder %s299, 0
    %s302 = sadd.s32 %s301, 1
    %s303 = scalar_select %p300, %s301, %s302
    %p306 = pneg %p300
    %p307 = scmp.eq.s32.totalorder %s19, 1
    %p308 = por %p306, %p307
    %p309 = scmp.ne.s32.totalorder %s301, %s304
    %p310 = scmp.eq.s32.totalorder %s19, 0
    %p311 = por %p309, %p310
    %p312 = scmp.ne.s32.totalorder %s301, %s304
    %p313 = scmp.eq.s32.totalorder %s24, 1
    %p314 = por %p312, %p313
    %p315 = scmp.ne.s32.totalorder %s304, %s305
    %p316 = scmp.eq.s32.totalorder %s24, 0
    %p317 = por %p315, %p316
    %p318 = scmp.ne.s32.totalorder %s304, %s305
    %p319 = scmp.eq.s32.totalorder %s25, 1
    %p320 = por %p318, %p319
    %p322 = scmp.ne.s32.totalorder %s305, %s321
    %p323 = scmp.eq.s32.totalorder %s25, 0
    %p324 = por %p322, %p323
    %p325 = scmp.le.s32.totalorder 1, %s19
    %p326 = scmp.lt.s32.totalorder %s19, 3
    %p327 = pnand %p325, %p326
    %p328 = pneg %p327
    // Predicated region
    $region9: #{tpu_custom_call.1} parent=5 // pred_check
      _
    $region10: #{tpu_custom_call.1} parent=5 // pred_check_branch
      %330 = sbr.rel (%p327) target = $region12
    $region11: #{tpu_custom_call.1} parent=5 // pred_region
      %s331 = ssub.s32 %s19, 1
      // Predicated region
      $region13: #{tpu_custom_call.1} parent=11 // pred_check
        %p332 = pneg %p92
      $region14: #{tpu_custom_call.1} parent=11 // pred_check_branch
        %334 = sbr.rel (%p332) target = $region16
      $region15: #{tpu_custom_call.1} parent=11 // pred_region
        _
      $region16: #{tpu_custom_call.1} parent=11 // pred_fallthru
        _
      // Predicated region
      $region17: #{tpu_custom_call.1} parent=11 // pred_check
        %p335 = pneg %p113
      $region18: #{tpu_custom_call.1} parent=11 // pred_check_branch
        %337 = sbr.rel (%p335) target = $region20
      $region19: #{tpu_custom_call.1} parent=11 // pred_region
        _
      $region20: #{tpu_custom_call.1} parent=11 // pred_fallthru
        _
      // Predicated region
      $region21: #{tpu_custom_call.1} parent=11 // pred_check
        %p338 = pneg %p134
      $region22: #{tpu_custom_call.1} parent=11 // pred_check_branch
        %340 = sbr.rel (%p338) target = $region24
      $region23: #{tpu_custom_call.1} parent=11 // pred_region
        _
      $region24: #{tpu_custom_call.1} parent=11 // pred_fallthru
        _
      // Predicated region
      $region25: #{tpu_custom_call.1} parent=11 // pred_check
        %p341 = pneg %p155
      $region26: #{tpu_custom_call.1} parent=11 // pred_check_branch
        %343 = sbr.rel (%p341) target = $region28
      $region27: #{tpu_custom_call.1} parent=11 // pred_region
        _
      $region28: #{tpu_custom_call.1} parent=11 // pred_fallthru
        _
      // Predicated region
      $region29: #{tpu_custom_call.1} parent=11 // pred_check
        %p344 = pneg %p176
      $region30: #{tpu_custom_call.1} parent=11 // pred_check_branch
        %346 = sbr.rel (%p344) target = $region32
      $region31: #{tpu_custom_call.1} parent=11 // pred_region
        _
      $region32: #{tpu_custom_call.1} parent=11 // pred_fallthru
        _
      // Predicated region
      $region33: #{tpu_custom_call.1} parent=11 // pred_check
        %p347 = pneg %p197
      $region34: #{tpu_custom_call.1} parent=11 // pred_check_branch
        %349 = sbr.rel (%p347) target = $region36
      $region35: #{tpu_custom_call.1} parent=11 // pred_region
        _
      $region36: #{tpu_custom_call.1} parent=11 // pred_fallthru
        _
      // Predicated region
      $region37: #{tpu_custom_call.1} parent=11 // pred_check
        %p350 = pneg %p218
      $region38: #{tpu_custom_call.1} parent=11 // pred_check_branch
        %352 = sbr.rel (%p350) target = $region40
      $region39: #{tpu_custom_call.1} parent=11 // pred_region
        _
      $region40: #{tpu_custom_call.1} parent=11 // pred_fallthru
        _
      // Predicated region
      $region41: #{tpu_custom_call.1} parent=11 // pred_check
        %p353 = pneg %p239
      $region42: #{tpu_custom_call.1} parent=11 // pred_check_branch
        %355 = sbr.rel (%p353) target = $region44
      $region43: #{tpu_custom_call.1} parent=11 // pred_region
        _
      $region44: #{tpu_custom_call.1} parent=11 // pred_fallthru
        _
    $region12: #{tpu_custom_call.1} parent=5 // pred_fallthru
      _
    %p356 = scmp.lt.s32.totalorder %s19, 2
    // Predicated region
    $region45: #{tpu_custom_call.1} parent=5 // pred_check
      %p357 = pneg %p356
    $region46: #{tpu_custom_call.1} parent=5 // pred_check_branch
      %359 = sbr.rel (%p357) target = $region48
    $region47: #{tpu_custom_call.1} parent=5 // pred_region
      // Predicated region
      $region49: #{tpu_custom_call.1} parent=47 // pred_check
        %p360 = pneg %p39
      $region50: #{tpu_custom_call.1} parent=47 // pred_check_branch
        %362 = sbr.rel (%p360) target = $region52
      $region51: #{tpu_custom_call.1} parent=47 // pred_region
        %s363 = smul.u32 16, %s19
        %p364 = scmp.lt.s32.totalorder %s363, 31
        %s365 = scalar_select %p364, %s363, 31
        %s366 = smul.addr %s365, 7
        %s367 = smul.addr %s366, 8
        %s368 = scalar_lea.vmem %s0, %s367
        %s369 = smul.u32 16, %s19
      $region52: #{tpu_custom_call.1} parent=47 // pred_fallthru
        _
      // Predicated region
      $region53: #{tpu_custom_call.1} parent=47 // pred_check
        %p370 = pneg %p65
      $region54: #{tpu_custom_call.1} parent=47 // pred_check_branch
        %372 = sbr.rel (%p370) target = $region56
      $region55: #{tpu_custom_call.1} parent=47 // pred_region
        %s373 = smul.u32 16, %s19
        %p374 = scmp.lt.s32.totalorder %s373, 31
        %s375 = scalar_select %p374, %s373, 31
        %s376 = smul.addr %s375, 8
        %s377 = scalar_lea.vmem %s1, %s376
        %s378 = smul.u32 16, %s19
      $region56: #{tpu_custom_call.1} parent=47 // pred_fallthru
        _
    $region48: #{tpu_custom_call.1} parent=5 // pred_fallthru
      _
    %p379 = scmp.le.s32.totalorder 1, %s19
    %p380 = scmp.lt.s32.totalorder %s19, 3
    %p381 = pnand %p379, %p380
    %p382 = pneg %p381
    // Predicated region
    $region57: #{tpu_custom_call.1} parent=5 // pred_check
      _
    $region58: #{tpu_custom_call.1} parent=5 // pred_check_branch
      %384 = sbr.rel (%p381) target = $region60
    $region59: #{tpu_custom_call.1} parent=5 // pred_region
      %s385 = ssub.s32 %s19, 1
      %s386 = smul.u32 16, %s24
      %p387 = scmp.lt.s32.totalorder %s386, 31
      %s388 = scalar_select %p387, %s386, 31
      %s389 = smul.addr %s388, 7
      %s390 = smul.addr %s389, 8
      %s391 = scalar_lea.vmem %s0, %s390
      %p392 = pneg %p45
      %p393 = pneg %p42
      %s394 = smul.u32 16, %s24
      %p395 = scmp.lt.s32.totalorder %s394, 31
      %s396 = scalar_select %p395, %s394, 31
      %s397 = smul.addr %s396, 8
      %s398 = scalar_lea.vmem %s1, %s397
      %p399 = pneg %p71
      %p400 = pneg %p68
      %p401 = pneg %p92
      %p402 = pneg %p89
      %p403 = pneg %p113
      %p404 = pneg %p110
      %p405 = pneg %p134
      %p406 = pneg %p131
      %p407 = pneg %p155
      %p408 = pneg %p152
      %p409 = pneg %p176
      %p410 = pneg %p173
      %p411 = pneg %p197
      %p412 = pneg %p194
      %p413 = pneg %p218
      %p414 = pneg %p215
      %p415 = pneg %p239
      %p416 = pneg %p236
      %p417 = pneg %p265
      %p418 = pneg %p262
      %s419 = smul.u32 16, %s24
      %p420 = scmp.lt.s32.totalorder %s419, 31
      %s421 = scalar_select %p420, %s419, 31
      %s422 = smul.addr %s421, 7
      %s423 = smul.addr %s422, 8
      %s424 = scalar_lea.vmem %s10, %s423
      %p425 = pneg %p291
      %p426 = pneg %p288
      %s427 = smul.u32 16, %s24
      %p428 = scmp.lt.s32.totalorder %s427, 31
      %s429 = scalar_select %p428, %s427, 31
      %s430 = smul.addr %s429, 8
      %s431 = scalar_lea.vmem %s11, %s430
      %p432 = pneg %p317
      %p433 = pneg %p314
      %s434 = smul.u32 16, %s24
      %p435 = scmp.lt.s32.totalorder %s434, 31
      %s436 = scalar_select %p435, %s434, 31
      %s437 = smul.addr %s436, 8
      %s438 = scalar_lea.vmem %s12, %s437
      %s439 = smul.u32 16, %s24
      %p440 = scmp.lt.s32.totalorder %s439, 31
      %s441 = scalar_select %p440, %s439, 31
      %s442 = smul.addr %s441, 7
      %s443 = smul.addr %s442, 8
      %s444 = scalar_lea.vmem %s0, %s443
      %s445 = smul.u32 16, %s24
      %s446 = smul.u32 16, %s24
      %p447 = scmp.lt.s32.totalorder %s446, 31
      %s448 = scalar_select %p447, %s446, 31
      %s449 = smul.addr %s448, 8
      %s450 = scalar_lea.vmem %s1, %s449
      %s451 = smul.u32 16, %s24
      %s452 = smul.u32 16, %s24
      %p453 = scmp.lt.s32.totalorder %s452, 31
      %s454 = scalar_select %p453, %s452, 31
      %s455 = smul.addr %s454, 7
      %s456 = smul.addr %s455, 8
      %s457 = scalar_lea.vmem %s10, %s456
      %s458 = smul.u32 16, %s24
      %s459 = smul.u32 16, %s24
      %p460 = scmp.lt.s32.totalorder %s459, 31
      %s461 = scalar_select %p460, %s459, 31
      %s462 = smul.addr %s461, 8
      %s463 = scalar_lea.vmem %s11, %s462
      %s464 = smul.u32 16, %s24
      %s465 = smul.u32 16, %s24
      %p466 = scmp.lt.s32.totalorder %s465, 31
      %s467 = scalar_select %p466, %s465, 31
      %s468 = smul.addr %s467, 8
      %s469 = scalar_lea.vmem %s12, %s468
      %s470 = smul.u32 16, %s24
      %v471 = vld [vmem:[%s444] sm:$0xff]
      %v472 = vld [vmem:[%s444 + $0x8] sm:$0xff]
      %v473 = vld [vmem:[%s444 + $0x10] sm:$0xff]
      %v474 = vld [vmem:[%s444 + $0x18] sm:$0xff]
      %v475 = vld [vmem:[%s444 + $0x20] sm:$0xff]
      %v476 = vld [vmem:[%s444 + $0x28] sm:$0xff]
      %v477 = vld [vmem:[%s444 + $0x30] sm:$0xff]
      %v478 = vld [vmem:[%s444 + $0x38] sm:$0xff]
      %v479 = vld [vmem:[%s444 + $0x40] sm:$0xff]
      %v480 = vld [vmem:[%s444 + $0x48] sm:$0xff]
      %v481 = vld [vmem:[%s444 + $0x50] sm:$0xff]
      %v482 = vld [vmem:[%s444 + $0x58] sm:$0xff]
      %v483 = vld [vmem:[%s444 + $0x60] sm:$0xff]
      %v484 = vld [vmem:[%s444 + $0x68] sm:$0xff]
      %v485 = vld [vmem:[%s444 + $0x70] sm:$0xff]
      %v486 = vld [vmem:[%s444 + $0x78] sm:$0xff]
      %v487 = vld [vmem:[%s444 + $0x80] sm:$0xff]
      %v488 = vld [vmem:[%s444 + $0x88] sm:$0xff]
      %v489 = vld [vmem:[%s444 + $0x90] sm:$0xff]
      %v490 = vld [vmem:[%s444 + $0x98] sm:$0xff]
      %v491 = vld [vmem:[%s444 + $0xa0] sm:$0xff]
      %v492 = vld [vmem:[%s444 + $0xa8] sm:$0xff]
      %v493 = vld [vmem:[%s444 + $0xb0] sm:$0xff]
      %v494 = vld [vmem:[%s444 + $0xb8] sm:$0xff]
      %v495 = vld [vmem:[%s444 + $0xc0] sm:$0xff]
      %v496 = vld [vmem:[%s444 + $0xc8] sm:$0xff]
      %v497 = vld [vmem:[%s444 + $0xd0] sm:$0xff]
      %v498 = vld [vmem:[%s444 + $0xd8] sm:$0xff]
      %v499 = vld [vmem:[%s444 + $0xe0] sm:$0xff]
      %v500 = vld [vmem:[%s444 + $0xe8] sm:$0xff]
      %v501 = vld [vmem:[%s444 + $0xf0] sm:$0xff]
      %v502 = vld [vmem:[%s444 + $0xf8] sm:$0xff]
      %v503 = vld [vmem:[%s444 + $0x100] sm:$0xff]
      %v504 = vld [vmem:[%s444 + $0x108] sm:$0xff]
      %v505 = vld [vmem:[%s444 + $0x110] sm:$0xff]
      %v506 = vld [vmem:[%s444 + $0x118] sm:$0xff]
      %v507 = vld [vmem:[%s444 + $0x120] sm:$0xff]
      %v508 = vld [vmem:[%s444 + $0x128] sm:$0xff]
      %v509 = vld [vmem:[%s444 + $0x130] sm:$0xff]
      %v510 = vld [vmem:[%s444 + $0x138] sm:$0xff]
      %v511 = vld [vmem:[%s444 + $0x140] sm:$0xff]
      %v512 = vld [vmem:[%s444 + $0x148] sm:$0xff]
      %v513 = vld [vmem:[%s444 + $0x150] sm:$0xff]
      %v514 = vld [vmem:[%s444 + $0x158] sm:$0xff]
      %v515 = vld [vmem:[%s444 + $0x160] sm:$0xff]
      %v516 = vld [vmem:[%s444 + $0x168] sm:$0xff]
      %v517 = vld [vmem:[%s444 + $0x170] sm:$0xff]
      %v518 = vld [vmem:[%s444 + $0x178] sm:$0xff]
      %v519 = vld [vmem:[%s444 + $0x180] sm:$0xff]
      %v520 = vld [vmem:[%s444 + $0x188] sm:$0xff]
      %v521 = vld [vmem:[%s444 + $0x190] sm:$0xff]
      %v522 = vld [vmem:[%s444 + $0x198] sm:$0xff]
      %v523 = vld [vmem:[%s444 + $0x1a0] sm:$0xff]
      %v524 = vld [vmem:[%s444 + $0x1a8] sm:$0xff]
      %v525 = vld [vmem:[%s444 + $0x1b0] sm:$0xff]
      %v526 = vld [vmem:[%s444 + $0x1b8] sm:$0xff]
      %v527 = vld [vmem:[%s444 + $0x1c0] sm:$0xff]
      %v528 = vld [vmem:[%s444 + $0x1c8] sm:$0xff]
      %v529 = vld [vmem:[%s444 + $0x1d0] sm:$0xff]
      %v530 = vld [vmem:[%s444 + $0x1d8] sm:$0xff]
      %v531 = vld [vmem:[%s444 + $0x1e0] sm:$0xff]
      %v532 = vld [vmem:[%s444 + $0x1e8] sm:$0xff]
      %v533 = vld [vmem:[%s444 + $0x1f0] sm:$0xff]
      %v534 = vld [vmem:[%s444 + $0x1f8] sm:$0xff]
      %v535 = vld [vmem:[%s444 + $0x200] sm:$0xff]
      %v536 = vld [vmem:[%s444 + $0x208] sm:$0xff]
      %v537 = vld [vmem:[%s444 + $0x210] sm:$0xff]
      %v538 = vld [vmem:[%s444 + $0x218] sm:$0xff]
      %v539 = vld [vmem:[%s444 + $0x220] sm:$0xff]
      %v540 = vld [vmem:[%s444 + $0x228] sm:$0xff]
      %v541 = vld [vmem:[%s444 + $0x230] sm:$0xff]
      %v542 = vld [vmem:[%s444 + $0x238] sm:$0xff]
      %v543 = vld [vmem:[%s444 + $0x240] sm:$0xff]
      %v544 = vld [vmem:[%s444 + $0x248] sm:$0xff]
      %v545 = vld [vmem:[%s444 + $0x250] sm:$0xff]
      %v546 = vld [vmem:[%s444 + $0x258] sm:$0xff]
      %v547 = vld [vmem:[%s444 + $0x260] sm:$0xff]
      %v548 = vld [vmem:[%s444 + $0x268] sm:$0xff]
      %v549 = vld [vmem:[%s444 + $0x270] sm:$0xff]
      %v550 = vld [vmem:[%s444 + $0x278] sm:$0xff]
      %v551 = vld [vmem:[%s444 + $0x280] sm:$0xff]
      %v552 = vld [vmem:[%s444 + $0x288] sm:$0xff]
      %v553 = vld [vmem:[%s444 + $0x290] sm:$0xff]
      %v554 = vld [vmem:[%s444 + $0x298] sm:$0xff]
      %v555 = vld [vmem:[%s444 + $0x2a0] sm:$0xff]
      %v556 = vld [vmem:[%s444 + $0x2a8] sm:$0xff]
      %v557 = vld [vmem:[%s444 + $0x2b0] sm:$0xff]
      %v558 = vld [vmem:[%s444 + $0x2b8] sm:$0xff]
      %v559 = vld [vmem:[%s444 + $0x2c0] sm:$0xff]
      %v560 = vld [vmem:[%s444 + $0x2c8] sm:$0xff]
      %v561 = vld [vmem:[%s444 + $0x2d0] sm:$0xff]
      %v562 = vld [vmem:[%s444 + $0x2d8] sm:$0xff]
      %v563 = vld [vmem:[%s444 + $0x2e0] sm:$0xff]
      %v564 = vld [vmem:[%s444 + $0x2e8] sm:$0xff]
      %v565 = vld [vmem:[%s444 + $0x2f0] sm:$0xff]
      %v566 = vld [vmem:[%s444 + $0x2f8] sm:$0xff]
      %v567 = vld [vmem:[%s444 + $0x300] sm:$0xff]
      %v568 = vld [vmem:[%s444 + $0x308] sm:$0xff]
      %v569 = vld [vmem:[%s444 + $0x310] sm:$0xff]
      %v570 = vld [vmem:[%s444 + $0x318] sm:$0xff]
      %v571 = vld [vmem:[%s444 + $0x320] sm:$0xff]
      %v572 = vld [vmem:[%s444 + $0x328] sm:$0xff]
      %v573 = vld [vmem:[%s444 + $0x330] sm:$0xff]
      %v574 = vld [vmem:[%s444 + $0x338] sm:$0xff]
      %v575 = vld [vmem:[%s444 + $0x340] sm:$0xff]
      %v576 = vld [vmem:[%s444 + $0x348] sm:$0xff]
      %v577 = vld [vmem:[%s444 + $0x350] sm:$0xff]
      %v578 = vld [vmem:[%s444 + $0x358] sm:$0xff]
      %v579 = vld [vmem:[%s444 + $0x360] sm:$0xff]
      %v580 = vld [vmem:[%s444 + $0x368] sm:$0xff]
      %v581 = vld [vmem:[%s444 + $0x370] sm:$0xff]
      %v582 = vld [vmem:[%s444 + $0x378] sm:$0xff]
      %v583 = vld [vmem:[%s2] sm:$0xff]
      %v584 = vld [vmem:[%s2 + $0x8] sm:$0xff]
      %v585 = vld [vmem:[%s2 + $0x10] sm:$0xff]
      %v586 = vld [vmem:[%s2 + $0x18] sm:$0xff]
      %v587 = vld [vmem:[%s2 + $0x20] sm:$0xff]
      %v588 = vld [vmem:[%s2 + $0x28] sm:$0xff]
      %v589 = vld [vmem:[%s2 + $0x30] sm:$0xff]
      %v590 = vld [vmem:[%s2 + $0x38] sm:$0xff]
      %v591 = vld [vmem:[%s2 + $0x40] sm:$0xff]
      %v592 = vld [vmem:[%s2 + $0x48] sm:$0xff]
      %v593 = vld [vmem:[%s2 + $0x50] sm:$0xff]
      %v594 = vld [vmem:[%s2 + $0x58] sm:$0xff]
      %v595 = vld [vmem:[%s2 + $0x60] sm:$0xff]
      %v596 = vld [vmem:[%s2 + $0x68] sm:$0xff]
      %v597 = vld [vmem:[%s2 + $0x70] sm:$0xff]
      %v598 = vld [vmem:[%s2 + $0x78] sm:$0xff]
      %v599 = vld [vmem:[%s2 + $0x80] sm:$0xff]
      %v600 = vld [vmem:[%s2 + $0x88] sm:$0xff]
      %v601 = vld [vmem:[%s2 + $0x90] sm:$0xff]
      %v602 = vld [vmem:[%s2 + $0x98] sm:$0xff]
      %v603 = vld [vmem:[%s2 + $0xa0] sm:$0xff]
      %v604 = vld [vmem:[%s2 + $0xa8] sm:$0xff]
      %v605 = vld [vmem:[%s2 + $0xb0] sm:$0xff]
      %v606 = vld [vmem:[%s2 + $0xb8] sm:$0xff]
      %v607 = vld [vmem:[%s2 + $0xc0] sm:$0xff]
      %v608 = vld [vmem:[%s2 + $0xc8] sm:$0xff]
      %v609 = vld [vmem:[%s2 + $0xd0] sm:$0xff]
      %v610 = vld [vmem:[%s2 + $0xd8] sm:$0xff]
      %v611 = vld [vmem:[%s2 + $0xe0] sm:$0xff]
      %v612 = vld [vmem:[%s2 + $0xe8] sm:$0xff]
      %v613 = vld [vmem:[%s2 + $0xf0] sm:$0xff]
      %v614 = vld [vmem:[%s2 + $0xf8] sm:$0xff]
      %v615 = vld [vmem:[%s2 + $0x100] sm:$0xff]
      %v616 = vld [vmem:[%s2 + $0x108] sm:$0xff]
      %v617 = vld [vmem:[%s2 + $0x110] sm:$0xff]
      %v618 = vld [vmem:[%s2 + $0x118] sm:$0xff]
      %v619 = vld [vmem:[%s2 + $0x120] sm:$0xff]
      %v620 = vld [vmem:[%s2 + $0x128] sm:$0xff]
      %v621 = vld [vmem:[%s2 + $0x130] sm:$0xff]
      %v622 = vld [vmem:[%s2 + $0x138] sm:$0xff]
      %v623 = vld [vmem:[%s2 + $0x140] sm:$0xff]
      %v624 = vld [vmem:[%s2 + $0x148] sm:$0xff]
      %v625 = vld [vmem:[%s2 + $0x150] sm:$0xff]
      %v626 = vld [vmem:[%s2 + $0x158] sm:$0xff]
      %v627 = vld [vmem:[%s2 + $0x160] sm:$0xff]
      %v628 = vld [vmem:[%s2 + $0x168] sm:$0xff]
      %v629 = vld [vmem:[%s2 + $0x170] sm:$0xff]
      %v630 = vld [vmem:[%s2 + $0x178] sm:$0xff]
      %v631 = vld [vmem:[%s2 + $0x180] sm:$0xff]
      %v632 = vld [vmem:[%s2 + $0x188] sm:$0xff]
      %v633 = vld [vmem:[%s2 + $0x190] sm:$0xff]
      %v634 = vld [vmem:[%s2 + $0x198] sm:$0xff]
      %v635 = vld [vmem:[%s2 + $0x1a0] sm:$0xff]
      %v636 = vld [vmem:[%s2 + $0x1a8] sm:$0xff]
      %v637 = vld [vmem:[%s2 + $0x1b0] sm:$0xff]
      %v638 = vld [vmem:[%s2 + $0x1b8] sm:$0xff]
      %v639 = vld [vmem:[%s2 + $0x1c0] sm:$0xff]
      %v640 = vld [vmem:[%s2 + $0x1c8] sm:$0xff]
      %v641 = vld [vmem:[%s2 + $0x1d0] sm:$0xff]
      %v642 = vld [vmem:[%s2 + $0x1d8] sm:$0xff]
      %v643 = vld [vmem:[%s2 + $0x1e0] sm:$0xff]
      %v644 = vld [vmem:[%s2 + $0x1e8] sm:$0xff]
      %v645 = vld [vmem:[%s2 + $0x1f0] sm:$0xff]
      %v646 = vld [vmem:[%s2 + $0x1f8] sm:$0xff]
      %v647 = vld [vmem:[%s2 + $0x200] sm:$0xff]
      %v648 = vld [vmem:[%s2 + $0x208] sm:$0xff]
      %v649 = vld [vmem:[%s2 + $0x210] sm:$0xff]
      %v650 = vld [vmem:[%s2 + $0x218] sm:$0xff]
      %v651 = vld [vmem:[%s2 + $0x220] sm:$0xff]
      %v652 = vld [vmem:[%s2 + $0x228] sm:$0xff]
      %v653 = vld [vmem:[%s2 + $0x230] sm:$0xff]
      %v654 = vld [vmem:[%s2 + $0x238] sm:$0xff]
      %v655 = vld [vmem:[%s2 + $0x240] sm:$0xff]
      %v656 = vld [vmem:[%s2 + $0x248] sm:$0xff]
      %v657 = vld [vmem:[%s2 + $0x250] sm:$0xff]
      %v658 = vld [vmem:[%s2 + $0x258] sm:$0xff]
      %v659 = vld [vmem:[%s2 + $0x260] sm:$0xff]
      %v660 = vld [vmem:[%s2 + $0x268] sm:$0xff]
      %v661 = vld [vmem:[%s2 + $0x270] sm:$0xff]
      %v662 = vld [vmem:[%s2 + $0x278] sm:$0xff]
      %v663 = vld [vmem:[%s2 + $0x280] sm:$0xff]
      %v664 = vld [vmem:[%s2 + $0x288] sm:$0xff]
      %v665 = vld [vmem:[%s2 + $0x290] sm:$0xff]
      %v666 = vld [vmem:[%s2 + $0x298] sm:$0xff]
      %v667 = vld [vmem:[%s2 + $0x2a0] sm:$0xff]
      %v668 = vld [vmem:[%s2 + $0x2a8] sm:$0xff]
      %v669 = vld [vmem:[%s2 + $0x2b0] sm:$0xff]
      %v670 = vld [vmem:[%s2 + $0x2b8] sm:$0xff]
      %v671 = vld [vmem:[%s2 + $0x2c0] sm:$0xff]
      %v672 = vld [vmem:[%s2 + $0x2c8] sm:$0xff]
      %v673 = vld [vmem:[%s2 + $0x2d0] sm:$0xff]
      %v674 = vld [vmem:[%s2 + $0x2d8] sm:$0xff]
      %v675 = vld [vmem:[%s2 + $0x2e0] sm:$0xff]
      %v676 = vld [vmem:[%s2 + $0x2e8] sm:$0xff]
      %v677 = vld [vmem:[%s2 + $0x2f0] sm:$0xff]
      %v678 = vld [vmem:[%s2 + $0x2f8] sm:$0xff]
      %v679 = vld [vmem:[%s2 + $0x300] sm:$0xff]
      %v680 = vld [vmem:[%s2 + $0x308] sm:$0xff]
      %v681 = vld [vmem:[%s2 + $0x310] sm:$0xff]
      %v682 = vld [vmem:[%s2 + $0x318] sm:$0xff]
      %v683 = vld [vmem:[%s2 + $0x320] sm:$0xff]
      %v684 = vld [vmem:[%s2 + $0x328] sm:$0xff]
      %v685 = vld [vmem:[%s2 + $0x330] sm:$0xff]
      %v686 = vld [vmem:[%s2 + $0x338] sm:$0xff]
      %v687 = vld [vmem:[%s2 + $0x340] sm:$0xff]
      %v688 = vld [vmem:[%s2 + $0x348] sm:$0xff]
      %v689 = vld [vmem:[%s2 + $0x350] sm:$0xff]
      %v690 = vld [vmem:[%s2 + $0x358] sm:$0xff]
      %v691 = vld [vmem:[%s2 + $0x360] sm:$0xff]
      %v692 = vld [vmem:[%s2 + $0x368] sm:$0xff]
      %v693 = vld [vmem:[%s2 + $0x370] sm:$0xff]
      %v694 = vld [vmem:[%s2 + $0x378] sm:$0xff]
      %v695 = vld [vmem:[%s2 + $0x380] sm:$0xff]
      %v696 = vld [vmem:[%s2 + $0x388] sm:$0xff]
      %v697 = vld [vmem:[%s2 + $0x390] sm:$0xff]
      %v698 = vld [vmem:[%s2 + $0x398] sm:$0xff]
      %v699 = vld [vmem:[%s2 + $0x3a0] sm:$0xff]
      %v700 = vld [vmem:[%s2 + $0x3a8] sm:$0xff]
      %v701 = vld [vmem:[%s2 + $0x3b0] sm:$0xff]
      %v702 = vld [vmem:[%s2 + $0x3b8] sm:$0xff]
      %v703 = vld [vmem:[%s2 + $0x3c0] sm:$0xff]
      %v704 = vld [vmem:[%s2 + $0x3c8] sm:$0xff]
      %v705 = vld [vmem:[%s2 + $0x3d0] sm:$0xff]
      %v706 = vld [vmem:[%s2 + $0x3d8] sm:$0xff]
      %v707 = vld [vmem:[%s2 + $0x3e0] sm:$0xff]
      %v708 = vld [vmem:[%s2 + $0x3e8] sm:$0xff]
      %v709 = vld [vmem:[%s2 + $0x3f0] sm:$0xff]
      %v710 = vld [vmem:[%s2 + $0x3f8] sm:$0xff]
      %v711 = vld [vmem:[%s2 + $0x400] sm:$0xff]
      %v712 = vld [vmem:[%s2 + $0x408] sm:$0xff]
      %v713 = vld [vmem:[%s2 + $0x410] sm:$0xff]
      %v714 = vld [vmem:[%s2 + $0x418] sm:$0xff]
      %v715 = vld [vmem:[%s2 + $0x420] sm:$0xff]
      %v716 = vld [vmem:[%s2 + $0x428] sm:$0xff]
      %v717 = vld [vmem:[%s2 + $0x430] sm:$0xff]
      %v718 = vld [vmem:[%s2 + $0x438] sm:$0xff]
      %v719 = vld [vmem:[%s2 + $0x440] sm:$0xff]
      %v720 = vld [vmem:[%s2 + $0x448] sm:$0xff]
      %v721 = vld [vmem:[%s2 + $0x450] sm:$0xff]
      %v722 = vld [vmem:[%s2 + $0x458] sm:$0xff]
      %v723 = vld [vmem:[%s2 + $0x460] sm:$0xff]
      %v724 = vld [vmem:[%s2 + $0x468] sm:$0xff]
      %v725 = vld [vmem:[%s2 + $0x470] sm:$0xff]
      %v726 = vld [vmem:[%s2 + $0x478] sm:$0xff]
      %v727 = vld [vmem:[%s2 + $0x480] sm:$0xff]
      %v728 = vld [vmem:[%s2 + $0x488] sm:$0xff]
      %v729 = vld [vmem:[%s2 + $0x490] sm:$0xff]
      %v730 = vld [vmem:[%s2 + $0x498] sm:$0xff]
      %v731 = vld [vmem:[%s2 + $0x4a0] sm:$0xff]
      %v732 = vld [vmem:[%s2 + $0x4a8] sm:$0xff]
      %v733 = vld [vmem:[%s2 + $0x4b0] sm:$0xff]
      %v734 = vld [vmem:[%s2 + $0x4b8] sm:$0xff]
      %v735 = vld [vmem:[%s2 + $0x4c0] sm:$0xff]
      %v736 = vld [vmem:[%s2 + $0x4c8] sm:$0xff]
      %v737 = vld [vmem:[%s2 + $0x4d0] sm:$0xff]
      %v738 = vld [vmem:[%s2 + $0x4d8] sm:$0xff]
      %v739 = vld [vmem:[%s2 + $0x4e0] sm:$0xff]
      %v740 = vld [vmem:[%s2 + $0x4e8] sm:$0xff]
      %v741 = vld [vmem:[%s2 + $0x4f0] sm:$0xff]
      %v742 = vld [vmem:[%s2 + $0x4f8] sm:$0xff]
      %v743 = vld [vmem:[%s2 + $0x500] sm:$0xff]
      %v744 = vld [vmem:[%s2 + $0x508] sm:$0xff]
      %v745 = vld [vmem:[%s2 + $0x510] sm:$0xff]
      %v746 = vld [vmem:[%s2 + $0x518] sm:$0xff]
      %v747 = vld [vmem:[%s2 + $0x520] sm:$0xff]
      %v748 = vld [vmem:[%s2 + $0x528] sm:$0xff]
      %v749 = vld [vmem:[%s2 + $0x530] sm:$0xff]
      %v750 = vld [vmem:[%s2 + $0x538] sm:$0xff]
      %v751 = vld [vmem:[%s2 + $0x540] sm:$0xff]
      %v752 = vld [vmem:[%s2 + $0x548] sm:$0xff]
      %v753 = vld [vmem:[%s2 + $0x550] sm:$0xff]
      %v754 = vld [vmem:[%s2 + $0x558] sm:$0xff]
      %v755 = vld [vmem:[%s2 + $0x560] sm:$0xff]
      %v756 = vld [vmem:[%s2 + $0x568] sm:$0xff]
      %v757 = vld [vmem:[%s2 + $0x570] sm:$0xff]
      %v758 = vld [vmem:[%s2 + $0x578] sm:$0xff]
      %v759 = vld [vmem:[%s2 + $0x580] sm:$0xff]
      %v760 = vld [vmem:[%s2 + $0x588] sm:$0xff]
      %v761 = vld [vmem:[%s2 + $0x590] sm:$0xff]
      %v762 = vld [vmem:[%s2 + $0x598] sm:$0xff]
      %v763 = vld [vmem:[%s2 + $0x5a0] sm:$0xff]
      %v764 = vld [vmem:[%s2 + $0x5a8] sm:$0xff]
      %v765 = vld [vmem:[%s2 + $0x5b0] sm:$0xff]
      %v766 = vld [vmem:[%s2 + $0x5b8] sm:$0xff]
      %v767 = vld [vmem:[%s2 + $0x5c0] sm:$0xff]
      %v768 = vld [vmem:[%s2 + $0x5c8] sm:$0xff]
      %v769 = vld [vmem:[%s2 + $0x5d0] sm:$0xff]
      %v770 = vld [vmem:[%s2 + $0x5d8] sm:$0xff]
      %v771 = vld [vmem:[%s2 + $0x5e0] sm:$0xff]
      %v772 = vld [vmem:[%s2 + $0x5e8] sm:$0xff]
      %v773 = vld [vmem:[%s2 + $0x5f0] sm:$0xff]
      %v774 = vld [vmem:[%s2 + $0x5f8] sm:$0xff]
      %v775 = vld [vmem:[%s2 + $0x600] sm:$0xff]
      %v776 = vld [vmem:[%s2 + $0x608] sm:$0xff]
      %v777 = vld [vmem:[%s2 + $0x610] sm:$0xff]
      %v778 = vld [vmem:[%s2 + $0x618] sm:$0xff]
      %v779 = vld [vmem:[%s2 + $0x620] sm:$0xff]
      %v780 = vld [vmem:[%s2 + $0x628] sm:$0xff]
      %v781 = vld [vmem:[%s2 + $0x630] sm:$0xff]
      %v782 = vld [vmem:[%s2 + $0x638] sm:$0xff]
      %v783 = vld [vmem:[%s2 + $0x640] sm:$0xff]
      %v784 = vld [vmem:[%s2 + $0x648] sm:$0xff]
      %v785 = vld [vmem:[%s2 + $0x650] sm:$0xff]
      %v786 = vld [vmem:[%s2 + $0x658] sm:$0xff]
      %v787 = vld [vmem:[%s2 + $0x660] sm:$0xff]
      %v788 = vld [vmem:[%s2 + $0x668] sm:$0xff]
      %v789 = vld [vmem:[%s2 + $0x670] sm:$0xff]
      %v790 = vld [vmem:[%s2 + $0x678] sm:$0xff]
      %v791 = vld [vmem:[%s2 + $0x680] sm:$0xff]
      %v792 = vld [vmem:[%s2 + $0x688] sm:$0xff]
      %v793 = vld [vmem:[%s2 + $0x690] sm:$0xff]
      %v794 = vld [vmem:[%s2 + $0x698] sm:$0xff]
      %v795 = vld [vmem:[%s2 + $0x6a0] sm:$0xff]
      %v796 = vld [vmem:[%s2 + $0x6a8] sm:$0xff]
      %v797 = vld [vmem:[%s2 + $0x6b0] sm:$0xff]
      %v798 = vld [vmem:[%s2 + $0x6b8] sm:$0xff]
      %v799 = vld [vmem:[%s2 + $0x6c0] sm:$0xff]
      %v800 = vld [vmem:[%s2 + $0x6c8] sm:$0xff]
      %v801 = vld [vmem:[%s2 + $0x6d0] sm:$0xff]
      %v802 = vld [vmem:[%s2 + $0x6d8] sm:$0xff]
      %v803 = vld [vmem:[%s2 + $0x6e0] sm:$0xff]
      %v804 = vld [vmem:[%s2 + $0x6e8] sm:$0xff]
      %v805 = vld [vmem:[%s2 + $0x6f0] sm:$0xff]
      %v806 = vld [vmem:[%s2 + $0x6f8] sm:$0xff]
      %v807 = vld [vmem:[%s2 + $0x700] sm:$0xff]
      %v808 = vld [vmem:[%s2 + $0x708] sm:$0xff]
      %v809 = vld [vmem:[%s2 + $0x710] sm:$0xff]
      %v810 = vld [vmem:[%s2 + $0x718] sm:$0xff]
      %v811 = vld [vmem:[%s2 + $0x720] sm:$0xff]
      %v812 = vld [vmem:[%s2 + $0x728] sm:$0xff]
      %v813 = vld [vmem:[%s2 + $0x730] sm:$0xff]
      %v814 = vld [vmem:[%s2 + $0x738] sm:$0xff]
      %v815 = vld [vmem:[%s2 + $0x740] sm:$0xff]
      %v816 = vld [vmem:[%s2 + $0x748] sm:$0xff]
      %v817 = vld [vmem:[%s2 + $0x750] sm:$0xff]
      %v818 = vld [vmem:[%s2 + $0x758] sm:$0xff]
      %v819 = vld [vmem:[%s2 + $0x760] sm:$0xff]
      %v820 = vld [vmem:[%s2 + $0x768] sm:$0xff]
      %v821 = vld [vmem:[%s2 + $0x770] sm:$0xff]
      %v822 = vld [vmem:[%s2 + $0x778] sm:$0xff]
      %v823 = vld [vmem:[%s2 + $0x780] sm:$0xff]
      %v824 = vld [vmem:[%s2 + $0x788] sm:$0xff]
      %v825 = vld [vmem:[%s2 + $0x790] sm:$0xff]
      %v826 = vld [vmem:[%s2 + $0x798] sm:$0xff]
      %v827 = vld [vmem:[%s2 + $0x7a0] sm:$0xff]
      %v828 = vld [vmem:[%s2 + $0x7a8] sm:$0xff]
      %v829 = vld [vmem:[%s2 + $0x7b0] sm:$0xff]
      %v830 = vld [vmem:[%s2 + $0x7b8] sm:$0xff]
      %v831 = vld [vmem:[%s2 + $0x7c0] sm:$0xff]
      %v832 = vld [vmem:[%s2 + $0x7c8] sm:$0xff]
      %v833 = vld [vmem:[%s2 + $0x7d0] sm:$0xff]
      %v834 = vld [vmem:[%s2 + $0x7d8] sm:$0xff]
      %v835 = vld [vmem:[%s2 + $0x7e0] sm:$0xff]
      %v836 = vld [vmem:[%s2 + $0x7e8] sm:$0xff]
      %v837 = vld [vmem:[%s2 + $0x7f0] sm:$0xff]
      %v838 = vld [vmem:[%s2 + $0x7f8] sm:$0xff]
      %v839 = vld [vmem:[%s2 + $0x800] sm:$0xff]
      %v840 = vld [vmem:[%s2 + $0x808] sm:$0xff]
      %v841 = vld [vmem:[%s2 + $0x810] sm:$0xff]
      %v842 = vld [vmem:[%s2 + $0x818] sm:$0xff]
      %v843 = vld [vmem:[%s2 + $0x820] sm:$0xff]
      %v844 = vld [vmem:[%s2 + $0x828] sm:$0xff]
      %v845 = vld [vmem:[%s2 + $0x830] sm:$0xff]
      %v846 = vld [vmem:[%s2 + $0x838] sm:$0xff]
      %v847 = vld [vmem:[%s2 + $0x840] sm:$0xff]
      %v848 = vld [vmem:[%s2 + $0x848] sm:$0xff]
      %v849 = vld [vmem:[%s2 + $0x850] sm:$0xff]
      %v850 = vld [vmem:[%s2 + $0x858] sm:$0xff]
      %v851 = vld [vmem:[%s2 + $0x860] sm:$0xff]
      %v852 = vld [vmem:[%s2 + $0x868] sm:$0xff]
      %v853 = vld [vmem:[%s2 + $0x870] sm:$0xff]
      %v854 = vld [vmem:[%s2 + $0x878] sm:$0xff]
      %v855 = vld [vmem:[%s2 + $0x880] sm:$0xff]
      %v856 = vld [vmem:[%s2 + $0x888] sm:$0xff]
      %v857 = vld [vmem:[%s2 + $0x890] sm:$0xff]
      %v858 = vld [vmem:[%s2 + $0x898] sm:$0xff]
      %v859 = vld [vmem:[%s2 + $0x8a0] sm:$0xff]
      %v860 = vld [vmem:[%s2 + $0x8a8] sm:$0xff]
      %v861 = vld [vmem:[%s2 + $0x8b0] sm:$0xff]
      %v862 = vld [vmem:[%s2 + $0x8b8] sm:$0xff]
      %v863 = vld [vmem:[%s2 + $0x8c0] sm:$0xff]
      %v864 = vld [vmem:[%s2 + $0x8c8] sm:$0xff]
      %v865 = vld [vmem:[%s2 + $0x8d0] sm:$0xff]
      %v866 = vld [vmem:[%s2 + $0x8d8] sm:$0xff]
      %v867 = vld [vmem:[%s2 + $0x8e0] sm:$0xff]
      %v868 = vld [vmem:[%s2 + $0x8e8] sm:$0xff]
      %v869 = vld [vmem:[%s2 + $0x8f0] sm:$0xff]
      %v870 = vld [vmem:[%s2 + $0x8f8] sm:$0xff]
      %v871 = vld [vmem:[%s2 + $0x900] sm:$0xff]
      %v872 = vld [vmem:[%s2 + $0x908] sm:$0xff]
      %v873 = vld [vmem:[%s2 + $0x910] sm:$0xff]
      %v874 = vld [vmem:[%s2 + $0x918] sm:$0xff]
      %v875 = vld [vmem:[%s2 + $0x920] sm:$0xff]
      %v876 = vld [vmem:[%s2 + $0x928] sm:$0xff]
      %v877 = vld [vmem:[%s2 + $0x930] sm:$0xff]
      %v878 = vld [vmem:[%s2 + $0x938] sm:$0xff]
      %v879 = vld [vmem:[%s2 + $0x940] sm:$0xff]
      %v880 = vld [vmem:[%s2 + $0x948] sm:$0xff]
      %v881 = vld [vmem:[%s2 + $0x950] sm:$0xff]
      %v882 = vld [vmem:[%s2 + $0x958] sm:$0xff]
      %v883 = vld [vmem:[%s2 + $0x960] sm:$0xff]
      %v884 = vld [vmem:[%s2 + $0x968] sm:$0xff]
      %v885 = vld [vmem:[%s2 + $0x970] sm:$0xff]
      %v886 = vld [vmem:[%s2 + $0x978] sm:$0xff]
      %v887 = vld [vmem:[%s2 + $0x980] sm:$0xff]
      %v888 = vld [vmem:[%s2 + $0x988] sm:$0xff]
      %v889 = vld [vmem:[%s2 + $0x990] sm:$0xff]
      %v890 = vld [vmem:[%s2 + $0x998] sm:$0xff]
      %v891 = vld [vmem:[%s2 + $0x9a0] sm:$0xff]
      %v892 = vld [vmem:[%s2 + $0x9a8] sm:$0xff]
      %v893 = vld [vmem:[%s2 + $0x9b0] sm:$0xff]
      %v894 = vld [vmem:[%s2 + $0x9b8] sm:$0xff]
      %v895 = vld [vmem:[%s2 + $0x9c0] sm:$0xff]
      %v896 = vld [vmem:[%s2 + $0x9c8] sm:$0xff]
      %v897 = vld [vmem:[%s2 + $0x9d0] sm:$0xff]
      %v898 = vld [vmem:[%s2 + $0x9d8] sm:$0xff]
      %v899 = vld [vmem:[%s2 + $0x9e0] sm:$0xff]
      %v900 = vld [vmem:[%s2 + $0x9e8] sm:$0xff]
      %v901 = vld [vmem:[%s2 + $0x9f0] sm:$0xff]
      %v902 = vld [vmem:[%s2 + $0x9f8] sm:$0xff]
      %v903 = vld [vmem:[%s2 + $0xa00] sm:$0xff]
      %v904 = vld [vmem:[%s2 + $0xa08] sm:$0xff]
      %v905 = vld [vmem:[%s2 + $0xa10] sm:$0xff]
      %v906 = vld [vmem:[%s2 + $0xa18] sm:$0xff]
      %v907 = vld [vmem:[%s2 + $0xa20] sm:$0xff]
      %v908 = vld [vmem:[%s2 + $0xa28] sm:$0xff]
      %v909 = vld [vmem:[%s2 + $0xa30] sm:$0xff]
      %v910 = vld [vmem:[%s2 + $0xa38] sm:$0xff]
      %v911 = vld [vmem:[%s2 + $0xa40] sm:$0xff]
      %v912 = vld [vmem:[%s2 + $0xa48] sm:$0xff]
      %v913 = vld [vmem:[%s2 + $0xa50] sm:$0xff]
      %v914 = vld [vmem:[%s2 + $0xa58] sm:$0xff]
      %v915 = vld [vmem:[%s2 + $0xa60] sm:$0xff]
      %v916 = vld [vmem:[%s2 + $0xa68] sm:$0xff]
      %v917 = vld [vmem:[%s2 + $0xa70] sm:$0xff]
      %v918 = vld [vmem:[%s2 + $0xa78] sm:$0xff]
      %v919 = vld [vmem:[%s2 + $0xa80] sm:$0xff]
      %v920 = vld [vmem:[%s2 + $0xa88] sm:$0xff]
      %v921 = vld [vmem:[%s2 + $0xa90] sm:$0xff]
      %v922 = vld [vmem:[%s2 + $0xa98] sm:$0xff]
      %v923 = vld [vmem:[%s2 + $0xaa0] sm:$0xff]
      %v924 = vld [vmem:[%s2 + $0xaa8] sm:$0xff]
      %v925 = vld [vmem:[%s2 + $0xab0] sm:$0xff]
      %v926 = vld [vmem:[%s2 + $0xab8] sm:$0xff]
      %v927 = vld [vmem:[%s2 + $0xac0] sm:$0xff]
      %v928 = vld [vmem:[%s2 + $0xac8] sm:$0xff]
      %v929 = vld [vmem:[%s2 + $0xad0] sm:$0xff]
      %v930 = vld [vmem:[%s2 + $0xad8] sm:$0xff]
      %v931 = vld [vmem:[%s2 + $0xae0] sm:$0xff]
      %v932 = vld [vmem:[%s2 + $0xae8] sm:$0xff]
      %v933 = vld [vmem:[%s2 + $0xaf0] sm:$0xff]
      %v934 = vld [vmem:[%s2 + $0xaf8] sm:$0xff]
      %v935 = vld [vmem:[%s2 + $0xb00] sm:$0xff]
      %v936 = vld [vmem:[%s2 + $0xb08] sm:$0xff]
      %v937 = vld [vmem:[%s2 + $0xb10] sm:$0xff]
      %v938 = vld [vmem:[%s2 + $0xb18] sm:$0xff]
      %v939 = vld [vmem:[%s2 + $0xb20] sm:$0xff]
      %v940 = vld [vmem:[%s2 + $0xb28] sm:$0xff]
      %v941 = vld [vmem:[%s2 + $0xb30] sm:$0xff]
      %v942 = vld [vmem:[%s2 + $0xb38] sm:$0xff]
      %v943 = vld [vmem:[%s2 + $0xb40] sm:$0xff]
      %v944 = vld [vmem:[%s2 + $0xb48] sm:$0xff]
      %v945 = vld [vmem:[%s2 + $0xb50] sm:$0xff]
      %v946 = vld [vmem:[%s2 + $0xb58] sm:$0xff]
      %v947 = vld [vmem:[%s2 + $0xb60] sm:$0xff]
      %v948 = vld [vmem:[%s2 + $0xb68] sm:$0xff]
      %v949 = vld [vmem:[%s2 + $0xb70] sm:$0xff]
      %v950 = vld [vmem:[%s2 + $0xb78] sm:$0xff]
      %v951 = vld [vmem:[%s2 + $0xb80] sm:$0xff]
      %v952 = vld [vmem:[%s2 + $0xb88] sm:$0xff]
      %v953 = vld [vmem:[%s2 + $0xb90] sm:$0xff]
      %v954 = vld [vmem:[%s2 + $0xb98] sm:$0xff]
      %v955 = vld [vmem:[%s2 + $0xba0] sm:$0xff]
      %v956 = vld [vmem:[%s2 + $0xba8] sm:$0xff]
      %v957 = vld [vmem:[%s2 + $0xbb0] sm:$0xff]
      %v958 = vld [vmem:[%s2 + $0xbb8] sm:$0xff]
      %v959 = vld [vmem:[%s2 + $0xbc0] sm:$0xff]
      %v960 = vld [vmem:[%s2 + $0xbc8] sm:$0xff]
      %v961 = vld [vmem:[%s2 + $0xbd0] sm:$0xff]
      %v962 = vld [vmem:[%s2 + $0xbd8] sm:$0xff]
      %v963 = vld [vmem:[%s2 + $0xbe0] sm:$0xff]
      %v964 = vld [vmem:[%s2 + $0xbe8] sm:$0xff]
      %v965 = vld [vmem:[%s2 + $0xbf0] sm:$0xff]
      %v966 = vld [vmem:[%s2 + $0xbf8] sm:$0xff]
      %v967 = vld [vmem:[%s2 + $0xc00] sm:$0xff]
      %v968 = vld [vmem:[%s2 + $0xc08] sm:$0xff]
      %v969 = vld [vmem:[%s2 + $0xc10] sm:$0xff]
      %v970 = vld [vmem:[%s2 + $0xc18] sm:$0xff]
      %v971 = vld [vmem:[%s2 + $0xc20] sm:$0xff]
      %v972 = vld [vmem:[%s2 + $0xc28] sm:$0xff]
      %v973 = vld [vmem:[%s2 + $0xc30] sm:$0xff]
      %v974 = vld [vmem:[%s2 + $0xc38] sm:$0xff]
      %v975 = vld [vmem:[%s3] sm:$0xf]
      %v977 = vlaneseq
      %v978 = vshrl.u32 %v977, 7
      %v979 = vsub.s32 0, %v978
      %v980 = vrot.slane %v975, %v979
      %v981 = vlaneseq
      %v982 = vshrl.u32 %v981, 7
      %v983 = vsub.s32 1, %v982
      %v984 = vrot.slane %v975, %v983
      %v985 = vlaneseq
      %v986 = vshrl.u32 %v985, 7
      %v987 = vsub.s32 2, %v986
      %v988 = vrot.slane %v975, %v987
      %v989 = vlaneseq
      %v990 = vshrl.u32 %v989, 7
      %v991 = vsub.s32 3, %v990
      %v992 = vrot.slane %v975, %v991
      %vm997 = vcmask 130048
      %v999 = vsel %vm997, %v477, 0
      %v1002 = vsel %vm997, %v484, 0
      %v1005 = vsel %vm997, %v491, 0
      %v1008 = vsel %vm997, %v498, 0
      %v1011 = vsel %vm997, %v505, 0
      %v1014 = vsel %vm997, %v512, 0
      %v1017 = vsel %vm997, %v519, 0
      %v1020 = vsel %vm997, %v526, 0
      %v1023 = vsel %vm997, %v533, 0
      %v1026 = vsel %vm997, %v540, 0
      %v1029 = vsel %vm997, %v547, 0
      %v1032 = vsel %vm997, %v554, 0
      %v1035 = vsel %vm997, %v561, 0
      %v1038 = vsel %vm997, %v568, 0
      %v1041 = vsel %vm997, %v575, 0
      %v1044 = vsel %vm997, %v582, 0
      %1046 = vmatprep.subr.mxu0 %v584
      %1047 = vmatpush1.msra.mxu0 %v583
      %1048 = vmatprep.subr.mxu0 %v588
      %1049 = vmatpush1.msra.mxu0 %v587
      %1050 = vmatprep.subr.mxu0 %v592
      %1051 = vmatpush1.msra.mxu0 %v591
      %1052 = vmatprep.subr.mxu0 %v596
      %1053 = vmatpush1.msra.mxu0 %v595
      %1054 = vmatprep.subr.mxu0 %v600
      %1055 = vmatpush1.msra.mxu0 %v599
      %1056 = vmatprep.subr.mxu0 %v604
      %1057 = vmatpush1.msra.mxu0 %v603
      %1058 = vmatprep.subr.mxu0 %v608
      %1059 = vmatpush1.msra.mxu0 %v607
      %1060 = vmatprep.subr.mxu0 %v612
      %1061 = vmatpush1.msra.mxu0 %v611
      %1062 = vmatprep.subr.mxu0 %v616
      %1063 = vmatpush1.msra.mxu0 %v615
      %1064 = vmatprep.subr.mxu0 %v620
      %1065 = vmatpush1.msra.mxu0 %v619
      %1066 = vmatprep.subr.mxu0 %v624
      %1067 = vmatpush1.msra.mxu0 %v623
      %1068 = vmatprep.subr.mxu0 %v628
      %1069 = vmatpush1.msra.mxu0 %v627
      %1070 = vmatprep.subr.mxu0 %v632
      %1071 = vmatpush1.msra.mxu0 %v631
      %1072 = vmatprep.subr.mxu0 %v636
      %1073 = vmatpush1.msra.mxu0 %v635
      %1074 = vmatprep.subr.mxu0 %v640
      %1075 = vmatpush1.msra.mxu0 %v639
      %1076 = vmatprep.subr.mxu0 %v644
      %1077 = vmatpush1.msra.mxu0 %v643
      %1078 = vmatprep.subr.mxu0 %v648
      %1079 = vmatpush1.msra.mxu0 %v647
      %1080 = vmatprep.subr.mxu0 %v652
      %1081 = vmatpush1.msra.mxu0 %v651
      %1082 = vmatprep.subr.mxu0 %v656
      %1083 = vmatpush1.msra.mxu0 %v655
      %1084 = vmatprep.subr.mxu0 %v660
      %1085 = vmatpush1.msra.mxu0 %v659
      %1086 = vmatprep.subr.mxu0 %v664
      %1087 = vmatpush1.msra.mxu0 %v663
      %1088 = vmatprep.subr.mxu0 %v668
      %1089 = vmatpush1.msra.mxu0 %v667
      %1090 = vmatprep.subr.mxu0 %v672
      %1091 = vmatpush1.msra.mxu0 %v671
      %1092 = vmatprep.subr.mxu0 %v676
      %1093 = vmatpush1.msra.mxu0 %v675
      %1094 = vmatprep.subr.mxu0 %v680
      %1095 = vmatpush1.msra.mxu0 %v679
      %1096 = vmatprep.subr.mxu0 %v684
      %1097 = vmatpush1.msra.mxu0 %v683
      %1098 = vmatprep.subr.mxu0 %v688
      %1099 = vmatpush1.msra.mxu0 %v687
      %1100 = vmatprep.subr.mxu0 %v692
      %1101 = vmatpush1.msra.mxu0 %v691
      %1102 = vmatprep.subr.mxu0 %v696
      %1103 = vmatpush1.msra.mxu0 %v695
      %1104 = vmatprep.subr.mxu0 %v700
      %1105 = vmatpush1.msra.mxu0 %v699
      %1106 = vmatprep.subr.mxu0 %v704
      %1107 = vmatpush1.msra.mxu0 %v703
      %1108 = vmatprep.subr.mxu0 %v708
      %1109 = vmatpush1.msra.mxu0 %v707
      %1110 = vmatprep.mubr.f32.mxu0 %v472
      %1111 = vmatmul.mubr.f32.gmra.mrb[0].mxu0 %v471
      %v1112 = vpop.f32.mrb[0].mxu0
      %v1113 = vadd.f32 %v980, %v1112
      %v1114 = vpop.f32.mrb[0].mxu0
      %v1115 = vadd.f32 %v984, %v1114
      %1116 = vmatprep.mubr.f32.mxu0 %v479
      %1117 = vmatmul.mubr.f32.gmra.mrb[0].mxu0 %v478
      %v1118 = vpop.f32.mrb[0].mxu0
      %v1119 = vadd.f32 %v980, %v1118
      %v1120 = vpop.f32.mrb[0].mxu0
      %v1121 = vadd.f32 %v984, %v1120
      %1122 = vmatprep.mubr.f32.mxu0 %v486
      %1123 = vmatmul.mubr.f32.gmra.mrb[0].mxu0 %v485
      %v1124 = vpop.f32.mrb[0].mxu0
      %v1125 = vadd.f32 %v980, %v1124
      %v1126 = vpop.f32.mrb[0].mxu0
      %v1127 = vadd.f32 %v984, %v1126
      %1128 = vmatprep.mubr.f32.mxu0 %v493
      %1129 = vmatmul.mubr.f32.gmra.mrb[0].mxu0 %v492
      %v1130 = vpop.f32.mrb[0].mxu0
      %v1131 = vadd.f32 %v980, %v1130
      %v1132 = vpop.f32.mrb[0].mxu0
      %v1133 = vadd.f32 %v984, %v1132
      %1134 = vmatprep.mubr.f32.mxu0 %v500
      %1135 = vmatmul.mubr.f32.gmra.mrb[0].mxu0 %v499
      %v1136 = vpop.f32.mrb[0].mxu0
      %v1137 = vadd.f32 %v980, %v1136
      %v1138 = vpop.f32.mrb[0].mxu0
      %v1139 = vadd.f32 %v984, %v1138
      %1140 = vmatprep.mubr.f32.mxu0 %v507
      %1141 = vmatmul.mubr.f32.gmra.mrb[0].mxu0 %v506
      %v1142 = vpop.f32.mrb[0].mxu0
      %v1143 = vadd.f32 %v980, %v1142
      %v1144 = vpop.f32.mrb[0].mxu0
      %v1145 = vadd.f32 %v984, %v1144
      %1146 = vmatprep.mubr.f32.mxu0 %v514
      %1147 = vmatmul.mubr.f32.gmra.mrb[0].mxu0 %v513
      %v1148 = vpop.f32.mrb[0].mxu0
      %v1149 = vadd.f32 %v980, %v1148
      %v1150 = vpop.f32.mrb[0].mxu0
      %v1151 = vadd.f32 %v984, %v1150
      %1152 = vmatprep.mubr.f32.mxu0 %v521
      %1153 = vmatmul.mubr.f32.gmra.mrb[0].mxu0 %v520
      %v1154 = vpop.f32.mrb[0].mxu0
      %v1155 = vadd.f32 %v980, %v1154
      %v1156 = vpop.f32.mrb[0].mxu0
      %v1157 = vadd.f32 %v984, %v1156
      %1158 = vmatprep.mubr.f32.mxu0 %v528
      %1159 = vmatmul.mubr.f32.gmra.mrb[0].mxu0 %v527
      %v1160 = vpop.f32.mrb[0].mxu0
      %v1161 = vadd.f32 %v980, %v1160
      %v1162 = vpop.f32.mrb[0].mxu0
      %v1163 = vadd.f32 %v984, %v1162
      %1164 = vmatprep.mubr.f32.mxu0 %v535
      %1165 = vmatmul.mubr.f32.gmra.mrb[0].mxu0 %v534
      %v1166 = vpop.f32.mrb[0].mxu0
      %v1167 = vadd.f32 %v980, %v1166
      %v1168 = vpop.f32.mrb[0].mxu0
      %v1169 = vadd.f32 %v984, %v1168
      %1170 = vmatprep.mubr.f32.mxu0 %v542
      %1171 = vmatmul.mubr.f32.gmra.mrb[0].mxu0 %v541
      %v1172 = vpop.f32.mrb[0].mxu0
      %v1173 = vadd.f32 %v980, %v1172
      %v1174 = vpop.f32.mrb[0].mxu0
      %v1175 = vadd.f32 %v984, %v1174
      %1176 = vmatprep.mubr.f32.mxu0 %v549
      %1177 = vmatmul.mubr.f32.gmra.mrb[0].mxu0 %v548
      %v1178 = vpop.f32.mrb[0].mxu0
      %v1179 = vadd.f32 %v980, %v1178
      %v1180 = vpop.f32.mrb[0].mxu0
      %v1181 = vadd.f32 %v984, %v1180
      %1182 = vmatprep.mubr.f32.mxu0 %v556
      %1183 = vmatmul.mubr.f32.gmra.mrb[0].mxu0 %v555
      %v1184 = vpop.f32.mrb[0].mxu0
      %v1185 = vadd.f32 %v980, %v1184
      %v1186 = vpop.f32.mrb[0].mxu0
      %v1187 = vadd.f32 %v984, %v1186
      %1188 = vmatprep.mubr.f32.mxu0 %v563
      %1189 = vmatmul.mubr.f32.gmra.mrb[0].mxu0 %v562
      %v1190 = vpop.f32.mrb[0].mxu0
      %v1191 = vadd.f32 %v980, %v1190
      %v1192 = vpop.f32.mrb[0].mxu0
      %v1193 = vadd.f32 %v984, %v1192
      %1194 = vmatprep.mubr.f32.mxu0 %v570
      %1195 = vmatmul.mubr.f32.gmra.mrb[0].mxu0 %v569
      %v1196 = vpop.f32.mrb[0].mxu0
      %v1197 = vadd.f32 %v980, %v1196
      %v1198 = vpop.f32.mrb[0].mxu0
      %v1199 = vadd.f32 %v984, %v1198
      %1200 = vmatprep.mubr.f32.mxu0 %v577
      %1201 = vmatmul.mubr.f32.gmra.mrb[0].mxu0 %v576
      %v1202 = vpop.f32.mrb[0].mxu0
      %v1203 = vadd.f32 %v980, %v1202
      %v1204 = vpop.f32.mrb[0].mxu0
      %v1205 = vadd.f32 %v984, %v1204
      %1206 = vdwg.mxu0
      %1207 = vmatprep.subr.mxu0 %v712
      %1208 = vmatpush1.msra.mxu0 %v711
      %1209 = vmatprep.subr.mxu0 %v716
      %1210 = vmatpush1.msra.mxu0 %v715
      %1211 = vmatprep.subr.mxu0 %v720
      %1212 = vmatpush1.msra.mxu0 %v719
      %1213 = vmatprep.subr.mxu0 %v724
      %1214 = vmatpush1.msra.mxu0 %v723
      %1215 = vmatprep.subr.mxu0 %v728
      %1216 = vmatpush1.msra.mxu0 %v727
      %1217 = vmatprep.subr.mxu0 %v732
      %1218 = vmatpush1.msra.mxu0 %v731
      %1219 = vmatprep.subr.mxu0 %v736
      %1220 = vmatpush1.msra.mxu0 %v735
      %1221 = vmatprep.subr.mxu0 %v740
      %1222 = vmatpush1.msra.mxu0 %v739
      %1223 = vmatprep.subr.mxu0 %v744
      %1224 = vmatpush1.msra.mxu0 %v743
      %1225 = vmatprep.subr.mxu0 %v748
      %1226 = vmatpush1.msra.mxu0 %v747
      %1227 = vmatprep.subr.mxu0 %v752
      %1228 = vmatpush1.msra.mxu0 %v751
      %1229 = vmatprep.subr.mxu0 %v756
      %1230 = vmatpush1.msra.mxu0 %v755
      %1231 = vmatprep.subr.mxu0 %v760
      %1232 = vmatpush1.msra.mxu0 %v759
      %1233 = vmatprep.subr.mxu0 %v764
      %1234 = vmatpush1.msra.mxu0 %v763
      %1235 = vmatprep.subr.mxu0 %v768
      %1236 = vmatpush1.msra.mxu0 %v767
      %1237 = vmatprep.subr.mxu0 %v772
      %1238 = vmatpush1.msra.mxu0 %v771
      %1239 = vmatprep.subr.mxu0 %v776
      %1240 = vmatpush1.msra.mxu0 %v775
      %1241 = vmatprep.subr.mxu0 %v780
      %1242 = vmatpush1.msra.mxu0 %v779
      %1243 = vmatprep.subr.mxu0 %v784
      %1244 = vmatpush1.msra.mxu0 %v783
      %1245 = vmatprep.subr.mxu0 %v788
      %1246 = vmatpush1.msra.mxu0 %v787
      %1247 = vmatprep.subr.mxu0 %v792
      %1248 = vmatpush1.msra.mxu0 %v791
      %1249 = vmatprep.subr.mxu0 %v796
      %1250 = vmatpush1.msra.mxu0 %v795
      %1251 = vmatprep.subr.mxu0 %v800
      %1252 = vmatpush1.msra.mxu0 %v799
      %1253 = vmatprep.subr.mxu0 %v804
      %1254 = vmatpush1.msra.mxu0 %v803
      %1255 = vmatprep.subr.mxu0 %v808
      %1256 = vmatpush1.msra.mxu0 %v807
      %1257 = vmatprep.subr.mxu0 %v812
      %1258 = vmatpush1.msra.mxu0 %v811
      %1259 = vmatprep.subr.mxu0 %v816
      %1260 = vmatpush1.msra.mxu0 %v815
      %1261 = vmatprep.subr.mxu0 %v820
      %1262 = vmatpush1.msra.mxu0 %v819
      %1263 = vmatprep.subr.mxu0 %v824
      %1264 = vmatpush1.msra.mxu0 %v823
      %1265 = vmatprep.subr.mxu0 %v828
      %1266 = vmatpush1.msra.mxu0 %v827
      %1267 = vmatprep.subr.mxu0 %v832
      %1268 = vmatpush1.msra.mxu0 %v831
      %1269 = vmatprep.subr.mxu0 %v836
      %1270 = vmatpush1.msra.mxu0 %v835
      %1271 = vmatprep.mubr.f32.mxu0 %v474
      %1272 = vmatmul.mubr.f32.gmra.mrb[0].mxu0 %v473
      %v1273 = vpop.f32.mrb[0].mxu0
      %v1274 = vadd.f32 %v1113, %v1273
      %v1275 = vpop.f32.mrb[0].mxu0
      %v1276 = vadd.f32 %v1115, %v1275
      %1277 = vmatprep.mubr.f32.mxu0 %v481
      %1278 = vmatmul.mubr.f32.gmra.mrb[0].mxu0 %v480
      %v1279 = vpop.f32.mrb[0].mxu0
      %v1280 = vadd.f32 %v1119, %v1279
      %v1281 = vpop.f32.mrb[0].mxu0
      %v1282 = vadd.f32 %v1121, %v1281
      %1283 = vmatprep.mubr.f32.mxu0 %v488
      %1284 = vmatmul.mubr.f32.gmra.mrb[0].mxu0 %v487
      %v1285 = vpop.f32.mrb[0].mxu0
      %v1286 = vadd.f32 %v1125, %v1285
      %v1287 = vpop.f32.mrb[0].mxu0
      %v1288 = vadd.f32 %v1127, %v1287
      %1289 = vmatprep.mubr.f32.mxu0 %v495
      %1290 = vmatmul.mubr.f32.gmra.mrb[0].mxu0 %v494
      %v1291 = vpop.f32.mrb[0].mxu0
      %v1292 = vadd.f32 %v1131, %v1291
      %v1293 = vpop.f32.mrb[0].mxu0
      %v1294 = vadd.f32 %v1133, %v1293
      %1295 = vmatprep.mubr.f32.mxu0 %v502
      %1296 = vmatmul.mubr.f32.gmra.mrb[0].mxu0 %v501
      %v1297 = vpop.f32.mrb[0].mxu0
      %v1298 = vadd.f32 %v1137, %v1297
      %v1299 = vpop.f32.mrb[0].mxu0
      %v1300 = vadd.f32 %v1139, %v1299
      %1301 = vmatprep.mubr.f32.mxu0 %v509
      %1302 = vmatmul.mubr.f32.gmra.mrb[0].mxu0 %v508
      %v1303 = vpop.f32.mrb[0].mxu0
      %v1304 = vadd.f32 %v1143, %v1303
      %v1305 = vpop.f32.mrb[0].mxu0
      %v1306 = vadd.f32 %v1145, %v1305
      %1307 = vmatprep.mubr.f32.mxu0 %v516
      %1308 = vmatmul.mubr.f32.gmra.mrb[0].mxu0 %v515
      %v1309 = vpop.f32.mrb[0].mxu0
      %v1310 = vadd.f32 %v1149, %v1309
      %v1311 = vpop.f32.mrb[0].mxu0
      %v1312 = vadd.f32 %v1151, %v1311
      %1313 = vmatprep.mubr.f32.mxu0 %v523
      %1314 = vmatmul.mubr.f32.gmra.mrb[0].mxu0 %v522
      %v1315 = vpop.f32.mrb[0].mxu0
      %v1316 = vadd.f32 %v1155, %v1315
      %v1317 = vpop.f32.mrb[0].mxu0
      %v1318 = vadd.f32 %v1157, %v1317
      %1319 = vmatprep.mubr.f32.mxu0 %v530
      %1320 = vmatmul.mubr.f32.gmra.mrb[0].mxu0 %v529
      %v1321 = vpop.f32.mrb[0].mxu0
      %v1322 = vadd.f32 %v1161, %v1321
      %v1323 = vpop.f32.mrb[0].mxu0
      %v1324 = vadd.f32 %v1163, %v1323
      %1325 = vmatprep.mubr.f32.mxu0 %v537
      %1326 = vmatmul.mubr.f32.gmra.mrb[0].mxu0 %v536
      %v1327 = vpop.f32.mrb[0].mxu0
      %v1328 = vadd.f32 %v1167, %v1327
      %v1329 = vpop.f32.mrb[0].mxu0
      %v1330 = vadd.f32 %v1169, %v1329
      %1331 = vmatprep.mubr.f32.mxu0 %v544
      %1332 = vmatmul.mubr.f32.gmra.mrb[0].mxu0 %v543
      %v1333 = vpop.f32.mrb[0].mxu0
      %v1334 = vadd.f32 %v1173, %v1333
      %v1335 = vpop.f32.mrb[0].mxu0
      %v1336 = vadd.f32 %v1175, %v1335
      %1337 = vmatprep.mubr.f32.mxu0 %v551
      %1338 = vmatmul.mubr.f32.gmra.mrb[0].mxu0 %v550
      %v1339 = vpop.f32.mrb[0].mxu0
      %v1340 = vadd.f32 %v1179, %v1339
      %v1341 = vpop.f32.mrb[0].mxu0
      %v1342 = vadd.f32 %v1181, %v1341
      %1343 = vmatprep.mubr.f32.mxu0 %v558
      %1344 = vmatmul.mubr.f32.gmra.mrb[0].mxu0 %v557
      %v1345 = vpop.f32.mrb[0].mxu0
      %v1346 = vadd.f32 %v1185, %v1345
      %v1347 = vpop.f32.mrb[0].mxu0
      %v1348 = vadd.f32 %v1187, %v1347
      %1349 = vmatprep.mubr.f32.mxu0 %v565
      %1350 = vmatmul.mubr.f32.gmra.mrb[0].mxu0 %v564
      %v1351 = vpop.f32.mrb[0].mxu0
      %v1352 = vadd.f32 %v1191, %v1351
      %v1353 = vpop.f32.mrb[0].mxu0
      %v1354 = vadd.f32 %v1193, %v1353
      %1355 = vmatprep.mubr.f32.mxu0 %v572
      %1356 = vmatmul.mubr.f32.gmra.mrb[0].mxu0 %v571
      %v1357 = vpop.f32.mrb[0].mxu0
      %v1358 = vadd.f32 %v1197, %v1357
      %v1359 = vpop.f32.mrb[0].mxu0
      %v1360 = vadd.f32 %v1199, %v1359
      %1361 = vmatprep.mubr.f32.mxu0 %v579
      %1362 = vmatmul.mubr.f32.gmra.mrb[0].mxu0 %v578
      %v1363 = vpop.f32.mrb[0].mxu0
      %v1364 = vadd.f32 %v1203, %v1363
      %v1365 = vpop.f32.mrb[0].mxu0
      %v1366 = vadd.f32 %v1205, %v1365
      %1367 = vdwg.mxu0
      %1368 = vmatprep.subr.mxu0 %v840
      %1369 = vmatpush1.msra.mxu0 %v839
      %1370 = vmatprep.subr.mxu0 %v844
      %1371 = vmatpush1.msra.mxu0 %v843
      %1372 = vmatprep.subr.mxu0 %v848
      %1373 = vmatpush1.msra.mxu0 %v847
      %1374 = vmatprep.subr.mxu0 %v852
      %1375 = vmatpush1.msra.mxu0 %v851
      %1376 = vmatprep.subr.mxu0 %v856
      %1377 = vmatpush1.msra.mxu0 %v855
      %1378 = vmatprep.subr.mxu0 %v860
      %1379 = vmatpush1.msra.mxu0 %v859
      %1380 = vmatprep.subr.mxu0 %v864
      %1381 = vmatpush1.msra.mxu0 %v863
      %1382 = vmatprep.subr.mxu0 %v868
      %1383 = vmatpush1.msra.mxu0 %v867
      %1384 = vmatprep.subr.mxu0 %v872
      %1385 = vmatpush1.msra.mxu0 %v871
      %1386 = vmatprep.subr.mxu0 %v876
      %1387 = vmatpush1.msra.mxu0 %v875
      %1388 = vmatprep.subr.mxu0 %v880
      %1389 = vmatpush1.msra.mxu0 %v879
      %1390 = vmatprep.subr.mxu0 %v884
      %1391 = vmatpush1.msra.mxu0 %v883
      %1392 = vmatprep.subr.mxu0 %v888
      %1393 = vmatpush1.msra.mxu0 %v887
      %1394 = vmatprep.subr.mxu0 %v892
      %1395 = vmatpush1.msra.mxu0 %v891
      %1396 = vmatprep.subr.mxu0 %v896
      %1397 = vmatpush1.msra.mxu0 %v895
      %1398 = vmatprep.subr.mxu0 %v900
      %1399 = vmatpush1.msra.mxu0 %v899
      %1400 = vmatprep.subr.mxu0 %v904
      %1401 = vmatpush1.msra.mxu0 %v903
      %1402 = vmatprep.subr.mxu0 %v908
      %1403 = vmatpush1.msra.mxu0 %v907
      %1404 = vmatprep.subr.mxu0 %v912
      %1405 = vmatpush1.msra.mxu0 %v911
      %1406 = vmatprep.subr.mxu0 %v916
      %1407 = vmatpush1.msra.mxu0 %v915
      %1408 = vmatprep.subr.mxu0 %v920
      %1409 = vmatpush1.msra.mxu0 %v919
      %1410 = vmatprep.subr.mxu0 %v924
      %1411 = vmatpush1.msra.mxu0 %v923
      %1412 = vmatprep.subr.mxu0 %v928
      %1413 = vmatpush1.msra.mxu0 %v927
      %1414 = vmatprep.subr.mxu0 %v932
      %1415 = vmatpush1.msra.mxu0 %v931
      %1416 = vmatprep.subr.mxu0 %v936
      %1417 = vmatpush1.msra.mxu0 %v935
      %1418 = vmatprep.subr.mxu0 %v940
      %1419 = vmatpush1.msra.mxu0 %v939
      %1420 = vmatprep.subr.mxu0 %v944
      %1421 = vmatpush1.msra.mxu0 %v943
      %1422 = vmatprep.subr.mxu0 %v948
      %1423 = vmatpush1.msra.mxu0 %v947
      %1424 = vmatprep.subr.mxu0 %v952
      %1425 = vmatpush1.msra.mxu0 %v951
      %1426 = vmatprep.subr.mxu0 %v956
      %1427 = vmatpush1.msra.mxu0 %v955
      %1428 = vmatprep.subr.mxu0 %v960
      %1429 = vmatpush1.msra.mxu0 %v959
      %1430 = vmatprep.subr.mxu0 %v964
      %1431 = vmatpush1.msra.mxu0 %v963
      %1432 = vmatprep.mubr.f32.mxu0 %v476
      %1433 = vmatmul.mubr.f32.gmra.mrb[0].mxu0 %v475
      %v1434 = vpop.f32.mrb[0].mxu0
      %v1435 = vadd.f32 %v1274, %v1434
      %v1436 = vpop.f32.mrb[0].mxu0
      %v1437 = vadd.f32 %v1276, %v1436
      %1438 = vmatprep.mubr.f32.mxu0 %v483
      %1439 = vmatmul.mubr.f32.gmra.mrb[0].mxu0 %v482
      %v1440 = vpop.f32.mrb[0].mxu0
      %v1441 = vadd.f32 %v1280, %v1440
      %v1442 = vpop.f32.mrb[0].mxu0
      %v1443 = vadd.f32 %v1282, %v1442
      %1444 = vmatprep.mubr.f32.mxu0 %v490
      %1445 = vmatmul.mubr.f32.gmra.mrb[0].mxu0 %v489
      %v1446 = vpop.f32.mrb[0].mxu0
      %v1447 = vadd.f32 %v1286, %v1446
      %v1448 = vpop.f32.mrb[0].mxu0
      %v1449 = vadd.f32 %v1288, %v1448
      %1450 = vmatprep.mubr.f32.mxu0 %v497
      %1451 = vmatmul.mubr.f32.gmra.mrb[0].mxu0 %v496
      %v1452 = vpop.f32.mrb[0].mxu0
      %v1453 = vadd.f32 %v1292, %v1452
      %v1454 = vpop.f32.mrb[0].mxu0
      %v1455 = vadd.f32 %v1294, %v1454
      %1456 = vmatprep.mubr.f32.mxu0 %v504
      %1457 = vmatmul.mubr.f32.gmra.mrb[0].mxu0 %v503
      %v1458 = vpop.f32.mrb[0].mxu0
      %v1459 = vadd.f32 %v1298, %v1458
      %v1460 = vpop.f32.mrb[0].mxu0
      %v1461 = vadd.f32 %v1300, %v1460
      %1462 = vmatprep.mubr.f32.mxu0 %v511
      %1463 = vmatmul.mubr.f32.gmra.mrb[0].mxu0 %v510
      %v1464 = vpop.f32.mrb[0].mxu0
      %v1465 = vadd.f32 %v1304, %v1464
      %v1466 = vpop.f32.mrb[0].mxu0
      %v1467 = vadd.f32 %v1306, %v1466
      %1468 = vmatprep.mubr.f32.mxu0 %v518
      %1469 = vmatmul.mubr.f32.gmra.mrb[0].mxu0 %v517
      %v1470 = vpop.f32.mrb[0].mxu0
      %v1471 = vadd.f32 %v1310, %v1470
      %v1472 = vpop.f32.mrb[0].mxu0
      %v1473 = vadd.f32 %v1312, %v1472
      %1474 = vmatprep.mubr.f32.mxu0 %v525
      %1475 = vmatmul.mubr.f32.gmra.mrb[0].mxu0 %v524
      %v1476 = vpop.f32.mrb[0].mxu0
      %v1477 = vadd.f32 %v1316, %v1476
      %v1478 = vpop.f32.mrb[0].mxu0
      %v1479 = vadd.f32 %v1318, %v1478
      %1480 = vmatprep.mubr.f32.mxu0 %v532
      %1481 = vmatmul.mubr.f32.gmra.mrb[0].mxu0 %v531
      %v1482 = vpop.f32.mrb[0].mxu0
      %v1483 = vadd.f32 %v1322, %v1482
      %v1484 = vpop.f32.mrb[0].mxu0
      %v1485 = vadd.f32 %v1324, %v1484
      %1486 = vmatprep.mubr.f32.mxu0 %v539
      %1487 = vmatmul.mubr.f32.gmra.mrb[0].mxu0 %v538
      %v1488 = vpop.f32.mrb[0].mxu0
      %v1489 = vadd.f32 %v1328, %v1488
      %v1490 = vpop.f32.mrb[0].mxu0
      %v1491 = vadd.f32 %v1330, %v1490
      %1492 = vmatprep.mubr.f32.mxu0 %v546
      %1493 = vmatmul.mubr.f32.gmra.mrb[0].mxu0 %v545
      %v1494 = vpop.f32.mrb[0].mxu0
      %v1495 = vadd.f32 %v1334, %v1494
      %v1496 = vpop.f32.mrb[0].mxu0
      %v1497 = vadd.f32 %v1336, %v1496
      %1498 = vmatprep.mubr.f32.mxu0 %v553
      %1499 = vmatmul.mubr.f32.gmra.mrb[0].mxu0 %v552
      %v1500 = vpop.f32.mrb[0].mxu0
      %v1501 = vadd.f32 %v1340, %v1500
      %v1502 = vpop.f32.mrb[0].mxu0
      %v1503 = vadd.f32 %v1342, %v1502
      %1504 = vmatprep.mubr.f32.mxu0 %v560
      %1505 = vmatmul.mubr.f32.gmra.mrb[0].mxu0 %v559
      %v1506 = vpop.f32.mrb[0].mxu0
      %v1507 = vadd.f32 %v1346, %v1506
      %v1508 = vpop.f32.mrb[0].mxu0
      %v1509 = vadd.f32 %v1348, %v1508
      %1510 = vmatprep.mubr.f32.mxu0 %v567
      %1511 = vmatmul.mubr.f32.gmra.mrb[0].mxu0 %v566
      %v1512 = vpop.f32.mrb[0].mxu0
      %v1513 = vadd.f32 %v1352, %v1512
      %v1514 = vpop.f32.mrb[0].mxu0
      %v1515 = vadd.f32 %v1354, %v1514
      %1516 = vmatprep.mubr.f32.mxu0 %v574
      %1517 = vmatmul.mubr.f32.gmra.mrb[0].mxu0 %v573
      %v1518 = vpop.f32.mrb[0].mxu0
      %v1519 = vadd.f32 %v1358, %v1518
      %v1520 = vpop.f32.mrb[0].mxu0
      %v1521 = vadd.f32 %v1360, %v1520
      %1522 = vmatprep.mubr.f32.mxu0 %v581
      %1523 = vmatmul.mubr.f32.gmra.mrb[0].mxu0 %v580
      %v1524 = vpop.f32.mrb[0].mxu0
      %v1525 = vadd.f32 %v1364, %v1524
      %v1526 = vpop.f32.mrb[0].mxu0
      %v1527 = vadd.f32 %v1366, %v1526
      %1528 = vdwg.mxu0
      %1529 = vmatprep.subr.mxu0 %v968
      %1530 = vmatpush1.msra.mxu0 %v967
      %1531 = vmatprep.subr.mxu0 %v972
      %1532 = vmatpush1.msra.mxu0 %v971
      %1533 = vmatprep.subr.mxu0 0.0
      %1534 = vmatpush1.msra.mxu0 0.0
      %1535 = vmatprep.subr.mxu0 0.0
      %1536 = vmatpush1.msra.mxu0 0.0
      %1537 = vmatprep.subr.mxu0 0.0
      %1538 = vmatpush1.msra.mxu0 0.0
      %1539 = vmatprep.subr.mxu0 0.0
      %1540 = vmatpush1.msra.mxu0 0.0
      %1541 = vmatprep.subr.mxu0 0.0
      %1542 = vmatpush1.msra.mxu0 0.0
      %1543 = vmatprep.subr.mxu0 0.0
      %1544 = vmatpush1.msra.mxu0 0.0
      %1545 = vmatprep.subr.mxu0 0.0
      %1546 = vmatpush1.msra.mxu0 0.0
      %1547 = vmatprep.subr.mxu0 0.0
      %1548 = vmatpush1.msra.mxu0 0.0
      %1549 = vmatprep.subr.mxu0 0.0
      %1550 = vmatpush1.msra.mxu0 0.0
      %1551 = vmatprep.subr.mxu0 0.0
      %1552 = vmatpush1.msra.mxu0 0.0
      %1553 = vmatprep.subr.mxu0 0.0
      %1554 = vmatpush1.msra.mxu0 0.0
      %1555 = vmatprep.subr.mxu0 0.0
      %1556 = vmatpush1.msra.mxu0 0.0
      %1557 = vmatprep.subr.mxu0 0.0
      %1558 = vmatpush1.msra.mxu0 0.0
      %1559 = vmatprep.subr.mxu0 0.0
      %1560 = vmatpush1.msra.mxu0 0.0
      %1561 = vmatprep.subr.mxu0 0.0
      %1562 = vmatpush1.msra.mxu0 0.0
      %1563 = vmatprep.subr.mxu0 0.0
      %1564 = vmatpush1.msra.mxu0 0.0
      %1565 = vmatprep.subr.mxu0 0.0
      %1566 = vmatpush1.msra.mxu0 0.0
      %1567 = vmatprep.subr.mxu0 0.0
      %1568 = vmatpush1.msra.mxu0 0.0
      %1569 = vmatprep.subr.mxu0 0.0
      %1570 = vmatpush1.msra.mxu0 0.0
      %1571 = vmatprep.subr.mxu0 0.0
      %1572 = vmatpush1.msra.mxu0 0.0
      %1573 = vmatprep.subr.mxu0 0.0
      %1574 = vmatpush1.msra.mxu0 0.0
      %1575 = vmatprep.subr.mxu0 0.0
      %1576 = vmatpush1.msra.mxu0 0.0
      %1577 = vmatprep.subr.mxu0 0.0
      %1578 = vmatpush1.msra.mxu0 0.0
      %1579 = vmatprep.subr.mxu0 0.0
      %1580 = vmatpush1.msra.mxu0 0.0
      %1581 = vmatprep.subr.mxu0 0.0
      %1582 = vmatpush1.msra.mxu0 0.0
      %1583 = vmatprep.subr.mxu0 0.0
      %1584 = vmatpush1.msra.mxu0 0.0
      %1585 = vmatprep.subr.mxu0 0.0
      %1586 = vmatpush1.msra.mxu0 0.0
      %1587 = vmatprep.subr.mxu0 0.0
      %1588 = vmatpush1.msra.mxu0 0.0
      %1589 = vmatprep.subr.mxu0 0.0
      %1590 = vmatpush1.msra.mxu0 0.0
      %1591 = vmatprep.subr.mxu0 0.0
      %1592 = vmatpush1.msra.mxu0 0.0
      %1593 = vmatprep.mubr.f32.mxu0 0.0
      %1594 = vmatmul.mubr.f32.gmra.mrb[0].mxu0 %v999
      %v1595 = vpop.f32.mrb[0].mxu0
      %v1596 = vadd.f32 %v1435, %v1595
      %v1597 = vpop.f32.mrb[0].mxu0
      %v1598 = vadd.f32 %v1437, %v1597
      %1599 = vmatprep.mubr.f32.mxu0 0.0
      %1600 = vmatmul.mubr.f32.gmra.mrb[0].mxu0 %v1002
      %v1601 = vpop.f32.mrb[0].mxu0
      %v1602 = vadd.f32 %v1441, %v1601
      %v1603 = vpop.f32.mrb[0].mxu0
      %v1604 = vadd.f32 %v1443, %v1603
      %1605 = vmatprep.mubr.f32.mxu0 0.0
      %1606 = vmatmul.mubr.f32.gmra.mrb[0].mxu0 %v1005
      %v1607 = vpop.f32.mrb[0].mxu0
      %v1608 = vadd.f32 %v1447, %v1607
      %v1609 = vpop.f32.mrb[0].mxu0
      %v1610 = vadd.f32 %v1449, %v1609
      %1611 = vmatprep.mubr.f32.mxu0 0.0
      %1612 = vmatmul.mubr.f32.gmra.mrb[0].mxu0 %v1008
      %v1613 = vpop.f32.mrb[0].mxu0
      %v1614 = vadd.f32 %v1453, %v1613
      %v1615 = vpop.f32.mrb[0].mxu0
      %v1616 = vadd.f32 %v1455, %v1615
      %1617 = vmatprep.mubr.f32.mxu0 0.0
      %1618 = vmatmul.mubr.f32.gmra.mrb[0].mxu0 %v1011
      %v1619 = vpop.f32.mrb[0].mxu0
      %v1620 = vadd.f32 %v1459, %v1619
      %v1621 = vpop.f32.mrb[0].mxu0
      %v1622 = vadd.f32 %v1461, %v1621
      %1623 = vmatprep.mubr.f32.mxu0 0.0
      %1624 = vmatmul.mubr.f32.gmra.mrb[0].mxu0 %v1014
      %v1625 = vpop.f32.mrb[0].mxu0
      %v1626 = vadd.f32 %v1465, %v1625
      %v1627 = vpop.f32.mrb[0].mxu0
      %v1628 = vadd.f32 %v1467, %v1627
      %1629 = vmatprep.mubr.f32.mxu0 0.0
      %1630 = vmatmul.mubr.f32.gmra.mrb[0].mxu0 %v1017
      %v1631 = vpop.f32.mrb[0].mxu0
      %v1632 = vadd.f32 %v1471, %v1631
      %v1633 = vpop.f32.mrb[0].mxu0
      %v1634 = vadd.f32 %v1473, %v1633
      %1635 = vmatprep.mubr.f32.mxu0 0.0
      %1636 = vmatmul.mubr.f32.gmra.mrb[0].mxu0 %v1020
      %v1637 = vpop.f32.mrb[0].mxu0
      %v1638 = vadd.f32 %v1477, %v1637
      %v1639 = vpop.f32.mrb[0].mxu0
      %v1640 = vadd.f32 %v1479, %v1639
      %1641 = vmatprep.mubr.f32.mxu0 0.0
      %1642 = vmatmul.mubr.f32.gmra.mrb[0].mxu0 %v1023
      %v1643 = vpop.f32.mrb[0].mxu0
      %v1644 = vadd.f32 %v1483, %v1643
      %v1645 = vpop.f32.mrb[0].mxu0
      %v1646 = vadd.f32 %v1485, %v1645
      %1647 = vmatprep.mubr.f32.mxu0 0.0
      %1648 = vmatmul.mubr.f32.gmra.mrb[0].mxu0 %v1026
      %v1649 = vpop.f32.mrb[0].mxu0
      %v1650 = vadd.f32 %v1489, %v1649
      %v1651 = vpop.f32.mrb[0].mxu0
      %v1652 = vadd.f32 %v1491, %v1651
      %1653 = vmatprep.mubr.f32.mxu0 0.0
      %1654 = vmatmul.mubr.f32.gmra.mrb[0].mxu0 %v1029
      %v1655 = vpop.f32.mrb[0].mxu0
      %v1656 = vadd.f32 %v1495, %v1655
      %v1657 = vpop.f32.mrb[0].mxu0
      %v1658 = vadd.f32 %v1497, %v1657
      %1659 = vmatprep.mubr.f32.mxu0 0.0
      %1660 = vmatmul.mubr.f32.gmra.mrb[0].mxu0 %v1032
      %v1661 = vpop.f32.mrb[0].mxu0
      %v1662 = vadd.f32 %v1501, %v1661
      %v1663 = vpop.f32.mrb[0].mxu0
      %v1664 = vadd.f32 %v1503, %v1663
      %1665 = vmatprep.mubr.f32.mxu0 0.0
      %1666 = vmatmul.mubr.f32.gmra.mrb[0].mxu0 %v1035
      %v1667 = vpop.f32.mrb[0].mxu0
      %v1668 = vadd.f32 %v1507, %v1667
      %v1669 = vpop.f32.mrb[0].mxu0
      %v1670 = vadd.f32 %v1509, %v1669
      %1671 = vmatprep.mubr.f32.mxu0 0.0
      %1672 = vmatmul.mubr.f32.gmra.mrb[0].mxu0 %v1038
      %v1673 = vpop.f32.mrb[0].mxu0
      %v1674 = vadd.f32 %v1513, %v1673
      %v1675 = vpop.f32.mrb[0].mxu0
      %v1676 = vadd.f32 %v1515, %v1675
      %1677 = vmatprep.mubr.f32.mxu0 0.0
      %1678 = vmatmul.mubr.f32.gmra.mrb[0].mxu0 %v1041
      %v1679 = vpop.f32.mrb[0].mxu0
      %v1680 = vadd.f32 %v1519, %v1679
      %v1681 = vpop.f32.mrb[0].mxu0
      %v1682 = vadd.f32 %v1521, %v1681
      %1683 = vmatprep.mubr.f32.mxu0 0.0
      %1684 = vmatmul.mubr.f32.gmra.mrb[0].mxu0 %v1044
      %v1685 = vpop.f32.mrb[0].mxu0
      %v1686 = vadd.f32 %v1525, %v1685
      %v1687 = vpop.f32.mrb[0].mxu0
      %v1688 = vadd.f32 %v1527, %v1687
      %1689 = vdwg.mxu0
      %1690 = vmatprep.subr.mxu0 %v586
      %1691 = vmatpush1.msra.mxu0 %v585
      %1692 = vmatprep.subr.mxu0 %v590
      %1693 = vmatpush1.msra.mxu0 %v589
      %1694 = vmatprep.subr.mxu0 %v594
      %1695 = vmatpush1.msra.mxu0 %v593
      %1696 = vmatprep.subr.mxu0 %v598
      %1697 = vmatpush1.msra.mxu0 %v597
      %1698 = vmatprep.subr.mxu0 %v602
      %1699 = vmatpush1.msra.mxu0 %v601
      %1700 = vmatprep.subr.mxu0 %v606
      %1701 = vmatpush1.msra.mxu0 %v605
      %1702 = vmatprep.subr.mxu0 %v610
      %1703 = vmatpush1.msra.mxu0 %v609
      %1704 = vmatprep.subr.mxu0 %v614
      %1705 = vmatpush1.msra.mxu0 %v613
      %1706 = vmatprep.subr.mxu0 %v618
      %1707 = vmatpush1.msra.mxu0 %v617
      %1708 = vmatprep.subr.mxu0 %v622
      %1709 = vmatpush1.msra.mxu0 %v621
      %1710 = vmatprep.subr.mxu0 %v626
      %1711 = vmatpush1.msra.mxu0 %v625
      %1712 = vmatprep.subr.mxu0 %v630
      %1713 = vmatpush1.msra.mxu0 %v629
      %1714 = vmatprep.subr.mxu0 %v634
      %1715 = vmatpush1.msra.mxu0 %v633
      %1716 = vmatprep.subr.mxu0 %v638
      %1717 = vmatpush1.msra.mxu0 %v637
      %1718 = vmatprep.subr.mxu0 %v642
      %1719 = vmatpush1.msra.mxu0 %v641
      %1720 = vmatprep.subr.mxu0 %v646
      %1721 = vmatpush1.msra.mxu0 %v645
      %1722 = vmatprep.subr.mxu0 %v650
      %1723 = vmatpush1.msra.mxu0 %v649
      %1724 = vmatprep.subr.mxu0 %v654
      %1725 = vmatpush1.msra.mxu0 %v653
      %1726 = vmatprep.subr.mxu0 %v658
      %1727 = vmatpush1.msra.mxu0 %v657
      %1728 = vmatprep.subr.mxu0 %v662
      %1729 = vmatpush1.msra.mxu0 %v661
      %1730 = vmatprep.subr.mxu0 %v666
      %1731 = vmatpush1.msra.mxu0 %v665
      %1732 = vmatprep.subr.mxu0 %v670
      %1733 = vmatpush1.msra.mxu0 %v669
      %1734 = vmatprep.subr.mxu0 %v674
      %1735 = vmatpush1.msra.mxu0 %v673
      %1736 = vmatprep.subr.mxu0 %v678
      %1737 = vmatpush1.msra.mxu0 %v677
      %1738 = vmatprep.subr.mxu0 %v682
      %1739 = vmatpush1.msra.mxu0 %v681
      %1740 = vmatprep.subr.mxu0 %v686
      %1741 = vmatpush1.msra.mxu0 %v685
      %1742 = vmatprep.subr.mxu0 %v690
      %1743 = vmatpush1.msra.mxu0 %v689
      %1744 = vmatprep.subr.mxu0 %v694
      %1745 = vmatpush1.msra.mxu0 %v693
      %1746 = vmatprep.subr.mxu0 %v698
      %1747 = vmatpush1.msra.mxu0 %v697
      %1748 = vmatprep.subr.mxu0 %v702
      %1749 = vmatpush1.msra.mxu0 %v701
      %1750 = vmatprep.subr.mxu0 %v706
      %1751 = vmatpush1.msra.mxu0 %v705
      %1752 = vmatprep.subr.mxu0 %v710
      %1753 = vmatpush1.msra.mxu0 %v709
      %1754 = vmatprep.mubr.f32.mxu0 %v472
      %1755 = vmatmul.mubr.f32.gmra.mrb[0].mxu0 %v471
      %v1756 = vpop.f32.mrb[0].mxu0
      %v1757 = vadd.f32 %v988, %v1756
      %v1758 = vpop.f32.mrb[0].mxu0
      %v1759 = vadd.f32 %v992, %v1758
      %1760 = vmatprep.mubr.f32.mxu0 %v479
      %1761 = vmatmul.mubr.f32.gmra.mrb[0].mxu0 %v478
      %v1762 = vpop.f32.mrb[0].mxu0
      %v1763 = vadd.f32 %v988, %v1762
      %v1764 = vpop.f32.mrb[0].mxu0
      %v1765 = vadd.f32 %v992, %v1764
      %1766 = vmatprep.mubr.f32.mxu0 %v486
      %1767 = vmatmul.mubr.f32.gmra.mrb[0].mxu0 %v485
      %v1768 = vpop.f32.mrb[0].mxu0
      %v1769 = vadd.f32 %v988, %v1768
      %v1770 = vpop.f32.mrb[0].mxu0
      %v1771 = vadd.f32 %v992, %v1770
      %1772 = vmatprep.mubr.f32.mxu0 %v493
      %1773 = vmatmul.mubr.f32.gmra.mrb[0].mxu0 %v492
      %v1774 = vpop.f32.mrb[0].mxu0
      %v1775 = vadd.f32 %v988, %v1774
      %v1776 = vpop.f32.mrb[0].mxu0
      %v1777 = vadd.f32 %v992, %v1776
      %1778 = vmatprep.mubr.f32.mxu0 %v500
      %1779 = vmatmul.mubr.f32.gmra.mrb[0].mxu0 %v499
      %v1780 = vpop.f32.mrb[0].mxu0
      %v1781 = vadd.f32 %v988, %v1780
      %v1782 = vpop.f32.mrb[0].mxu0
      %v1783 = vadd.f32 %v992, %v1782
      %1784 = vmatprep.mubr.f32.mxu0 %v507
      %1785 = vmatmul.mubr.f32.gmra.mrb[0].mxu0 %v506
      %v1786 = vpop.f32.mrb[0].mxu0
      %v1787 = vadd.f32 %v988, %v1786
      %v1788 = vpop.f32.mrb[0].mxu0
      %v1789 = vadd.f32 %v992, %v1788
      %1790 = vmatprep.mubr.f32.mxu0 %v514
      %1791 = vmatmul.mubr.f32.gmra.mrb[0].mxu0 %v513
      %v1792 = vpop.f32.mrb[0].mxu0
      %v1793 = vadd.f32 %v988, %v1792
      %v1794 = vpop.f32.mrb[0].mxu0
      %v1795 = vadd.f32 %v992, %v1794
      %1796 = vmatprep.mubr.f32.mxu0 %v521
      %1797 = vmatmul.mubr.f32.gmra.mrb[0].mxu0 %v520
      %v1798 = vpop.f32.mrb[0].mxu0
      %v1799 = vadd.f32 %v988, %v1798
      %v1800 = vpop.f32.mrb[0].mxu0
      %v1801 = vadd.f32 %v992, %v1800
      %1802 = vmatprep.mubr.f32.mxu0 %v528
      %1803 = vmatmul.mubr.f32.gmra.mrb[0].mxu0 %v527
      %v1804 = vpop.f32.mrb[0].mxu0
      %v1805 = vadd.f32 %v988, %v1804
      %v1806 = vpop.f32.mrb[0].mxu0
      %v1807 = vadd.f32 %v992, %v1806
      %1808 = vmatprep.mubr.f32.mxu0 %v535
      %1809 = vmatmul.mubr.f32.gmra.mrb[0].mxu0 %v534
      %v1810 = vpop.f32.mrb[0].mxu0
      %v1811 = vadd.f32 %v988, %v1810
      %v1812 = vpop.f32.mrb[0].mxu0
      %v1813 = vadd.f32 %v992, %v1812
      %1814 = vmatprep.mubr.f32.mxu0 %v542
      %1815 = vmatmul.mubr.f32.gmra.mrb[0].mxu0 %v541
      %v1816 = vpop.f32.mrb[0].mxu0
      %v1817 = vadd.f32 %v988, %v1816
      %v1818 = vpop.f32.mrb[0].mxu0
      %v1819 = vadd.f32 %v992, %v1818
      %1820 = vmatprep.mubr.f32.mxu0 %v549
      %1821 = vmatmul.mubr.f32.gmra.mrb[0].mxu0 %v548
      %v1822 = vpop.f32.mrb[0].mxu0
      %v1823 = vadd.f32 %v988, %v1822
      %v1824 = vpop.f32.mrb[0].mxu0
      %v1825 = vadd.f32 %v992, %v1824
      %1826 = vmatprep.mubr.f32.mxu0 %v556
      %1827 = vmatmul.mubr.f32.gmra.mrb[0].mxu0 %v555
      %v1828 = vpop.f32.mrb[0].mxu0
      %v1829 = vadd.f32 %v988, %v1828
      %v1830 = vpop.f32.mrb[0].mxu0
      %v1831 = vadd.f32 %v992, %v1830
      %1832 = vmatprep.mubr.f32.mxu0 %v563
      %1833 = vmatmul.mubr.f32.gmra.mrb[0].mxu0 %v562
      %v1834 = vpop.f32.mrb[0].mxu0
      %v1835 = vadd.f32 %v988, %v1834
      %v1836 = vpop.f32.mrb[0].mxu0
      %v1837 = vadd.f32 %v992, %v1836
      %1838 = vmatprep.mubr.f32.mxu0 %v570
      %1839 = vmatmul.mubr.f32.gmra.mrb[0].mxu0 %v569
      %v1840 = vpop.f32.mrb[0].mxu0
      %v1841 = vadd.f32 %v988, %v1840
      %v1842 = vpop.f32.mrb[0].mxu0
      %v1843 = vadd.f32 %v992, %v1842
      %1844 = vmatprep.mubr.f32.mxu0 %v577
      %1845 = vmatmul.mubr.f32.gmra.mrb[0].mxu0 %v576
      %v1846 = vpop.f32.mrb[0].mxu0
      %v1847 = vadd.f32 %v988, %v1846
      %v1848 = vpop.f32.mrb[0].mxu0
      %v1849 = vadd.f32 %v992, %v1848
      %1850 = vdwg.mxu0
      %1851 = vmatprep.subr.mxu0 %v714
      %1852 = vmatpush1.msra.mxu0 %v713
      %1853 = vmatprep.subr.mxu0 %v718
      %1854 = vmatpush1.msra.mxu0 %v717
      %1855 = vmatprep.subr.mxu0 %v722
      %1856 = vmatpush1.msra.mxu0 %v721
      %1857 = vmatprep.subr.mxu0 %v726
      %1858 = vmatpush1.msra.mxu0 %v725
      %1859 = vmatprep.subr.mxu0 %v730
      %1860 = vmatpush1.msra.mxu0 %v729
      %1861 = vmatprep.subr.mxu0 %v734
      %1862 = vmatpush1.msra.mxu0 %v733
      %1863 = vmatprep.subr.mxu0 %v738
      %1864 = vmatpush1.msra.mxu0 %v737
      %1865 = vmatprep.subr.mxu0 %v742
      %1866 = vmatpush1.msra.mxu0 %v741
      %1867 = vmatprep.subr.mxu0 %v746
      %1868 = vmatpush1.msra.mxu0 %v745
      %1869 = vmatprep.subr.mxu0 %v750
      %1870 = vmatpush1.msra.mxu0 %v749
      %1871 = vmatprep.subr.mxu0 %v754
      %1872 = vmatpush1.msra.mxu0 %v753
      %1873 = vmatprep.subr.mxu0 %v758
      %1874 = vmatpush1.msra.mxu0 %v757
      %1875 = vmatprep.subr.mxu0 %v762
      %1876 = vmatpush1.msra.mxu0 %v761
      %1877 = vmatprep.subr.mxu0 %v766
      %1878 = vmatpush1.msra.mxu0 %v765
      %1879 = vmatprep.subr.mxu0 %v770
      %1880 = vmatpush1.msra.mxu0 %v769
      %1881 = vmatprep.subr.mxu0 %v774
      %1882 = vmatpush1.msra.mxu0 %v773
      %1883 = vmatprep.subr.mxu0 %v778
      %1884 = vmatpush1.msra.mxu0 %v777
      %1885 = vmatprep.subr.mxu0 %v782
      %1886 = vmatpush1.msra.mxu0 %v781
      %1887 = vmatprep.subr.mxu0 %v786
      %1888 = vmatpush1.msra.mxu0 %v785
      %1889 = vmatprep.subr.mxu0 %v790
      %1890 = vmatpush1.msra.mxu0 %v789
      %1891 = vmatprep.subr.mxu0 %v794
      %1892 = vmatpush1.msra.mxu0 %v793
      %1893 = vmatprep.subr.mxu0 %v798
      %1894 = vmatpush1.msra.mxu0 %v797
      %1895 = vmatprep.subr.mxu0 %v802
      %1896 = vmatpush1.msra.mxu0 %v801
      %1897 = vmatprep.subr.mxu0 %v806
      %1898 = vmatpush1.msra.mxu0 %v805
      %1899 = vmatprep.subr.mxu0 %v810
      %1900 = vmatpush1.msra.mxu0 %v809
      %1901 = vmatprep.subr.mxu0 %v814
      %1902 = vmatpush1.msra.mxu0 %v813
      %1903 = vmatprep.subr.mxu0 %v818
      %1904 = vmatpush1.msra.mxu0 %v817
      %1905 = vmatprep.subr.mxu0 %v822
      %1906 = vmatpush1.msra.mxu0 %v821
      %1907 = vmatprep.subr.mxu0 %v826
      %1908 = vmatpush1.msra.mxu0 %v825
      %1909 = vmatprep.subr.mxu0 %v830
      %1910 = vmatpush1.msra.mxu0 %v829
      %1911 = vmatprep.subr.mxu0 %v834
      %1912 = vmatpush1.msra.mxu0 %v833
      %1913 = vmatprep.subr.mxu0 %v838
      %1914 = vmatpush1.msra.mxu0 %v837
      %1915 = vmatprep.mubr.f32.mxu0 %v474
      %1916 = vmatmul.mubr.f32.gmra.mrb[0].mxu0 %v473
      %v1917 = vpop.f32.mrb[0].mxu0
      %v1918 = vadd.f32 %v1757, %v1917
      %v1919 = vpop.f32.mrb[0].mxu0
      %v1920 = vadd.f32 %v1759, %v1919
      %1921 = vmatprep.mubr.f32.mxu0 %v481
      %1922 = vmatmul.mubr.f32.gmra.mrb[0].mxu0 %v480
      %v1923 = vpop.f32.mrb[0].mxu0
      %v1924 = vadd.f32 %v1763, %v1923
      %v1925 = vpop.f32.mrb[0].mxu0
      %v1926 = vadd.f32 %v1765, %v1925
      %1927 = vmatprep.mubr.f32.mxu0 %v488
      %1928 = vmatmul.mubr.f32.gmra.mrb[0].mxu0 %v487
      %v1929 = vpop.f32.mrb[0].mxu0
      %v1930 = vadd.f32 %v1769, %v1929
      %v1931 = vpop.f32.mrb[0].mxu0
      %v1932 = vadd.f32 %v1771, %v1931
      %1933 = vmatprep.mubr.f32.mxu0 %v495
      %1934 = vmatmul.mubr.f32.gmra.mrb[0].mxu0 %v494
      %v1935 = vpop.f32.mrb[0].mxu0
      %v1936 = vadd.f32 %v1775, %v1935
      %v1937 = vpop.f32.mrb[0].mxu0
      %v1938 = vadd.f32 %v1777, %v1937
      %1939 = vmatprep.mubr.f32.mxu0 %v502
      %1940 = vmatmul.mubr.f32.gmra.mrb[0].mxu0 %v501
      %v1941 = vpop.f32.mrb[0].mxu0
      %v1942 = vadd.f32 %v1781, %v1941
      %v1943 = vpop.f32.mrb[0].mxu0
      %v1944 = vadd.f32 %v1783, %v1943
      %1945 = vmatprep.mubr.f32.mxu0 %v509
      %1946 = vmatmul.mubr.f32.gmra.mrb[0].mxu0 %v508
      %v1947 = vpop.f32.mrb[0].mxu0
      %v1948 = vadd.f32 %v1787, %v1947
      %v1949 = vpop.f32.mrb[0].mxu0
      %v1950 = vadd.f32 %v1789, %v1949
      %1951 = vmatprep.mubr.f32.mxu0 %v516
      %1952 = vmatmul.mubr.f32.gmra.mrb[0].mxu0 %v515
      %v1953 = vpop.f32.mrb[0].mxu0
      %v1954 = vadd.f32 %v1793, %v1953
      %v1955 = vpop.f32.mrb[0].mxu0
      %v1956 = vadd.f32 %v1795, %v1955
      %1957 = vmatprep.mubr.f32.mxu0 %v523
      %1958 = vmatmul.mubr.f32.gmra.mrb[0].mxu0 %v522
      %v1959 = vpop.f32.mrb[0].mxu0
      %v1960 = vadd.f32 %v1799, %v1959
      %v1961 = vpop.f32.mrb[0].mxu0
      %v1962 = vadd.f32 %v1801, %v1961
      %1963 = vmatprep.mubr.f32.mxu0 %v530
      %1964 = vmatmul.mubr.f32.gmra.mrb[0].mxu0 %v529
      %v1965 = vpop.f32.mrb[0].mxu0
      %v1966 = vadd.f32 %v1805, %v1965
      %v1967 = vpop.f32.mrb[0].mxu0
      %v1968 = vadd.f32 %v1807, %v1967
      %1969 = vmatprep.mubr.f32.mxu0 %v537
      %1970 = vmatmul.mubr.f32.gmra.mrb[0].mxu0 %v536
      %v1971 = vpop.f32.mrb[0].mxu0
      %v1972 = vadd.f32 %v1811, %v1971
      %v1973 = vpop.f32.mrb[0].mxu0
      %v1974 = vadd.f32 %v1813, %v1973
      %1975 = vmatprep.mubr.f32.mxu0 %v544
      %1976 = vmatmul.mubr.f32.gmra.mrb[0].mxu0 %v543
      %v1977 = vpop.f32.mrb[0].mxu0
      %v1978 = vadd.f32 %v1817, %v1977
      %v1979 = vpop.f32.mrb[0].mxu0
      %v1980 = vadd.f32 %v1819, %v1979
      %1981 = vmatprep.mubr.f32.mxu0 %v551
      %1982 = vmatmul.mubr.f32.gmra.mrb[0].mxu0 %v550
      %v1983 = vpop.f32.mrb[0].mxu0
      %v1984 = vadd.f32 %v1823, %v1983
      %v1985 = vpop.f32.mrb[0].mxu0
      %v1986 = vadd.f32 %v1825, %v1985
      %1987 = vmatprep.mubr.f32.mxu0 %v558
      %1988 = vmatmul.mubr.f32.gmra.mrb[0].mxu0 %v557
      %v1989 = vpop.f32.mrb[0].mxu0
      %v1990 = vadd.f32 %v1829, %v1989
      %v1991 = vpop.f32.mrb[0].mxu0
      %v1992 = vadd.f32 %v1831, %v1991
      %1993 = vmatprep.mubr.f32.mxu0 %v565
      %1994 = vmatmul.mubr.f32.gmra.mrb[0].mxu0 %v564
      %v1995 = vpop.f32.mrb[0].mxu0
      %v1996 = vadd.f32 %v1835, %v1995
      %v1997 = vpop.f32.mrb[0].mxu0
      %v1998 = vadd.f32 %v1837, %v1997
      %1999 = vmatprep.mubr.f32.mxu0 %v572
      %2000 = vmatmul.mubr.f32.gmra.mrb[0].mxu0 %v571
      %v2001 = vpop.f32.mrb[0].mxu0
      %v2002 = vadd.f32 %v1841, %v2001
      %v2003 = vpop.f32.mrb[0].mxu0
      %v2004 = vadd.f32 %v1843, %v2003
      %2005 = vmatprep.mubr.f32.mxu0 %v579
      %2006 = vmatmul.mubr.f32.gmra.mrb[0].mxu0 %v578
      %v2007 = vpop.f32.mrb[0].mxu0
      %v2008 = vadd.f32 %v1847, %v2007
      %v2009 = vpop.f32.mrb[0].mxu0
      %v2010 = vadd.f32 %v1849, %v2009
      %2011 = vdwg.mxu0
      %2012 = vmatprep.subr.mxu0 %v842
      %2013 = vmatpush1.msra.mxu0 %v841
      %2014 = vmatprep.subr.mxu0 %v846
      %2015 = vmatpush1.msra.mxu0 %v845
      %2016 = vmatprep.subr.mxu0 %v850
      %2017 = vmatpush1.msra.mxu0 %v849
      %2018 = vmatprep.subr.mxu0 %v854
      %2019 = vmatpush1.msra.mxu0 %v853
      %2020 = vmatprep.subr.mxu0 %v858
      %2021 = vmatpush1.msra.mxu0 %v857
      %2022 = vmatprep.subr.mxu0 %v862
      %2023 = vmatpush1.msra.mxu0 %v861
      %2024 = vmatprep.subr.mxu0 %v866
      %2025 = vmatpush1.msra.mxu0 %v865
      %2026 = vmatprep.subr.mxu0 %v870
      %2027 = vmatpush1.msra.mxu0 %v869
      %2028 = vmatprep.subr.mxu0 %v874
      %2029 = vmatpush1.msra.mxu0 %v873
      %2030 = vmatprep.subr.mxu0 %v878
      %2031 = vmatpush1.msra.mxu0 %v877
      %2032 = vmatprep.subr.mxu0 %v882
      %2033 = vmatpush1.msra.mxu0 %v881
      %2034 = vmatprep.subr.mxu0 %v886
      %2035 = vmatpush1.msra.mxu0 %v885
      %2036 = vmatprep.subr.mxu0 %v890
      %2037 = vmatpush1.msra.mxu0 %v889
      %2038 = vmatprep.subr.mxu0 %v894
      %2039 = vmatpush1.msra.mxu0 %v893
      %2040 = vmatprep.subr.mxu0 %v898
      %2041 = vmatpush1.msra.mxu0 %v897
      %2042 = vmatprep.subr.mxu0 %v902
      %2043 = vmatpush1.msra.mxu0 %v901
      %2044 = vmatprep.subr.mxu0 %v906
      %2045 = vmatpush1.msra.mxu0 %v905
      %2046 = vmatprep.subr.mxu0 %v910
      %2047 = vmatpush1.msra.mxu0 %v909
      %2048 = vmatprep.subr.mxu0 %v914
      %2049 = vmatpush1.msra.mxu0 %v913
      %2050 = vmatprep.subr.mxu0 %v918
      %2051 = vmatpush1.msra.mxu0 %v917
      %2052 = vmatprep.subr.mxu0 %v922
      %2053 = vmatpush1.msra.mxu0 %v921
      %2054 = vmatprep.subr.mxu0 %v926
      %2055 = vmatpush1.msra.mxu0 %v925
      %2056 = vmatprep.subr.mxu0 %v930
      %2057 = vmatpush1.msra.mxu0 %v929
      %2058 = vmatprep.subr.mxu0 %v934
      %2059 = vmatpush1.msra.mxu0 %v933
      %2060 = vmatprep.subr.mxu0 %v938
      %2061 = vmatpush1.msra.mxu0 %v937
      %2062 = vmatprep.subr.mxu0 %v942
      %2063 = vmatpush1.msra.mxu0 %v941
      %2064 = vmatprep.subr.mxu0 %v946
      %2065 = vmatpush1.msra.mxu0 %v945
      %2066 = vmatprep.subr.mxu0 %v950
      %2067 = vmatpush1.msra.mxu0 %v949
      %2068 = vmatprep.subr.mxu0 %v954
      %2069 = vmatpush1.msra.mxu0 %v953
      %2070 = vmatprep.subr.mxu0 %v958
      %2071 = vmatpush1.msra.mxu0 %v957
      %2072 = vmatprep.subr.mxu0 %v962
      %2073 = vmatpush1.msra.mxu0 %v961
      %2074 = vmatprep.subr.mxu0 %v966
      %2075 = vmatpush1.msra.mxu0 %v965
      %2076 = vmatprep.mubr.f32.mxu0 %v476
      %2077 = vmatmul.mubr.f32.gmra.mrb[0].mxu0 %v475
      %v2078 = vpop.f32.mrb[0].mxu0
      %v2079 = vadd.f32 %v1918, %v2078
      %v2080 = vpop.f32.mrb[0].mxu0
      %v2081 = vadd.f32 %v1920, %v2080
      %2082 = vmatprep.mubr.f32.mxu0 %v483
      %2083 = vmatmul.mubr.f32.gmra.mrb[0].mxu0 %v482
      %v2084 = vpop.f32.mrb[0].mxu0
      %v2085 = vadd.f32 %v1924, %v2084
      %v2086 = vpop.f32.mrb[0].mxu0
      %v2087 = vadd.f32 %v1926, %v2086
      %2088 = vmatprep.mubr.f32.mxu0 %v490
      %2089 = vmatmul.mubr.f32.gmra.mrb[0].mxu0 %v489
      %v2090 = vpop.f32.mrb[0].mxu0
      %v2091 = vadd.f32 %v1930, %v2090
      %v2092 = vpop.f32.mrb[0].mxu0
      %v2093 = vadd.f32 %v1932, %v2092
      %2094 = vmatprep.mubr.f32.mxu0 %v497
      %2095 = vmatmul.mubr.f32.gmra.mrb[0].mxu0 %v496
      %v2096 = vpop.f32.mrb[0].mxu0
      %v2097 = vadd.f32 %v1936, %v2096
      %v2098 = vpop.f32.mrb[0].mxu0
      %v2099 = vadd.f32 %v1938, %v2098
      %2100 = vmatprep.mubr.f32.mxu0 %v504
      %2101 = vmatmul.mubr.f32.gmra.mrb[0].mxu0 %v503
      %v2102 = vpop.f32.mrb[0].mxu0
      %v2103 = vadd.f32 %v1942, %v2102
      %v2104 = vpop.f32.mrb[0].mxu0
      %v2105 = vadd.f32 %v1944, %v2104
      %2106 = vmatprep.mubr.f32.mxu0 %v511
      %2107 = vmatmul.mubr.f32.gmra.mrb[0].mxu0 %v510
      %v2108 = vpop.f32.mrb[0].mxu0
      %v2109 = vadd.f32 %v1948, %v2108
      %v2110 = vpop.f32.mrb[0].mxu0
      %v2111 = vadd.f32 %v1950, %v2110
      %2112 = vmatprep.mubr.f32.mxu0 %v518
      %2113 = vmatmul.mubr.f32.gmra.mrb[0].mxu0 %v517
      %v2114 = vpop.f32.mrb[0].mxu0
      %v2115 = vadd.f32 %v1954, %v2114
      %v2116 = vpop.f32.mrb[0].mxu0
      %v2117 = vadd.f32 %v1956, %v2116
      %2118 = vmatprep.mubr.f32.mxu0 %v525
      %2119 = vmatmul.mubr.f32.gmra.mrb[0].mxu0 %v524
      %v2120 = vpop.f32.mrb[0].mxu0
      %v2121 = vadd.f32 %v1960, %v2120
      %v2122 = vpop.f32.mrb[0].mxu0
      %v2123 = vadd.f32 %v1962, %v2122
      %2124 = vmatprep.mubr.f32.mxu0 %v532
      %2125 = vmatmul.mubr.f32.gmra.mrb[0].mxu0 %v531
      %v2126 = vpop.f32.mrb[0].mxu0
      %v2127 = vadd.f32 %v1966, %v2126
      %v2128 = vpop.f32.mrb[0].mxu0
      %v2129 = vadd.f32 %v1968, %v2128
      %2130 = vmatprep.mubr.f32.mxu0 %v539
      %2131 = vmatmul.mubr.f32.gmra.mrb[0].mxu0 %v538
      %v2132 = vpop.f32.mrb[0].mxu0
      %v2133 = vadd.f32 %v1972, %v2132
      %v2134 = vpop.f32.mrb[0].mxu0
      %v2135 = vadd.f32 %v1974, %v2134
      %2136 = vmatprep.mubr.f32.mxu0 %v546
      %2137 = vmatmul.mubr.f32.gmra.mrb[0].mxu0 %v545
      %v2138 = vpop.f32.mrb[0].mxu0
      %v2139 = vadd.f32 %v1978, %v2138
      %v2140 = vpop.f32.mrb[0].mxu0
      %v2141 = vadd.f32 %v1980, %v2140
      %2142 = vmatprep.mubr.f32.mxu0 %v553
      %2143 = vmatmul.mubr.f32.gmra.mrb[0].mxu0 %v552
      %v2144 = vpop.f32.mrb[0].mxu0
      %v2145 = vadd.f32 %v1984, %v2144
      %v2146 = vpop.f32.mrb[0].mxu0
      %v2147 = vadd.f32 %v1986, %v2146
      %2148 = vmatprep.mubr.f32.mxu0 %v560
      %2149 = vmatmul.mubr.f32.gmra.mrb[0].mxu0 %v559
      %v2150 = vpop.f32.mrb[0].mxu0
      %v2151 = vadd.f32 %v1990, %v2150
      %v2152 = vpop.f32.mrb[0].mxu0
      %v2153 = vadd.f32 %v1992, %v2152
      %2154 = vmatprep.mubr.f32.mxu0 %v567
      %2155 = vmatmul.mubr.f32.gmra.mrb[0].mxu0 %v566
      %v2156 = vpop.f32.mrb[0].mxu0
      %v2157 = vadd.f32 %v1996, %v2156
      %v2158 = vpop.f32.mrb[0].mxu0
      %v2159 = vadd.f32 %v1998, %v2158
      %2160 = vmatprep.mubr.f32.mxu0 %v574
      %2161 = vmatmul.mubr.f32.gmra.mrb[0].mxu0 %v573
      %v2162 = vpop.f32.mrb[0].mxu0
      %v2163 = vadd.f32 %v2002, %v2162
      %v2164 = vpop.f32.mrb[0].mxu0
      %v2165 = vadd.f32 %v2004, %v2164
      %2166 = vmatprep.mubr.f32.mxu0 %v581
      %2167 = vmatmul.mubr.f32.gmra.mrb[0].mxu0 %v580
      %v2168 = vpop.f32.mrb[0].mxu0
      %v2169 = vadd.f32 %v2008, %v2168
      %v2170 = vpop.f32.mrb[0].mxu0
      %v2171 = vadd.f32 %v2010, %v2170
      %2172 = vdwg.mxu0
      %2173 = vmatprep.subr.mxu0 %v970
      %2174 = vmatpush1.msra.mxu0 %v969
      %2175 = vmatprep.subr.mxu0 %v974
      %2176 = vmatpush1.msra.mxu0 %v973
      %2177 = vmatprep.subr.mxu0 0.0
      %2178 = vmatpush1.msra.mxu0 0.0
      %2179 = vmatprep.subr.mxu0 0.0
      %2180 = vmatpush1.msra.mxu0 0.0
      %2181 = vmatprep.subr.mxu0 0.0
      %2182 = vmatpush1.msra.mxu0 0.0
      %2183 = vmatprep.subr.mxu0 0.0
      %2184 = vmatpush1.msra.mxu0 0.0
      %2185 = vmatprep.subr.mxu0 0.0
      %2186 = vmatpush1.msra.mxu0 0.0
      %2187 = vmatprep.subr.mxu0 0.0
      %2188 = vmatpush1.msra.mxu0 0.0
      %2189 = vmatprep.subr.mxu0 0.0
      %2190 = vmatpush1.msra.mxu0 0.0
      %2191 = vmatprep.subr.mxu0 0.0
      %2192 = vmatpush1.msra.mxu0 0.0
      %2193 = vmatprep.subr.mxu0 0.0
      %2194 = vmatpush1.msra.mxu0 0.0
      %2195 = vmatprep.subr.mxu0 0.0
      %2196 = vmatpush1.msra.mxu0 0.0
      %2197 = vmatprep.subr.mxu0 0.0
      %2198 = vmatpush1.msra.mxu0 0.0
      %2199 = vmatprep.subr.mxu0 0.0
      %2200 = vmatpush1.msra.mxu0 0.0
      %2201 = vmatprep.subr.mxu0 0.0
      %2202 = vmatpush1.msra.mxu0 0.0
      %2203 = vmatprep.subr.mxu0 0.0
      %2204 = vmatpush1.msra.mxu0 0.0
      %2205 = vmatprep.subr.mxu0 0.0
      %2206 = vmatpush1.msra.mxu0 0.0
      %2207 = vmatprep.subr.mxu0 0.0
      %2208 = vmatpush1.msra.mxu0 0.0
      %2209 = vmatprep.subr.mxu0 0.0
      %2210 = vmatpush1.msra.mxu0 0.0
      %2211 = vmatprep.subr.mxu0 0.0
      %2212 = vmatpush1.msra.mxu0 0.0
      %2213 = vmatprep.subr.mxu0 0.0
      %2214 = vmatpush1.msra.mxu0 0.0
      %2215 = vmatprep.subr.mxu0 0.0
      %2216 = vmatpush1.msra.mxu0 0.0
      %2217 = vmatprep.subr.mxu0 0.0
      %2218 = vmatpush1.msra.mxu0 0.0
      %2219 = vmatprep.subr.mxu0 0.0
      %2220 = vmatpush1.msra.mxu0 0.0
      %2221 = vmatprep.subr.mxu0 0.0
      %2222 = vmatpush1.msra.mxu0 0.0
      %2223 = vmatprep.subr.mxu0 0.0
      %2224 = vmatpush1.msra.mxu0 0.0
      %2225 = vmatprep.subr.mxu0 0.0
      %2226 = vmatpush1.msra.mxu0 0.0
      %2227 = vmatprep.subr.mxu0 0.0
      %2228 = vmatpush1.msra.mxu0 0.0
      %2229 = vmatprep.subr.mxu0 0.0
      %2230 = vmatpush1.msra.mxu0 0.0
      %2231 = vmatprep.subr.mxu0 0.0
      %2232 = vmatpush1.msra.mxu0 0.0
      %2233 = vmatprep.subr.mxu0 0.0
      %2234 = vmatpush1.msra.mxu0 0.0
      %2235 = vmatprep.subr.mxu0 0.0
      %2236 = vmatpush1.msra.mxu0 0.0
      %2237 = vmatprep.mubr.f32.mxu0 0.0
      %2238 = vmatmul.mubr.f32.gmra.mrb[0].mxu0 %v999
      %v2239 = vpop.f32.mrb[0].mxu0
      %v2240 = vadd.f32 %v2079, %v2239
      %v2241 = vpop.f32.mrb[0].mxu0
      %v2242 = vadd.f32 %v2081, %v2241
      %2243 = vmatprep.mubr.f32.mxu0 0.0
      %2244 = vmatmul.mubr.f32.gmra.mrb[0].mxu0 %v1002
      %v2245 = vpop.f32.mrb[0].mxu0
      %v2246 = vadd.f32 %v2085, %v2245
      %v2247 = vpop.f32.mrb[0].mxu0
      %v2248 = vadd.f32 %v2087, %v2247
      %2249 = vmatprep.mubr.f32.mxu0 0.0
      %2250 = vmatmul.mubr.f32.gmra.mrb[0].mxu0 %v1005
      %v2251 = vpop.f32.mrb[0].mxu0
      %v2252 = vadd.f32 %v2091, %v2251
      %v2253 = vpop.f32.mrb[0].mxu0
      %v2254 = vadd.f32 %v2093, %v2253
      %2255 = vmatprep.mubr.f32.mxu0 0.0
      %2256 = vmatmul.mubr.f32.gmra.mrb[0].mxu0 %v1008
      %v2257 = vpop.f32.mrb[0].mxu0
      %v2258 = vadd.f32 %v2097, %v2257
      %v2259 = vpop.f32.mrb[0].mxu0
      %v2260 = vadd.f32 %v2099, %v2259
      %2261 = vmatprep.mubr.f32.mxu0 0.0
      %2262 = vmatmul.mubr.f32.gmra.mrb[0].mxu0 %v1011
      %v2263 = vpop.f32.mrb[0].mxu0
      %v2264 = vadd.f32 %v2103, %v2263
      %v2265 = vpop.f32.mrb[0].mxu0
      %v2266 = vadd.f32 %v2105, %v2265
      %2267 = vmatprep.mubr.f32.mxu0 0.0
      %2268 = vmatmul.mubr.f32.gmra.mrb[0].mxu0 %v1014
      %v2269 = vpop.f32.mrb[0].mxu0
      %v2270 = vadd.f32 %v2109, %v2269
      %v2271 = vpop.f32.mrb[0].mxu0
      %v2272 = vadd.f32 %v2111, %v2271
      %2273 = vmatprep.mubr.f32.mxu0 0.0
      %2274 = vmatmul.mubr.f32.gmra.mrb[0].mxu0 %v1017
      %v2275 = vpop.f32.mrb[0].mxu0
      %v2276 = vadd.f32 %v2115, %v2275
      %v2277 = vpop.f32.mrb[0].mxu0
      %v2278 = vadd.f32 %v2117, %v2277
      %2279 = vmatprep.mubr.f32.mxu0 0.0
      %2280 = vmatmul.mubr.f32.gmra.mrb[0].mxu0 %v1020
      %v2281 = vpop.f32.mrb[0].mxu0
      %v2282 = vadd.f32 %v2121, %v2281
      %v2283 = vpop.f32.mrb[0].mxu0
      %v2284 = vadd.f32 %v2123, %v2283
      %2285 = vmatprep.mubr.f32.mxu0 0.0
      %2286 = vmatmul.mubr.f32.gmra.mrb[0].mxu0 %v1023
      %v2287 = vpop.f32.mrb[0].mxu0
      %v2288 = vadd.f32 %v2127, %v2287
      %v2289 = vpop.f32.mrb[0].mxu0
      %v2290 = vadd.f32 %v2129, %v2289
      %2291 = vmatprep.mubr.f32.mxu0 0.0
      %2292 = vmatmul.mubr.f32.gmra.mrb[0].mxu0 %v1026
      %v2293 = vpop.f32.mrb[0].mxu0
      %v2294 = vadd.f32 %v2133, %v2293
      %v2295 = vpop.f32.mrb[0].mxu0
      %v2296 = vadd.f32 %v2135, %v2295
      %2297 = vmatprep.mubr.f32.mxu0 0.0
      %2298 = vmatmul.mubr.f32.gmra.mrb[0].mxu0 %v1029
      %v2299 = vpop.f32.mrb[0].mxu0
      %v2300 = vadd.f32 %v2139, %v2299
      %v2301 = vpop.f32.mrb[0].mxu0
      %v2302 = vadd.f32 %v2141, %v2301
      %2303 = vmatprep.mubr.f32.mxu0 0.0
      %2304 = vmatmul.mubr.f32.gmra.mrb[0].mxu0 %v1032
      %v2305 = vpop.f32.mrb[0].mxu0
      %v2306 = vadd.f32 %v2145, %v2305
      %v2307 = vpop.f32.mrb[0].mxu0
      %v2308 = vadd.f32 %v2147, %v2307
      %2309 = vmatprep.mubr.f32.mxu0 0.0
      %2310 = vmatmul.mubr.f32.gmra.mrb[0].mxu0 %v1035
      %v2311 = vpop.f32.mrb[0].mxu0
      %v2312 = vadd.f32 %v2151, %v2311
      %v2313 = vpop.f32.mrb[0].mxu0
      %v2314 = vadd.f32 %v2153, %v2313
      %2315 = vmatprep.mubr.f32.mxu0 0.0
      %2316 = vmatmul.mubr.f32.gmra.mrb[0].mxu0 %v1038
      %v2317 = vpop.f32.mrb[0].mxu0
      %v2318 = vadd.f32 %v2157, %v2317
      %v2319 = vpop.f32.mrb[0].mxu0
      %v2320 = vadd.f32 %v2159, %v2319
      %2321 = vmatprep.mubr.f32.mxu0 0.0
      %2322 = vmatmul.mubr.f32.gmra.mrb[0].mxu0 %v1041
      %v2323 = vpop.f32.mrb[0].mxu0
      %v2324 = vadd.f32 %v2163, %v2323
      %v2325 = vpop.f32.mrb[0].mxu0
      %v2326 = vadd.f32 %v2165, %v2325
      %2327 = vmatprep.mubr.f32.mxu0 0.0
      %2328 = vmatmul.mubr.f32.gmra.mrb[0].mxu0 %v1044
      %v2329 = vpop.f32.mrb[0].mxu0
      %v2330 = vadd.f32 %v2169, %v2329
      %v2331 = vpop.f32.mrb[0].mxu0
      %v2332 = vadd.f32 %v2171, %v2331
      %2333 = vdwg.mxu0
      %v2334 = vmax.f32 %v1596, 0.0
      %v2335 = vmax.f32 %v1598, 0.0
      %v2336 = vmax.f32 %v2240, 0.0
      %v2337 = vmax.f32 %v2242, 0.0
      %v2338 = vmax.f32 %v1602, 0.0
      %v2339 = vmax.f32 %v1604, 0.0
      %v2340 = vmax.f32 %v2246, 0.0
      %v2341 = vmax.f32 %v2248, 0.0
      %v2342 = vmax.f32 %v1608, 0.0
      %v2343 = vmax.f32 %v1610, 0.0
      %v2344 = vmax.f32 %v2252, 0.0
      %v2345 = vmax.f32 %v2254, 0.0
      %v2346 = vmax.f32 %v1614, 0.0
      %v2347 = vmax.f32 %v1616, 0.0
      %v2348 = vmax.f32 %v2258, 0.0
      %v2349 = vmax.f32 %v2260, 0.0
      %v2350 = vmax.f32 %v1620, 0.0
      %v2351 = vmax.f32 %v1622, 0.0
      %v2352 = vmax.f32 %v2264, 0.0
      %v2353 = vmax.f32 %v2266, 0.0
      %v2354 = vmax.f32 %v1626, 0.0
      %v2355 = vmax.f32 %v1628, 0.0
      %v2356 = vmax.f32 %v2270, 0.0
      %v2357 = vmax.f32 %v2272, 0.0
      %v2358 = vmax.f32 %v1632, 0.0
      %v2359 = vmax.f32 %v1634, 0.0
      %v2360 = vmax.f32 %v2276, 0.0
      %v2361 = vmax.f32 %v2278, 0.0
      %v2362 = vmax.f32 %v1638, 0.0
      %v2363 = vmax.f32 %v1640, 0.0
      %v2364 = vmax.f32 %v2282, 0.0
      %v2365 = vmax.f32 %v2284, 0.0
      %v2366 = vmax.f32 %v1644, 0.0
      %v2367 = vmax.f32 %v1646, 0.0
      %v2368 = vmax.f32 %v2288, 0.0
      %v2369 = vmax.f32 %v2290, 0.0
      %v2370 = vmax.f32 %v1650, 0.0
      %v2371 = vmax.f32 %v1652, 0.0
      %v2372 = vmax.f32 %v2294, 0.0
      %v2373 = vmax.f32 %v2296, 0.0
      %v2374 = vmax.f32 %v1656, 0.0
      %v2375 = vmax.f32 %v1658, 0.0
      %v2376 = vmax.f32 %v2300, 0.0
      %v2377 = vmax.f32 %v2302, 0.0
      %v2378 = vmax.f32 %v1662, 0.0
      %v2379 = vmax.f32 %v1664, 0.0
      %v2380 = vmax.f32 %v2306, 0.0
      %v2381 = vmax.f32 %v2308, 0.0
      %v2382 = vmax.f32 %v1668, 0.0
      %v2383 = vmax.f32 %v1670, 0.0
      %v2384 = vmax.f32 %v2312, 0.0
      %v2385 = vmax.f32 %v2314, 0.0
      %v2386 = vmax.f32 %v1674, 0.0
      %v2387 = vmax.f32 %v1676, 0.0
      %v2388 = vmax.f32 %v2318, 0.0
      %v2389 = vmax.f32 %v2320, 0.0
      %v2390 = vmax.f32 %v1680, 0.0
      %v2391 = vmax.f32 %v1682, 0.0
      %v2392 = vmax.f32 %v2324, 0.0
      %v2393 = vmax.f32 %v2326, 0.0
      %v2394 = vmax.f32 %v1686, 0.0
      %v2395 = vmax.f32 %v1688, 0.0
      %v2396 = vmax.f32 %v2330, 0.0
      %v2397 = vmax.f32 %v2332, 0.0
      %v2398 = vld [vmem:[%s4] sm:$0xff]
      %v2399 = vld [vmem:[%s4 + $0x8] sm:$0xff]
      %v2400 = vld [vmem:[%s4 + $0x10] sm:$0xff]
      %v2401 = vld [vmem:[%s4 + $0x18] sm:$0xff]
      %v2402 = vld [vmem:[%s4 + $0x20] sm:$0xff]
      %v2403 = vld [vmem:[%s4 + $0x28] sm:$0xff]
      %v2404 = vld [vmem:[%s4 + $0x30] sm:$0xff]
      %v2405 = vld [vmem:[%s4 + $0x38] sm:$0xff]
      %v2406 = vld [vmem:[%s4 + $0x40] sm:$0xff]
      %v2407 = vld [vmem:[%s4 + $0x48] sm:$0xff]
      %v2408 = vld [vmem:[%s4 + $0x50] sm:$0xff]
      %v2409 = vld [vmem:[%s4 + $0x58] sm:$0xff]
      %v2410 = vld [vmem:[%s4 + $0x60] sm:$0xff]
      %v2411 = vld [vmem:[%s4 + $0x68] sm:$0xff]
      %v2412 = vld [vmem:[%s4 + $0x70] sm:$0xff]
      %v2413 = vld [vmem:[%s4 + $0x78] sm:$0xff]
      %v2414 = vld [vmem:[%s4 + $0x80] sm:$0xff]
      %v2415 = vld [vmem:[%s4 + $0x88] sm:$0xff]
      %v2416 = vld [vmem:[%s4 + $0x90] sm:$0xff]
      %v2417 = vld [vmem:[%s4 + $0x98] sm:$0xff]
      %v2418 = vld [vmem:[%s4 + $0xa0] sm:$0xff]
      %v2419 = vld [vmem:[%s4 + $0xa8] sm:$0xff]
      %v2420 = vld [vmem:[%s4 + $0xb0] sm:$0xff]
      %v2421 = vld [vmem:[%s4 + $0xb8] sm:$0xff]
      %v2422 = vld [vmem:[%s4 + $0xc0] sm:$0xff]
      %v2423 = vld [vmem:[%s4 + $0xc8] sm:$0xff]
      %v2424 = vld [vmem:[%s4 + $0xd0] sm:$0xff]
      %v2425 = vld [vmem:[%s4 + $0xd8] sm:$0xff]
      %v2426 = vld [vmem:[%s4 + $0xe0] sm:$0xff]
      %v2427 = vld [vmem:[%s4 + $0xe8] sm:$0xff]
      %v2428 = vld [vmem:[%s4 + $0xf0] sm:$0xff]
      %v2429 = vld [vmem:[%s4 + $0xf8] sm:$0xff]
      %v2430 = vld [vmem:[%s4 + $0x100] sm:$0xff]
      %v2431 = vld [vmem:[%s4 + $0x108] sm:$0xff]
      %v2432 = vld [vmem:[%s4 + $0x110] sm:$0xff]
      %v2433 = vld [vmem:[%s4 + $0x118] sm:$0xff]
      %v2434 = vld [vmem:[%s4 + $0x120] sm:$0xff]
      %v2435 = vld [vmem:[%s4 + $0x128] sm:$0xff]
      %v2436 = vld [vmem:[%s4 + $0x130] sm:$0xff]
      %v2437 = vld [vmem:[%s4 + $0x138] sm:$0xff]
      %v2438 = vld [vmem:[%s4 + $0x140] sm:$0xff]
      %v2439 = vld [vmem:[%s4 + $0x148] sm:$0xff]
      %v2440 = vld [vmem:[%s4 + $0x150] sm:$0xff]
      %v2441 = vld [vmem:[%s4 + $0x158] sm:$0xff]
      %v2442 = vld [vmem:[%s4 + $0x160] sm:$0xff]
      %v2443 = vld [vmem:[%s4 + $0x168] sm:$0xff]
      %v2444 = vld [vmem:[%s4 + $0x170] sm:$0xff]
      %v2445 = vld [vmem:[%s4 + $0x178] sm:$0xff]
      %v2446 = vld [vmem:[%s4 + $0x180] sm:$0xff]
      %v2447 = vld [vmem:[%s4 + $0x188] sm:$0xff]
      %v2448 = vld [vmem:[%s4 + $0x190] sm:$0xff]
      %v2449 = vld [vmem:[%s4 + $0x198] sm:$0xff]
      %v2450 = vld [vmem:[%s4 + $0x1a0] sm:$0xff]
      %v2451 = vld [vmem:[%s4 + $0x1a8] sm:$0xff]
      %v2452 = vld [vmem:[%s4 + $0x1b0] sm:$0xff]
      %v2453 = vld [vmem:[%s4 + $0x1b8] sm:$0xff]
      %v2454 = vld [vmem:[%s4 + $0x1c0] sm:$0xff]
      %v2455 = vld [vmem:[%s4 + $0x1c8] sm:$0xff]
      %v2456 = vld [vmem:[%s4 + $0x1d0] sm:$0xff]
      %v2457 = vld [vmem:[%s4 + $0x1d8] sm:$0xff]
      %v2458 = vld [vmem:[%s4 + $0x1e0] sm:$0xff]
      %v2459 = vld [vmem:[%s4 + $0x1e8] sm:$0xff]
      %v2460 = vld [vmem:[%s4 + $0x1f0] sm:$0xff]
      %v2461 = vld [vmem:[%s4 + $0x1f8] sm:$0xff]
      %v2462 = vld [vmem:[%s4 + $0x200] sm:$0xff]
      %v2463 = vld [vmem:[%s4 + $0x208] sm:$0xff]
      %v2464 = vld [vmem:[%s4 + $0x210] sm:$0xff]
      %v2465 = vld [vmem:[%s4 + $0x218] sm:$0xff]
      %v2466 = vld [vmem:[%s4 + $0x220] sm:$0xff]
      %v2467 = vld [vmem:[%s4 + $0x228] sm:$0xff]
      %v2468 = vld [vmem:[%s4 + $0x230] sm:$0xff]
      %v2469 = vld [vmem:[%s4 + $0x238] sm:$0xff]
      %v2470 = vld [vmem:[%s4 + $0x240] sm:$0xff]
      %v2471 = vld [vmem:[%s4 + $0x248] sm:$0xff]
      %v2472 = vld [vmem:[%s4 + $0x250] sm:$0xff]
      %v2473 = vld [vmem:[%s4 + $0x258] sm:$0xff]
      %v2474 = vld [vmem:[%s4 + $0x260] sm:$0xff]
      %v2475 = vld [vmem:[%s4 + $0x268] sm:$0xff]
      %v2476 = vld [vmem:[%s4 + $0x270] sm:$0xff]
      %v2477 = vld [vmem:[%s4 + $0x278] sm:$0xff]
      %v2478 = vld [vmem:[%s4 + $0x280] sm:$0xff]
      %v2479 = vld [vmem:[%s4 + $0x288] sm:$0xff]
      %v2480 = vld [vmem:[%s4 + $0x290] sm:$0xff]
      %v2481 = vld [vmem:[%s4 + $0x298] sm:$0xff]
      %v2482 = vld [vmem:[%s4 + $0x2a0] sm:$0xff]
      %v2483 = vld [vmem:[%s4 + $0x2a8] sm:$0xff]
      %v2484 = vld [vmem:[%s4 + $0x2b0] sm:$0xff]
      %v2485 = vld [vmem:[%s4 + $0x2b8] sm:$0xff]
      %v2486 = vld [vmem:[%s4 + $0x2c0] sm:$0xff]
      %v2487 = vld [vmem:[%s4 + $0x2c8] sm:$0xff]
      %v2488 = vld [vmem:[%s4 + $0x2d0] sm:$0xff]
      %v2489 = vld [vmem:[%s4 + $0x2d8] sm:$0xff]
      %v2490 = vld [vmem:[%s4 + $0x2e0] sm:$0xff]
      %v2491 = vld [vmem:[%s4 + $0x2e8] sm:$0xff]
      %v2492 = vld [vmem:[%s4 + $0x2f0] sm:$0xff]
      %v2493 = vld [vmem:[%s4 + $0x2f8] sm:$0xff]
      %v2494 = vld [vmem:[%s4 + $0x300] sm:$0xff]
      %v2495 = vld [vmem:[%s4 + $0x308] sm:$0xff]
      %v2496 = vld [vmem:[%s4 + $0x310] sm:$0xff]
      %v2497 = vld [vmem:[%s4 + $0x318] sm:$0xff]
      %v2498 = vld [vmem:[%s4 + $0x320] sm:$0xff]
      %v2499 = vld [vmem:[%s4 + $0x328] sm:$0xff]
      %v2500 = vld [vmem:[%s4 + $0x330] sm:$0xff]
      %v2501 = vld [vmem:[%s4 + $0x338] sm:$0xff]
      %v2502 = vld [vmem:[%s4 + $0x340] sm:$0xff]
      %v2503 = vld [vmem:[%s4 + $0x348] sm:$0xff]
      %v2504 = vld [vmem:[%s4 + $0x350] sm:$0xff]
      %v2505 = vld [vmem:[%s4 + $0x358] sm:$0xff]
      %v2506 = vld [vmem:[%s4 + $0x360] sm:$0xff]
      %v2507 = vld [vmem:[%s4 + $0x368] sm:$0xff]
      %v2508 = vld [vmem:[%s4 + $0x370] sm:$0xff]
      %v2509 = vld [vmem:[%s4 + $0x378] sm:$0xff]
      %v2510 = vld [vmem:[%s4 + $0x380] sm:$0xff]
      %v2511 = vld [vmem:[%s4 + $0x388] sm:$0xff]
      %v2512 = vld [vmem:[%s4 + $0x390] sm:$0xff]
      %v2513 = vld [vmem:[%s4 + $0x398] sm:$0xff]
      %v2514 = vld [vmem:[%s4 + $0x3a0] sm:$0xff]
      %v2515 = vld [vmem:[%s4 + $0x3a8] sm:$0xff]
      %v2516 = vld [vmem:[%s4 + $0x3b0] sm:$0xff]
      %v2517 = vld [vmem:[%s4 + $0x3b8] sm:$0xff]
      %v2518 = vld [vmem:[%s4 + $0x3c0] sm:$0xff]
      %v2519 = vld [vmem:[%s4 + $0x3c8] sm:$0xff]
      %v2520 = vld [vmem:[%s4 + $0x3d0] sm:$0xff]
      %v2521 = vld [vmem:[%s4 + $0x3d8] sm:$0xff]
      %v2522 = vld [vmem:[%s4 + $0x3e0] sm:$0xff]
      %v2523 = vld [vmem:[%s4 + $0x3e8] sm:$0xff]
      %v2524 = vld [vmem:[%s4 + $0x3f0] sm:$0xff]
      %v2525 = vld [vmem:[%s4 + $0x3f8] sm:$0xff]
      %v2526 = vld [vmem:[%s5] sm:$0x3]
      %v2528 = vlaneseq
      %v2529 = vshrl.u32 %v2528, 7
      %v2530 = vsub.s32 0, %v2529
      %v2531 = vrot.slane %v2526, %v2530
      %v2532 = vlaneseq
      %v2533 = vshrl.u32 %v2532, 7
      %v2534 = vsub.s32 1, %v2533
      %v2535 = vrot.slane %v2526, %v2534
      %2538 = vmatprep.subr.mxu0 %v2399
      %2539 = vmatpush1.msra.mxu0 %v2398
      %2540 = vmatprep.subr.mxu0 %v2401
      %2541 = vmatpush1.msra.mxu0 %v2400
      %2542 = vmatprep.subr.mxu0 %v2403
      %2543 = vmatpush1.msra.mxu0 %v2402
      %2544 = vmatprep.subr.mxu0 %v2405
      %2545 = vmatpush1.msra.mxu0 %v2404
      %2546 = vmatprep.subr.mxu0 %v2407
      %2547 = vmatpush1.msra.mxu0 %v2406
      %2548 = vmatprep.subr.mxu0 %v2409
      %2549 = vmatpush1.msra.mxu0 %v2408
      %2550 = vmatprep.subr.mxu0 %v2411
      %2551 = vmatpush1.msra.mxu0 %v2410
      %2552 = vmatprep.subr.mxu0 %v2413
      %2553 = vmatpush1.msra.mxu0 %v2412
      %2554 = vmatprep.subr.mxu0 %v2415
      %2555 = vmatpush1.msra.mxu0 %v2414
      %2556 = vmatprep.subr.mxu0 %v2417
      %2557 = vmatpush1.msra.mxu0 %v2416
      %2558 = vmatprep.subr.mxu0 %v2419
      %2559 = vmatpush1.msra.mxu0 %v2418
      %2560 = vmatprep.subr.mxu0 %v2421
      %2561 = vmatpush1.msra.mxu0 %v2420
      %2562 = vmatprep.subr.mxu0 %v2423
      %2563 = vmatpush1.msra.mxu0 %v2422
      %2564 = vmatprep.subr.mxu0 %v2425
      %2565 = vmatpush1.msra.mxu0 %v2424
      %2566 = vmatprep.subr.mxu0 %v2427
      %2567 = vmatpush1.msra.mxu0 %v2426
      %2568 = vmatprep.subr.mxu0 %v2429
      %2569 = vmatpush1.msra.mxu0 %v2428
      %2570 = vmatprep.subr.mxu0 %v2431
      %2571 = vmatpush1.msra.mxu0 %v2430
      %2572 = vmatprep.subr.mxu0 %v2433
      %2573 = vmatpush1.msra.mxu0 %v2432
      %2574 = vmatprep.subr.mxu0 %v2435
      %2575 = vmatpush1.msra.mxu0 %v2434
      %2576 = vmatprep.subr.mxu0 %v2437
      %2577 = vmatpush1.msra.mxu0 %v2436
      %2578 = vmatprep.subr.mxu0 %v2439
      %2579 = vmatpush1.msra.mxu0 %v2438
      %2580 = vmatprep.subr.mxu0 %v2441
      %2581 = vmatpush1.msra.mxu0 %v2440
      %2582 = vmatprep.subr.mxu0 %v2443
      %2583 = vmatpush1.msra.mxu0 %v2442
      %2584 = vmatprep.subr.mxu0 %v2445
      %2585 = vmatpush1.msra.mxu0 %v2444
      %2586 = vmatprep.subr.mxu0 %v2447
      %2587 = vmatpush1.msra.mxu0 %v2446
      %2588 = vmatprep.subr.mxu0 %v2449
      %2589 = vmatpush1.msra.mxu0 %v2448
      %2590 = vmatprep.subr.mxu0 %v2451
      %2591 = vmatpush1.msra.mxu0 %v2450
      %2592 = vmatprep.subr.mxu0 %v2453
      %2593 = vmatpush1.msra.mxu0 %v2452
      %2594 = vmatprep.subr.mxu0 %v2455
      %2595 = vmatpush1.msra.mxu0 %v2454
      %2596 = vmatprep.subr.mxu0 %v2457
      %2597 = vmatpush1.msra.mxu0 %v2456
      %2598 = vmatprep.subr.mxu0 %v2459
      %2599 = vmatpush1.msra.mxu0 %v2458
      %2600 = vmatprep.subr.mxu0 %v2461
      %2601 = vmatpush1.msra.mxu0 %v2460
      %2602 = vmatprep.mubr.f32.mxu0 %v2335
      %2603 = vmatmul.mubr.f32.gmra.mrb[0].mxu0 %v2334
      %v2604 = vpop.f32.mrb[0].mxu0
      %v2605 = vadd.f32 %v2531, %v2604
      %v2606 = vpop.f32.mrb[0].mxu0
      %v2607 = vadd.f32 %v2535, %v2606
      %2608 = vmatprep.mubr.f32.mxu0 %v2339
      %2609 = vmatmul.mubr.f32.gmra.mrb[0].mxu0 %v2338
      %v2610 = vpop.f32.mrb[0].mxu0
      %v2611 = vadd.f32 %v2531, %v2610
      %v2612 = vpop.f32.mrb[0].mxu0
      %v2613 = vadd.f32 %v2535, %v2612
      %2614 = vmatprep.mubr.f32.mxu0 %v2343
      %2615 = vmatmul.mubr.f32.gmra.mrb[0].mxu0 %v2342
      %v2616 = vpop.f32.mrb[0].mxu0
      %v2617 = vadd.f32 %v2531, %v2616
      %v2618 = vpop.f32.mrb[0].mxu0
      %v2619 = vadd.f32 %v2535, %v2618
      %2620 = vmatprep.mubr.f32.mxu0 %v2347
      %2621 = vmatmul.mubr.f32.gmra.mrb[0].mxu0 %v2346
      %v2622 = vpop.f32.mrb[0].mxu0
      %v2623 = vadd.f32 %v2531, %v2622
      %v2624 = vpop.f32.mrb[0].mxu0
      %v2625 = vadd.f32 %v2535, %v2624
      %2626 = vmatprep.mubr.f32.mxu0 %v2351
      %2627 = vmatmul.mubr.f32.gmra.mrb[0].mxu0 %v2350
      %v2628 = vpop.f32.mrb[0].mxu0
      %v2629 = vadd.f32 %v2531, %v2628
      %v2630 = vpop.f32.mrb[0].mxu0
      %v2631 = vadd.f32 %v2535, %v2630
      %2632 = vmatprep.mubr.f32.mxu0 %v2355
      %2633 = vmatmul.mubr.f32.gmra.mrb[0].mxu0 %v2354
      %v2634 = vpop.f32.mrb[0].mxu0
      %v2635 = vadd.f32 %v2531, %v2634
      %v2636 = vpop.f32.mrb[0].mxu0
      %v2637 = vadd.f32 %v2535, %v2636
      %2638 = vmatprep.mubr.f32.mxu0 %v2359
      %2639 = vmatmul.mubr.f32.gmra.mrb[0].mxu0 %v2358
      %v2640 = vpop.f32.mrb[0].mxu0
      %v2641 = vadd.f32 %v2531, %v2640
      %v2642 = vpop.f32.mrb[0].mxu0
      %v2643 = vadd.f32 %v2535, %v2642
      %2644 = vmatprep.mubr.f32.mxu0 %v2363
      %2645 = vmatmul.mubr.f32.gmra.mrb[0].mxu0 %v2362
      %v2646 = vpop.f32.mrb[0].mxu0
      %v2647 = vadd.f32 %v2531, %v2646
      %v2648 = vpop.f32.mrb[0].mxu0
      %v2649 = vadd.f32 %v2535, %v2648
      %2650 = vmatprep.mubr.f32.mxu0 %v2367
      %2651 = vmatmul.mubr.f32.gmra.mrb[0].mxu0 %v2366
      %v2652 = vpop.f32.mrb[0].mxu0
      %v2653 = vadd.f32 %v2531, %v2652
      %v2654 = vpop.f32.mrb[0].mxu0
      %v2655 = vadd.f32 %v2535, %v2654
      %2656 = vmatprep.mubr.f32.mxu0 %v2371
      %2657 = vmatmul.mubr.f32.gmra.mrb[0].mxu0 %v2370
      %v2658 = vpop.f32.mrb[0].mxu0
      %v2659 = vadd.f32 %v2531, %v2658
      %v2660 = vpop.f32.mrb[0].mxu0
      %v2661 = vadd.f32 %v2535, %v2660
      %2662 = vmatprep.mubr.f32.mxu0 %v2375
      %2663 = vmatmul.mubr.f32.gmra.mrb[0].mxu0 %v2374
      %v2664 = vpop.f32.mrb[0].mxu0
      %v2665 = vadd.f32 %v2531, %v2664
      %v2666 = vpop.f32.mrb[0].mxu0
      %v2667 = vadd.f32 %v2535, %v2666
      %2668 = vmatprep.mubr.f32.mxu0 %v2379
      %2669 = vmatmul.mubr.f32.gmra.mrb[0].mxu0 %v2378
      %v2670 = vpop.f32.mrb[0].mxu0
      %v2671 = vadd.f32 %v2531, %v2670
      %v2672 = vpop.f32.mrb[0].mxu0
      %v2673 = vadd.f32 %v2535, %v2672
      %2674 = vmatprep.mubr.f32.mxu0 %v2383
      %2675 = vmatmul.mubr.f32.gmra.mrb[0].mxu0 %v2382
      %v2676 = vpop.f32.mrb[0].mxu0
      %v2677 = vadd.f32 %v2531, %v2676
      %v2678 = vpop.f32.mrb[0].mxu0
      %v2679 = vadd.f32 %v2535, %v2678
      %2680 = vmatprep.mubr.f32.mxu0 %v2387
      %2681 = vmatmul.mubr.f32.gmra.mrb[0].mxu0 %v2386
      %v2682 = vpop.f32.mrb[0].mxu0
      %v2683 = vadd.f32 %v2531, %v2682
      %v2684 = vpop.f32.mrb[0].mxu0
      %v2685 = vadd.f32 %v2535, %v2684
      %2686 = vmatprep.mubr.f32.mxu0 %v2391
      %2687 = vmatmul.mubr.f32.gmra.mrb[0].mxu0 %v2390
      %v2688 = vpop.f32.mrb[0].mxu0
      %v2689 = vadd.f32 %v2531, %v2688
      %v2690 = vpop.f32.mrb[0].mxu0
      %v2691 = vadd.f32 %v2535, %v2690
      %2692 = vmatprep.mubr.f32.mxu0 %v2395
      %2693 = vmatmul.mubr.f32.gmra.mrb[0].mxu0 %v2394
      %v2694 = vpop.f32.mrb[0].mxu0
      %v2695 = vadd.f32 %v2531, %v2694
      %v2696 = vpop.f32.mrb[0].mxu0
      %v2697 = vadd.f32 %v2535, %v2696
      %2698 = vdwg.mxu0
      %2699 = vmatprep.subr.mxu0 %v2463
      %2700 = vmatpush1.msra.mxu0 %v2462
      %2701 = vmatprep.subr.mxu0 %v2465
      %2702 = vmatpush1.msra.mxu0 %v2464
      %2703 = vmatprep.subr.mxu0 %v2467
      %2704 = vmatpush1.msra.mxu0 %v2466
      %2705 = vmatprep.subr.mxu0 %v2469
      %2706 = vmatpush1.msra.mxu0 %v2468
      %2707 = vmatprep.subr.mxu0 %v2471
      %2708 = vmatpush1.msra.mxu0 %v2470
      %2709 = vmatprep.subr.mxu0 %v2473
      %2710 = vmatpush1.msra.mxu0 %v2472
      %2711 = vmatprep.subr.mxu0 %v2475
      %2712 = vmatpush1.msra.mxu0 %v2474
      %2713 = vmatprep.subr.mxu0 %v2477
      %2714 = vmatpush1.msra.mxu0 %v2476
      %2715 = vmatprep.subr.mxu0 %v2479
      %2716 = vmatpush1.msra.mxu0 %v2478
      %2717 = vmatprep.subr.mxu0 %v2481
      %2718 = vmatpush1.msra.mxu0 %v2480
      %2719 = vmatprep.subr.mxu0 %v2483
      %2720 = vmatpush1.msra.mxu0 %v2482
      %2721 = vmatprep.subr.mxu0 %v2485
      %2722 = vmatpush1.msra.mxu0 %v2484
      %2723 = vmatprep.subr.mxu0 %v2487
      %2724 = vmatpush1.msra.mxu0 %v2486
      %2725 = vmatprep.subr.mxu0 %v2489
      %2726 = vmatpush1.msra.mxu0 %v2488
      %2727 = vmatprep.subr.mxu0 %v2491
      %2728 = vmatpush1.msra.mxu0 %v2490
      %2729 = vmatprep.subr.mxu0 %v2493
      %2730 = vmatpush1.msra.mxu0 %v2492
      %2731 = vmatprep.subr.mxu0 %v2495
      %2732 = vmatpush1.msra.mxu0 %v2494
      %2733 = vmatprep.subr.mxu0 %v2497
      %2734 = vmatpush1.msra.mxu0 %v2496
      %2735 = vmatprep.subr.mxu0 %v2499
      %2736 = vmatpush1.msra.mxu0 %v2498
      %2737 = vmatprep.subr.mxu0 %v2501
      %2738 = vmatpush1.msra.mxu0 %v2500
      %2739 = vmatprep.subr.mxu0 %v2503
      %2740 = vmatpush1.msra.mxu0 %v2502
      %2741 = vmatprep.subr.mxu0 %v2505
      %2742 = vmatpush1.msra.mxu0 %v2504
      %2743 = vmatprep.subr.mxu0 %v2507
      %2744 = vmatpush1.msra.mxu0 %v2506
      %2745 = vmatprep.subr.mxu0 %v2509
      %2746 = vmatpush1.msra.mxu0 %v2508
      %2747 = vmatprep.subr.mxu0 %v2511
      %2748 = vmatpush1.msra.mxu0 %v2510
      %2749 = vmatprep.subr.mxu0 %v2513
      %2750 = vmatpush1.msra.mxu0 %v2512
      %2751 = vmatprep.subr.mxu0 %v2515
      %2752 = vmatpush1.msra.mxu0 %v2514
      %2753 = vmatprep.subr.mxu0 %v2517
      %2754 = vmatpush1.msra.mxu0 %v2516
      %2755 = vmatprep.subr.mxu0 %v2519
      %2756 = vmatpush1.msra.mxu0 %v2518
      %2757 = vmatprep.subr.mxu0 %v2521
      %2758 = vmatpush1.msra.mxu0 %v2520
      %2759 = vmatprep.subr.mxu0 %v2523
      %2760 = vmatpush1.msra.mxu0 %v2522
      %2761 = vmatprep.subr.mxu0 %v2525
      %2762 = vmatpush1.msra.mxu0 %v2524
      %2763 = vmatprep.mubr.f32.mxu0 %v2337
      %2764 = vmatmul.mubr.f32.gmra.mrb[0].mxu0 %v2336
      %v2765 = vpop.f32.mrb[0].mxu0
      %v2766 = vadd.f32 %v2605, %v2765
      %v2767 = vpop.f32.mrb[0].mxu0
      %v2768 = vadd.f32 %v2607, %v2767
      %2769 = vmatprep.mubr.f32.mxu0 %v2341
      %2770 = vmatmul.mubr.f32.gmra.mrb[0].mxu0 %v2340
      %v2771 = vpop.f32.mrb[0].mxu0
      %v2772 = vadd.f32 %v2611, %v2771
      %v2773 = vpop.f32.mrb[0].mxu0
      %v2774 = vadd.f32 %v2613, %v2773
      %2775 = vmatprep.mubr.f32.mxu0 %v2345
      %2776 = vmatmul.mubr.f32.gmra.mrb[0].mxu0 %v2344
      %v2777 = vpop.f32.mrb[0].mxu0
      %v2778 = vadd.f32 %v2617, %v2777
      %v2779 = vpop.f32.mrb[0].mxu0
      %v2780 = vadd.f32 %v2619, %v2779
      %2781 = vmatprep.mubr.f32.mxu0 %v2349
      %2782 = vmatmul.mubr.f32.gmra.mrb[0].mxu0 %v2348
      %v2783 = vpop.f32.mrb[0].mxu0
      %v2784 = vadd.f32 %v2623, %v2783
      %v2785 = vpop.f32.mrb[0].mxu0
      %v2786 = vadd.f32 %v2625, %v2785
      %2787 = vmatprep.mubr.f32.mxu0 %v2353
      %2788 = vmatmul.mubr.f32.gmra.mrb[0].mxu0 %v2352
      %v2789 = vpop.f32.mrb[0].mxu0
      %v2790 = vadd.f32 %v2629, %v2789
      %v2791 = vpop.f32.mrb[0].mxu0
      %v2792 = vadd.f32 %v2631, %v2791
      %2793 = vmatprep.mubr.f32.mxu0 %v2357
      %2794 = vmatmul.mubr.f32.gmra.mrb[0].mxu0 %v2356
      %v2795 = vpop.f32.mrb[0].mxu0
      %v2796 = vadd.f32 %v2635, %v2795
      %v2797 = vpop.f32.mrb[0].mxu0
      %v2798 = vadd.f32 %v2637, %v2797
      %2799 = vmatprep.mubr.f32.mxu0 %v2361
      %2800 = vmatmul.mubr.f32.gmra.mrb[0].mxu0 %v2360
      %v2801 = vpop.f32.mrb[0].mxu0
      %v2802 = vadd.f32 %v2641, %v2801
      %v2803 = vpop.f32.mrb[0].mxu0
      %v2804 = vadd.f32 %v2643, %v2803
      %2805 = vmatprep.mubr.f32.mxu0 %v2365
      %2806 = vmatmul.mubr.f32.gmra.mrb[0].mxu0 %v2364
      %v2807 = vpop.f32.mrb[0].mxu0
      %v2808 = vadd.f32 %v2647, %v2807
      %v2809 = vpop.f32.mrb[0].mxu0
      %v2810 = vadd.f32 %v2649, %v2809
      %2811 = vmatprep.mubr.f32.mxu0 %v2369
      %2812 = vmatmul.mubr.f32.gmra.mrb[0].mxu0 %v2368
      %v2813 = vpop.f32.mrb[0].mxu0
      %v2814 = vadd.f32 %v2653, %v2813
      %v2815 = vpop.f32.mrb[0].mxu0
      %v2816 = vadd.f32 %v2655, %v2815
      %2817 = vmatprep.mubr.f32.mxu0 %v2373
      %2818 = vmatmul.mubr.f32.gmra.mrb[0].mxu0 %v2372
      %v2819 = vpop.f32.mrb[0].mxu0
      %v2820 = vadd.f32 %v2659, %v2819
      %v2821 = vpop.f32.mrb[0].mxu0
      %v2822 = vadd.f32 %v2661, %v2821
      %2823 = vmatprep.mubr.f32.mxu0 %v2377
      %2824 = vmatmul.mubr.f32.gmra.mrb[0].mxu0 %v2376
      %v2825 = vpop.f32.mrb[0].mxu0
      %v2826 = vadd.f32 %v2665, %v2825
      %v2827 = vpop.f32.mrb[0].mxu0
      %v2828 = vadd.f32 %v2667, %v2827
      %2829 = vmatprep.mubr.f32.mxu0 %v2381
      %2830 = vmatmul.mubr.f32.gmra.mrb[0].mxu0 %v2380
      %v2831 = vpop.f32.mrb[0].mxu0
      %v2832 = vadd.f32 %v2671, %v2831
      %v2833 = vpop.f32.mrb[0].mxu0
      %v2834 = vadd.f32 %v2673, %v2833
      %2835 = vmatprep.mubr.f32.mxu0 %v2385
      %2836 = vmatmul.mubr.f32.gmra.mrb[0].mxu0 %v2384
      %v2837 = vpop.f32.mrb[0].mxu0
      %v2838 = vadd.f32 %v2677, %v2837
      %v2839 = vpop.f32.mrb[0].mxu0
      %v2840 = vadd.f32 %v2679, %v2839
      %2841 = vmatprep.mubr.f32.mxu0 %v2389
      %2842 = vmatmul.mubr.f32.gmra.mrb[0].mxu0 %v2388
      %v2843 = vpop.f32.mrb[0].mxu0
      %v2844 = vadd.f32 %v2683, %v2843
      %v2845 = vpop.f32.mrb[0].mxu0
      %v2846 = vadd.f32 %v2685, %v2845
      %2847 = vmatprep.mubr.f32.mxu0 %v2393
      %2848 = vmatmul.mubr.f32.gmra.mrb[0].mxu0 %v2392
      %v2849 = vpop.f32.mrb[0].mxu0
      %v2850 = vadd.f32 %v2689, %v2849
      %v2851 = vpop.f32.mrb[0].mxu0
      %v2852 = vadd.f32 %v2691, %v2851
      %2853 = vmatprep.mubr.f32.mxu0 %v2397
      %2854 = vmatmul.mubr.f32.gmra.mrb[0].mxu0 %v2396
      %v2855 = vpop.f32.mrb[0].mxu0
      %v2856 = vadd.f32 %v2695, %v2855
      %v2857 = vpop.f32.mrb[0].mxu0
      %v2858 = vadd.f32 %v2697, %v2857
      %2859 = vdwg.mxu0
      %v2860 = vld [vmem:[%s450] sm:$0xff]
      %v2861 = vld [vmem:[%s450 + $0x8] sm:$0xff]
      %v2862 = vld [vmem:[%s450 + $0x10] sm:$0xff]
      %v2863 = vld [vmem:[%s450 + $0x18] sm:$0xff]
      %v2864 = vld [vmem:[%s450 + $0x20] sm:$0xff]
      %v2865 = vld [vmem:[%s450 + $0x28] sm:$0xff]
      %v2866 = vld [vmem:[%s450 + $0x30] sm:$0xff]
      %v2867 = vld [vmem:[%s450 + $0x38] sm:$0xff]
      %v2868 = vld [vmem:[%s450 + $0x40] sm:$0xff]
      %v2869 = vld [vmem:[%s450 + $0x48] sm:$0xff]
      %v2870 = vld [vmem:[%s450 + $0x50] sm:$0xff]
      %v2871 = vld [vmem:[%s450 + $0x58] sm:$0xff]
      %v2872 = vld [vmem:[%s450 + $0x60] sm:$0xff]
      %v2873 = vld [vmem:[%s450 + $0x68] sm:$0xff]
      %v2874 = vld [vmem:[%s450 + $0x70] sm:$0xff]
      %v2875 = vld [vmem:[%s450 + $0x78] sm:$0xff]
      %v2876 = vmul.f32 %v2768, 0.5
      %v2877 = vmul.f32 %v2774, 0.5
      %v2878 = vmul.f32 %v2780, 0.5
      %v2879 = vmul.f32 %v2786, 0.5
      %v2880 = vmul.f32 %v2792, 0.5
      %v2881 = vmul.f32 %v2798, 0.5
      %v2882 = vmul.f32 %v2804, 0.5
      %v2883 = vmul.f32 %v2810, 0.5
      %v2884 = vmul.f32 %v2816, 0.5
      %v2885 = vmul.f32 %v2822, 0.5
      %v2886 = vmul.f32 %v2828, 0.5
      %v2887 = vmul.f32 %v2834, 0.5
      %v2888 = vmul.f32 %v2840, 0.5
      %v2889 = vmul.f32 %v2846, 0.5
      %v2890 = vmul.f32 %v2852, 0.5
      %v2891 = vmul.f32 %v2858, 0.5
      %v2892 = vmul.f32 %v2876, 1.442695
      %v2893 = vpow.pop %v2892
      %v2894 = vmul.f32 %v2877, 1.442695
      %v2895 = vpow.pop %v2894
      %v2896 = vmul.f32 %v2878, 1.442695
      %v2897 = vpow.pop %v2896
      %v2898 = vmul.f32 %v2879, 1.442695
      %v2899 = vpow.pop %v2898
      %v2900 = vmul.f32 %v2880, 1.442695
      %v2901 = vpow.pop %v2900
      %v2902 = vmul.f32 %v2881, 1.442695
      %v2903 = vpow.pop %v2902
      %v2904 = vmul.f32 %v2882, 1.442695
      %v2905 = vpow.pop %v2904
      %v2906 = vmul.f32 %v2883, 1.442695
      %v2907 = vpow.pop %v2906
      %v2908 = vmul.f32 %v2884, 1.442695
      %v2909 = vpow.pop %v2908
      %v2910 = vmul.f32 %v2885, 1.442695
      %v2911 = vpow.pop %v2910
      %v2912 = vmul.f32 %v2886, 1.442695
      %v2913 = vpow.pop %v2912
      %v2914 = vmul.f32 %v2887, 1.442695
      %v2915 = vpow.pop %v2914
      %v2916 = vmul.f32 %v2888, 1.442695
      %v2917 = vpow.pop %v2916
      %v2918 = vmul.f32 %v2889, 1.442695
      %v2919 = vpow.pop %v2918
      %v2920 = vmul.f32 %v2890, 1.442695
      %v2921 = vpow.pop %v2920
      %v2922 = vmul.f32 %v2891, 1.442695
      %v2923 = vpow.pop %v2922
      %v2924 = vmul.f32 %v2860, %v2893
      %v2925 = vmul.f32 %v2861, %v2895
      %v2926 = vmul.f32 %v2862, %v2897
      %v2927 = vmul.f32 %v2863, %v2899
      %v2928 = vmul.f32 %v2864, %v2901
      %v2929 = vmul.f32 %v2865, %v2903
      %v2930 = vmul.f32 %v2866, %v2905
      %v2931 = vmul.f32 %v2867, %v2907
      %v2932 = vmul.f32 %v2868, %v2909
      %v2933 = vmul.f32 %v2869, %v2911
      %v2934 = vmul.f32 %v2870, %v2913
      %v2935 = vmul.f32 %v2871, %v2915
      %v2936 = vmul.f32 %v2872, %v2917
      %v2937 = vmul.f32 %v2873, %v2919
      %v2938 = vmul.f32 %v2874, %v2921
      %v2939 = vmul.f32 %v2875, %v2923
      %v2940 = vadd.f32 %v2924, %v2766
      %v2941 = vadd.f32 %v2925, %v2772
      %v2942 = vadd.f32 %v2926, %v2778
      %v2943 = vadd.f32 %v2927, %v2784
      %v2944 = vadd.f32 %v2928, %v2790
      %v2945 = vadd.f32 %v2929, %v2796
      %v2946 = vadd.f32 %v2930, %v2802
      %v2947 = vadd.f32 %v2931, %v2808
      %v2948 = vadd.f32 %v2932, %v2814
      %v2949 = vadd.f32 %v2933, %v2820
      %v2950 = vadd.f32 %v2934, %v2826
      %v2951 = vadd.f32 %v2935, %v2832
      %v2952 = vadd.f32 %v2936, %v2838
      %v2953 = vadd.f32 %v2937, %v2844
      %v2954 = vadd.f32 %v2938, %v2850
      %v2955 = vadd.f32 %v2939, %v2856
      %v2956 = vld [vmem:[%s6] sm:$0xff]
      %v2957 = vld [vmem:[%s6 + $0x8] sm:$0xff]
      %v2958 = vld [vmem:[%s6 + $0x10] sm:$0xff]
      %v2959 = vld [vmem:[%s6 + $0x18] sm:$0xff]
      %v2960 = vld [vmem:[%s6 + $0x20] sm:$0xff]
      %v2961 = vld [vmem:[%s6 + $0x28] sm:$0xff]
      %v2962 = vld [vmem:[%s6 + $0x30] sm:$0xff]
      %v2963 = vld [vmem:[%s6 + $0x38] sm:$0xff]
      %v2964 = vld [vmem:[%s6 + $0x40] sm:$0xf]
      %v2965 = vld [vmem:[%s6 + $0x48] sm:$0xf]
      %v2966 = vld [vmem:[%s6 + $0x50] sm:$0xf]
      %v2967 = vld [vmem:[%s6 + $0x58] sm:$0xf]
      %v2968 = vld [vmem:[%s7] sm:$0xf]
      %v2970 = vlaneseq
      %v2971 = vshrl.u32 %v2970, 7
      %v2972 = vsub.s32 0, %v2971
      %v2973 = vrot.slane %v2968, %v2972
      %v2974 = vlaneseq
      %v2975 = vshrl.u32 %v2974, 7
      %v2976 = vsub.s32 1, %v2975
      %v2977 = vrot.slane %v2968, %v2976
      %v2978 = vlaneseq
      %v2979 = vshrl.u32 %v2978, 7
      %v2980 = vsub.s32 2, %v2979
      %v2981 = vrot.slane %v2968, %v2980
      %v2982 = vlaneseq
      %v2983 = vshrl.u32 %v2982, 7
      %v2984 = vsub.s32 3, %v2983
      %v2985 = vrot.slane %v2968, %v2984
      %vm2990 = vcmask 162816
      %v2992 = vsel %vm2990, %v2940, 0
      %v2995 = vsel %vm2990, %v2941, 0
      %v2998 = vsel %vm2990, %v2942, 0
      %v3001 = vsel %vm2990, %v2943, 0
      %v3004 = vsel %vm2990, %v2944, 0
      %v3007 = vsel %vm2990, %v2945, 0
      %v3010 = vsel %vm2990, %v2946, 0
      %v3013 = vsel %vm2990, %v2947, 0
      %v3016 = vsel %vm2990, %v2948, 0
      %v3019 = vsel %vm2990, %v2949, 0
      %v3022 = vsel %vm2990, %v2950, 0
      %v3025 = vsel %vm2990, %v2951, 0
      %v3028 = vsel %vm2990, %v2952, 0
      %v3031 = vsel %vm2990, %v2953, 0
      %v3034 = vsel %vm2990, %v2954, 0
      %v3037 = vsel %vm2990, %v2955, 0
      %vm3039 = vcmask 1043456
      %v3041 = vsel %vm3039, %v2964, 0
      %v3044 = vsel %vm3039, %v2965, 0
      %v3047 = vsel %vm3039, %v2966, 0
      %v3050 = vsel %vm3039, %v2967, 0
      %3052 = vmatprep.subr.mxu0 %v2957
      %3053 = vmatpush1.msra.mxu0 %v2956
      %3054 = vmatprep.subr.mxu0 %v2961
      %3055 = vmatpush1.msra.mxu0 %v2960
      %3056 = vmatprep.subr.mxu0 %v3044
      %3057 = vmatpush1.msra.mxu0 %v3041
      %3058 = vmatprep.subr.mxu0 0.0
      %3059 = vmatpush1.msra.mxu0 0.0
      %3060 = vmatprep.subr.mxu0 0.0
      %3061 = vmatpush1.msra.mxu0 0.0
      %3062 = vmatprep.subr.mxu0 0.0
      %3063 = vmatpush1.msra.mxu0 0.0
      %3064 = vmatprep.subr.mxu0 0.0
      %3065 = vmatpush1.msra.mxu0 0.0
      %3066 = vmatprep.subr.mxu0 0.0
      %3067 = vmatpush1.msra.mxu0 0.0
      %3068 = vmatprep.subr.mxu0 0.0
      %3069 = vmatpush1.msra.mxu0 0.0
      %3070 = vmatprep.subr.mxu0 0.0
      %3071 = vmatpush1.msra.mxu0 0.0
      %3072 = vmatprep.subr.mxu0 0.0
      %3073 = vmatpush1.msra.mxu0 0.0
      %3074 = vmatprep.subr.mxu0 0.0
      %3075 = vmatpush1.msra.mxu0 0.0
      %3076 = vmatprep.subr.mxu0 0.0
      %3077 = vmatpush1.msra.mxu0 0.0
      %3078 = vmatprep.subr.mxu0 0.0
      %3079 = vmatpush1.msra.mxu0 0.0
      %3080 = vmatprep.subr.mxu0 0.0
      %3081 = vmatpush1.msra.mxu0 0.0
      %3082 = vmatprep.subr.mxu0 0.0
      %3083 = vmatpush1.msra.mxu0 0.0
      %3084 = vmatprep.subr.mxu0 0.0
      %3085 = vmatpush1.msra.mxu0 0.0
      %3086 = vmatprep.subr.mxu0 0.0
      %3087 = vmatpush1.msra.mxu0 0.0
      %3088 = vmatprep.subr.mxu0 0.0
      %3089 = vmatpush1.msra.mxu0 0.0
      %3090 = vmatprep.subr.mxu0 0.0
      %3091 = vmatpush1.msra.mxu0 0.0
      %3092 = vmatprep.subr.mxu0 0.0
      %3093 = vmatpush1.msra.mxu0 0.0
      %3094 = vmatprep.subr.mxu0 0.0
      %3095 = vmatpush1.msra.mxu0 0.0
      %3096 = vmatprep.subr.mxu0 0.0
      %3097 = vmatpush1.msra.mxu0 0.0
      %3098 = vmatprep.subr.mxu0 0.0
      %3099 = vmatpush1.msra.mxu0 0.0
      %3100 = vmatprep.subr.mxu0 0.0
      %3101 = vmatpush1.msra.mxu0 0.0
      %3102 = vmatprep.subr.mxu0 0.0
      %3103 = vmatpush1.msra.mxu0 0.0
      %3104 = vmatprep.subr.mxu0 0.0
      %3105 = vmatpush1.msra.mxu0 0.0
      %3106 = vmatprep.subr.mxu0 0.0
      %3107 = vmatpush1.msra.mxu0 0.0
      %3108 = vmatprep.subr.mxu0 0.0
      %3109 = vmatpush1.msra.mxu0 0.0
      %3110 = vmatprep.subr.mxu0 0.0
      %3111 = vmatpush1.msra.mxu0 0.0
      %3112 = vmatprep.subr.mxu0 0.0
      %3113 = vmatpush1.msra.mxu0 0.0
      %3114 = vmatprep.subr.mxu0 0.0
      %3115 = vmatpush1.msra.mxu0 0.0
      %3116 = vmatprep.mubr.f32.mxu0 0.0
      %3117 = vmatmul.mubr.f32.gmra.mrb[0].mxu0 %v2992
      %v3118 = vpop.f32.mrb[0].mxu0
      %v3119 = vadd.f32 %v2973, %v3118
      %v3120 = vpop.f32.mrb[0].mxu0
      %v3121 = vadd.f32 %v2977, %v3120
      %3122 = vmatprep.mubr.f32.mxu0 0.0
      %3123 = vmatmul.mubr.f32.gmra.mrb[0].mxu0 %v2995
      %v3124 = vpop.f32.mrb[0].mxu0
      %v3125 = vadd.f32 %v2973, %v3124
      %v3126 = vpop.f32.mrb[0].mxu0
      %v3127 = vadd.f32 %v2977, %v3126
      %3128 = vmatprep.mubr.f32.mxu0 0.0
      %3129 = vmatmul.mubr.f32.gmra.mrb[0].mxu0 %v2998
      %v3130 = vpop.f32.mrb[0].mxu0
      %v3131 = vadd.f32 %v2973, %v3130
      %v3132 = vpop.f32.mrb[0].mxu0
      %v3133 = vadd.f32 %v2977, %v3132
      %3134 = vmatprep.mubr.f32.mxu0 0.0
      %3135 = vmatmul.mubr.f32.gmra.mrb[0].mxu0 %v3001
      %v3136 = vpop.f32.mrb[0].mxu0
      %v3137 = vadd.f32 %v2973, %v3136
      %v3138 = vpop.f32.mrb[0].mxu0
      %v3139 = vadd.f32 %v2977, %v3138
      %3140 = vmatprep.mubr.f32.mxu0 0.0
      %3141 = vmatmul.mubr.f32.gmra.mrb[0].mxu0 %v3004
      %v3142 = vpop.f32.mrb[0].mxu0
      %v3143 = vadd.f32 %v2973, %v3142
      %v3144 = vpop.f32.mrb[0].mxu0
      %v3145 = vadd.f32 %v2977, %v3144
      %3146 = vmatprep.mubr.f32.mxu0 0.0
      %3147 = vmatmul.mubr.f32.gmra.mrb[0].mxu0 %v3007
      %v3148 = vpop.f32.mrb[0].mxu0
      %v3149 = vadd.f32 %v2973, %v3148
      %v3150 = vpop.f32.mrb[0].mxu0
      %v3151 = vadd.f32 %v2977, %v3150
      %3152 = vmatprep.mubr.f32.mxu0 0.0
      %3153 = vmatmul.mubr.f32.gmra.mrb[0].mxu0 %v3010
      %v3154 = vpop.f32.mrb[0].mxu0
      %v3155 = vadd.f32 %v2973, %v3154
      %v3156 = vpop.f32.mrb[0].mxu0
      %v3157 = vadd.f32 %v2977, %v3156
      %3158 = vmatprep.mubr.f32.mxu0 0.0
      %3159 = vmatmul.mubr.f32.gmra.mrb[0].mxu0 %v3013
      %v3160 = vpop.f32.mrb[0].mxu0
      %v3161 = vadd.f32 %v2973, %v3160
      %v3162 = vpop.f32.mrb[0].mxu0
      %v3163 = vadd.f32 %v2977, %v3162
      %3164 = vmatprep.mubr.f32.mxu0 0.0
      %3165 = vmatmul.mubr.f32.gmra.mrb[0].mxu0 %v3016
      %v3166 = vpop.f32.mrb[0].mxu0
      %v3167 = vadd.f32 %v2973, %v3166
      %v3168 = vpop.f32.mrb[0].mxu0
      %v3169 = vadd.f32 %v2977, %v3168
      %3170 = vmatprep.mubr.f32.mxu0 0.0
      %3171 = vmatmul.mubr.f32.gmra.mrb[0].mxu0 %v3019
      %v3172 = vpop.f32.mrb[0].mxu0
      %v3173 = vadd.f32 %v2973, %v3172
      %v3174 = vpop.f32.mrb[0].mxu0
      %v3175 = vadd.f32 %v2977, %v3174
      %3176 = vmatprep.mubr.f32.mxu0 0.0
      %3177 = vmatmul.mubr.f32.gmra.mrb[0].mxu0 %v3022
      %v3178 = vpop.f32.mrb[0].mxu0
      %v3179 = vadd.f32 %v2973, %v3178
      %v3180 = vpop.f32.mrb[0].mxu0
      %v3181 = vadd.f32 %v2977, %v3180
      %3182 = vmatprep.mubr.f32.mxu0 0.0
      %3183 = vmatmul.mubr.f32.gmra.mrb[0].mxu0 %v3025
      %v3184 = vpop.f32.mrb[0].mxu0
      %v3185 = vadd.f32 %v2973, %v3184
      %v3186 = vpop.f32.mrb[0].mxu0
      %v3187 = vadd.f32 %v2977, %v3186
      %3188 = vmatprep.mubr.f32.mxu0 0.0
      %3189 = vmatmul.mubr.f32.gmra.mrb[0].mxu0 %v3028
      %v3190 = vpop.f32.mrb[0].mxu0
      %v3191 = vadd.f32 %v2973, %v3190
      %v3192 = vpop.f32.mrb[0].mxu0
      %v3193 = vadd.f32 %v2977, %v3192
      %3194 = vmatprep.mubr.f32.mxu0 0.0
      %3195 = vmatmul.mubr.f32.gmra.mrb[0].mxu0 %v3031
      %v3196 = vpop.f32.mrb[0].mxu0
      %v3197 = vadd.f32 %v2973, %v3196
      %v3198 = vpop.f32.mrb[0].mxu0
      %v3199 = vadd.f32 %v2977, %v3198
      %3200 = vmatprep.mubr.f32.mxu0 0.0
      %3201 = vmatmul.mubr.f32.gmra.mrb[0].mxu0 %v3034
      %v3202 = vpop.f32.mrb[0].mxu0
      %v3203 = vadd.f32 %v2973, %v3202
      %v3204 = vpop.f32.mrb[0].mxu0
      %v3205 = vadd.f32 %v2977, %v3204
      %3206 = vmatprep.mubr.f32.mxu0 0.0
      %3207 = vmatmul.mubr.f32.gmra.mrb[0].mxu0 %v3037
      %v3208 = vpop.f32.mrb[0].mxu0
      %v3209 = vadd.f32 %v2973, %v3208
      %v3210 = vpop.f32.mrb[0].mxu0
      %v3211 = vadd.f32 %v2977, %v3210
      %3212 = vdwg.mxu0
      %3213 = vmatprep.subr.mxu0 %v2959
      %3214 = vmatpush1.msra.mxu0 %v2958
      %3215 = vmatprep.subr.mxu0 %v2963
      %3216 = vmatpush1.msra.mxu0 %v2962
      %3217 = vmatprep.subr.mxu0 %v3050
      %3218 = vmatpush1.msra.mxu0 %v3047
      %3219 = vmatprep.subr.mxu0 0.0
      %3220 = vmatpush1.msra.mxu0 0.0
      %3221 = vmatprep.subr.mxu0 0.0
      %3222 = vmatpush1.msra.mxu0 0.0
      %3223 = vmatprep.subr.mxu0 0.0
      %3224 = vmatpush1.msra.mxu0 0.0
      %3225 = vmatprep.subr.mxu0 0.0
      %3226 = vmatpush1.msra.mxu0 0.0
      %3227 = vmatprep.subr.mxu0 0.0
      %3228 = vmatpush1.msra.mxu0 0.0
      %3229 = vmatprep.subr.mxu0 0.0
      %3230 = vmatpush1.msra.mxu0 0.0
      %3231 = vmatprep.subr.mxu0 0.0
      %3232 = vmatpush1.msra.mxu0 0.0
      %3233 = vmatprep.subr.mxu0 0.0
      %3234 = vmatpush1.msra.mxu0 0.0
      %3235 = vmatprep.subr.mxu0 0.0
      %3236 = vmatpush1.msra.mxu0 0.0
      %3237 = vmatprep.subr.mxu0 0.0
      %3238 = vmatpush1.msra.mxu0 0.0
      %3239 = vmatprep.subr.mxu0 0.0
      %3240 = vmatpush1.msra.mxu0 0.0
      %3241 = vmatprep.subr.mxu0 0.0
      %3242 = vmatpush1.msra.mxu0 0.0
      %3243 = vmatprep.subr.mxu0 0.0
      %3244 = vmatpush1.msra.mxu0 0.0
      %3245 = vmatprep.subr.mxu0 0.0
      %3246 = vmatpush1.msra.mxu0 0.0
      %3247 = vmatprep.subr.mxu0 0.0
      %3248 = vmatpush1.msra.mxu0 0.0
      %3249 = vmatprep.subr.mxu0 0.0
      %3250 = vmatpush1.msra.mxu0 0.0
      %3251 = vmatprep.subr.mxu0 0.0
      %3252 = vmatpush1.msra.mxu0 0.0
      %3253 = vmatprep.subr.mxu0 0.0
      %3254 = vmatpush1.msra.mxu0 0.0
      %3255 = vmatprep.subr.mxu0 0.0
      %3256 = vmatpush1.msra.mxu0 0.0
      %3257 = vmatprep.subr.mxu0 0.0
      %3258 = vmatpush1.msra.mxu0 0.0
      %3259 = vmatprep.subr.mxu0 0.0
      %3260 = vmatpush1.msra.mxu0 0.0
      %3261 = vmatprep.subr.mxu0 0.0
      %3262 = vmatpush1.msra.mxu0 0.0
      %3263 = vmatprep.subr.mxu0 0.0
      %3264 = vmatpush1.msra.mxu0 0.0
      %3265 = vmatprep.subr.mxu0 0.0
      %3266 = vmatpush1.msra.mxu0 0.0
      %3267 = vmatprep.subr.mxu0 0.0
      %3268 = vmatpush1.msra.mxu0 0.0
      %3269 = vmatprep.subr.mxu0 0.0
      %3270 = vmatpush1.msra.mxu0 0.0
      %3271 = vmatprep.subr.mxu0 0.0
      %3272 = vmatpush1.msra.mxu0 0.0
      %3273 = vmatprep.subr.mxu0 0.0
      %3274 = vmatpush1.msra.mxu0 0.0
      %3275 = vmatprep.subr.mxu0 0.0
      %3276 = vmatpush1.msra.mxu0 0.0
      %3277 = vmatprep.mubr.f32.mxu0 0.0
      %3278 = vmatmul.mubr.f32.gmra.mrb[0].mxu0 %v2992
      %v3279 = vpop.f32.mrb[0].mxu0
      %v3280 = vadd.f32 %v2981, %v3279
      %v3281 = vpop.f32.mrb[0].mxu0
      %v3282 = vadd.f32 %v2985, %v3281
      %3283 = vmatprep.mubr.f32.mxu0 0.0
      %3284 = vmatmul.mubr.f32.gmra.mrb[0].mxu0 %v2995
      %v3285 = vpop.f32.mrb[0].mxu0
      %v3286 = vadd.f32 %v2981, %v3285
      %v3287 = vpop.f32.mrb[0].mxu0
      %v3288 = vadd.f32 %v2985, %v3287
      %3289 = vmatprep.mubr.f32.mxu0 0.0
      %3290 = vmatmul.mubr.f32.gmra.mrb[0].mxu0 %v2998
      %v3291 = vpop.f32.mrb[0].mxu0
      %v3292 = vadd.f32 %v2981, %v3291
      %v3293 = vpop.f32.mrb[0].mxu0
      %v3294 = vadd.f32 %v2985, %v3293
      %3295 = vmatprep.mubr.f32.mxu0 0.0
      %3296 = vmatmul.mubr.f32.gmra.mrb[0].mxu0 %v3001
      %v3297 = vpop.f32.mrb[0].mxu0
      %v3298 = vadd.f32 %v2981, %v3297
      %v3299 = vpop.f32.mrb[0].mxu0
      %v3300 = vadd.f32 %v2985, %v3299
      %3301 = vmatprep.mubr.f32.mxu0 0.0
      %3302 = vmatmul.mubr.f32.gmra.mrb[0].mxu0 %v3004
      %v3303 = vpop.f32.mrb[0].mxu0
      %v3304 = vadd.f32 %v2981, %v3303
      %v3305 = vpop.f32.mrb[0].mxu0
      %v3306 = vadd.f32 %v2985, %v3305
      %3307 = vmatprep.mubr.f32.mxu0 0.0
      %3308 = vmatmul.mubr.f32.gmra.mrb[0].mxu0 %v3007
      %v3309 = vpop.f32.mrb[0].mxu0
      %v3310 = vadd.f32 %v2981, %v3309
      %v3311 = vpop.f32.mrb[0].mxu0
      %v3312 = vadd.f32 %v2985, %v3311
      %3313 = vmatprep.mubr.f32.mxu0 0.0
      %3314 = vmatmul.mubr.f32.gmra.mrb[0].mxu0 %v3010
      %v3315 = vpop.f32.mrb[0].mxu0
      %v3316 = vadd.f32 %v2981, %v3315
      %v3317 = vpop.f32.mrb[0].mxu0
      %v3318 = vadd.f32 %v2985, %v3317
      %3319 = vmatprep.mubr.f32.mxu0 0.0
      %3320 = vmatmul.mubr.f32.gmra.mrb[0].mxu0 %v3013
      %v3321 = vpop.f32.mrb[0].mxu0
      %v3322 = vadd.f32 %v2981, %v3321
      %v3323 = vpop.f32.mrb[0].mxu0
      %v3324 = vadd.f32 %v2985, %v3323
      %3325 = vmatprep.mubr.f32.mxu0 0.0
      %3326 = vmatmul.mubr.f32.gmra.mrb[0].mxu0 %v3016
      %v3327 = vpop.f32.mrb[0].mxu0
      %v3328 = vadd.f32 %v2981, %v3327
      %v3329 = vpop.f32.mrb[0].mxu0
      %v3330 = vadd.f32 %v2985, %v3329
      %3331 = vmatprep.mubr.f32.mxu0 0.0
      %3332 = vmatmul.mubr.f32.gmra.mrb[0].mxu0 %v3019
      %v3333 = vpop.f32.mrb[0].mxu0
      %v3334 = vadd.f32 %v2981, %v3333
      %v3335 = vpop.f32.mrb[0].mxu0
      %v3336 = vadd.f32 %v2985, %v3335
      %3337 = vmatprep.mubr.f32.mxu0 0.0
      %3338 = vmatmul.mubr.f32.gmra.mrb[0].mxu0 %v3022
      %v3339 = vpop.f32.mrb[0].mxu0
      %v3340 = vadd.f32 %v2981, %v3339
      %v3341 = vpop.f32.mrb[0].mxu0
      %v3342 = vadd.f32 %v2985, %v3341
      %3343 = vmatprep.mubr.f32.mxu0 0.0
      %3344 = vmatmul.mubr.f32.gmra.mrb[0].mxu0 %v3025
      %v3345 = vpop.f32.mrb[0].mxu0
      %v3346 = vadd.f32 %v2981, %v3345
      %v3347 = vpop.f32.mrb[0].mxu0
      %v3348 = vadd.f32 %v2985, %v3347
      %3349 = vmatprep.mubr.f32.mxu0 0.0
      %3350 = vmatmul.mubr.f32.gmra.mrb[0].mxu0 %v3028
      %v3351 = vpop.f32.mrb[0].mxu0
      %v3352 = vadd.f32 %v2981, %v3351
      %v3353 = vpop.f32.mrb[0].mxu0
      %v3354 = vadd.f32 %v2985, %v3353
      %3355 = vmatprep.mubr.f32.mxu0 0.0
      %3356 = vmatmul.mubr.f32.gmra.mrb[0].mxu0 %v3031
      %v3357 = vpop.f32.mrb[0].mxu0
      %v3358 = vadd.f32 %v2981, %v3357
      %v3359 = vpop.f32.mrb[0].mxu0
      %v3360 = vadd.f32 %v2985, %v3359
      %3361 = vmatprep.mubr.f32.mxu0 0.0
      %3362 = vmatmul.mubr.f32.gmra.mrb[0].mxu0 %v3034
      %v3363 = vpop.f32.mrb[0].mxu0
      %v3364 = vadd.f32 %v2981, %v3363
      %v3365 = vpop.f32.mrb[0].mxu0
      %v3366 = vadd.f32 %v2985, %v3365
      %3367 = vmatprep.mubr.f32.mxu0 0.0
      %3368 = vmatmul.mubr.f32.gmra.mrb[0].mxu0 %v3037
      %v3369 = vpop.f32.mrb[0].mxu0
      %v3370 = vadd.f32 %v2981, %v3369
      %v3371 = vpop.f32.mrb[0].mxu0
      %v3372 = vadd.f32 %v2985, %v3371
      %3373 = vdwg.mxu0
      %v3374 = vmax.f32 %v3119, 0.0
      %v3375 = vmax.f32 %v3121, 0.0
      %v3376 = vmax.f32 %v3280, 0.0
      %v3377 = vmax.f32 %v3282, 0.0
      %v3378 = vmax.f32 %v3125, 0.0
      %v3379 = vmax.f32 %v3127, 0.0
      %v3380 = vmax.f32 %v3286, 0.0
      %v3381 = vmax.f32 %v3288, 0.0
      %v3382 = vmax.f32 %v3131, 0.0
      %v3383 = vmax.f32 %v3133, 0.0
      %v3384 = vmax.f32 %v3292, 0.0
      %v3385 = vmax.f32 %v3294, 0.0
      %v3386 = vmax.f32 %v3137, 0.0
      %v3387 = vmax.f32 %v3139, 0.0
      %v3388 = vmax.f32 %v3298, 0.0
      %v3389 = vmax.f32 %v3300, 0.0
      %v3390 = vmax.f32 %v3143, 0.0
      %v3391 = vmax.f32 %v3145, 0.0
      %v3392 = vmax.f32 %v3304, 0.0
      %v3393 = vmax.f32 %v3306, 0.0
      %v3394 = vmax.f32 %v3149, 0.0
      %v3395 = vmax.f32 %v3151, 0.0
      %v3396 = vmax.f32 %v3310, 0.0
      %v3397 = vmax.f32 %v3312, 0.0
      %v3398 = vmax.f32 %v3155, 0.0
      %v3399 = vmax.f32 %v3157, 0.0
      %v3400 = vmax.f32 %v3316, 0.0
      %v3401 = vmax.f32 %v3318, 0.0
      %v3402 = vmax.f32 %v3161, 0.0
      %v3403 = vmax.f32 %v3163, 0.0
      %v3404 = vmax.f32 %v3322, 0.0
      %v3405 = vmax.f32 %v3324, 0.0
      %v3406 = vmax.f32 %v3167, 0.0
      %v3407 = vmax.f32 %v3169, 0.0
      %v3408 = vmax.f32 %v3328, 0.0
      %v3409 = vmax.f32 %v3330, 0.0
      %v3410 = vmax.f32 %v3173, 0.0
      %v3411 = vmax.f32 %v3175, 0.0
      %v3412 = vmax.f32 %v3334, 0.0
      %v3413 = vmax.f32 %v3336, 0.0
      %v3414 = vmax.f32 %v3179, 0.0
      %v3415 = vmax.f32 %v3181, 0.0
      %v3416 = vmax.f32 %v3340, 0.0
      %v3417 = vmax.f32 %v3342, 0.0
      %v3418 = vmax.f32 %v3185, 0.0
      %v3419 = vmax.f32 %v3187, 0.0
      %v3420 = vmax.f32 %v3346, 0.0
      %v3421 = vmax.f32 %v3348, 0.0
      %v3422 = vmax.f32 %v3191, 0.0
      %v3423 = vmax.f32 %v3193, 0.0
      %v3424 = vmax.f32 %v3352, 0.0
      %v3425 = vmax.f32 %v3354, 0.0
      %v3426 = vmax.f32 %v3197, 0.0
      %v3427 = vmax.f32 %v3199, 0.0
      %v3428 = vmax.f32 %v3358, 0.0
      %v3429 = vmax.f32 %v3360, 0.0
      %v3430 = vmax.f32 %v3203, 0.0
      %v3431 = vmax.f32 %v3205, 0.0
      %v3432 = vmax.f32 %v3364, 0.0
      %v3433 = vmax.f32 %v3366, 0.0
      %v3434 = vmax.f32 %v3209, 0.0
      %v3435 = vmax.f32 %v3211, 0.0
      %v3436 = vmax.f32 %v3370, 0.0
      %v3437 = vmax.f32 %v3372, 0.0
      %v3438 = vld [vmem:[%s8] sm:$0xff]
      %v3439 = vld [vmem:[%s8 + $0x8] sm:$0xff]
      %v3440 = vld [vmem:[%s8 + $0x10] sm:$0xff]
      %v3441 = vld [vmem:[%s8 + $0x18] sm:$0xff]
      %v3442 = vld [vmem:[%s8 + $0x20] sm:$0xff]
      %v3443 = vld [vmem:[%s8 + $0x28] sm:$0xff]
      %v3444 = vld [vmem:[%s8 + $0x30] sm:$0xff]
      %v3445 = vld [vmem:[%s8 + $0x38] sm:$0xff]
      %v3446 = vld [vmem:[%s8 + $0x40] sm:$0xff]
      %v3447 = vld [vmem:[%s8 + $0x48] sm:$0xff]
      %v3448 = vld [vmem:[%s8 + $0x50] sm:$0xff]
      %v3449 = vld [vmem:[%s8 + $0x58] sm:$0xff]
      %v3450 = vld [vmem:[%s8 + $0x60] sm:$0xff]
      %v3451 = vld [vmem:[%s8 + $0x68] sm:$0xff]
      %v3452 = vld [vmem:[%s8 + $0x70] sm:$0xff]
      %v3453 = vld [vmem:[%s8 + $0x78] sm:$0xff]
      %v3454 = vld [vmem:[%s8 + $0x80] sm:$0xff]
      %v3455 = vld [vmem:[%s8 + $0x88] sm:$0xff]
      %v3456 = vld [vmem:[%s8 + $0x90] sm:$0xff]
      %v3457 = vld [vmem:[%s8 + $0x98] sm:$0xff]
      %v3458 = vld [vmem:[%s8 + $0xa0] sm:$0xff]
      %v3459 = vld [vmem:[%s8 + $0xa8] sm:$0xff]
      %v3460 = vld [vmem:[%s8 + $0xb0] sm:$0xff]
      %v3461 = vld [vmem:[%s8 + $0xb8] sm:$0xff]
      %v3462 = vld [vmem:[%s8 + $0xc0] sm:$0xff]
      %v3463 = vld [vmem:[%s8 + $0xc8] sm:$0xff]
      %v3464 = vld [vmem:[%s8 + $0xd0] sm:$0xff]
      %v3465 = vld [vmem:[%s8 + $0xd8] sm:$0xff]
      %v3466 = vld [vmem:[%s8 + $0xe0] sm:$0xff]
      %v3467 = vld [vmem:[%s8 + $0xe8] sm:$0xff]
      %v3468 = vld [vmem:[%s8 + $0xf0] sm:$0xff]
      %v3469 = vld [vmem:[%s8 + $0xf8] sm:$0xff]
      %v3470 = vld [vmem:[%s8 + $0x100] sm:$0xff]
      %v3471 = vld [vmem:[%s8 + $0x108] sm:$0xff]
      %v3472 = vld [vmem:[%s8 + $0x110] sm:$0xff]
      %v3473 = vld [vmem:[%s8 + $0x118] sm:$0xff]
      %v3474 = vld [vmem:[%s8 + $0x120] sm:$0xff]
      %v3475 = vld [vmem:[%s8 + $0x128] sm:$0xff]
      %v3476 = vld [vmem:[%s8 + $0x130] sm:$0xff]
      %v3477 = vld [vmem:[%s8 + $0x138] sm:$0xff]
      %v3478 = vld [vmem:[%s8 + $0x140] sm:$0xff]
      %v3479 = vld [vmem:[%s8 + $0x148] sm:$0xff]
      %v3480 = vld [vmem:[%s8 + $0x150] sm:$0xff]
      %v3481 = vld [vmem:[%s8 + $0x158] sm:$0xff]
      %v3482 = vld [vmem:[%s8 + $0x160] sm:$0xff]
      %v3483 = vld [vmem:[%s8 + $0x168] sm:$0xff]
      %v3484 = vld [vmem:[%s8 + $0x170] sm:$0xff]
      %v3485 = vld [vmem:[%s8 + $0x178] sm:$0xff]
      %v3486 = vld [vmem:[%s8 + $0x180] sm:$0xff]
      %v3487 = vld [vmem:[%s8 + $0x188] sm:$0xff]
      %v3488 = vld [vmem:[%s8 + $0x190] sm:$0xff]
      %v3489 = vld [vmem:[%s8 + $0x198] sm:$0xff]
      %v3490 = vld [vmem:[%s8 + $0x1a0] sm:$0xff]
      %v3491 = vld [vmem:[%s8 + $0x1a8] sm:$0xff]
      %v3492 = vld [vmem:[%s8 + $0x1b0] sm:$0xff]
      %v3493 = vld [vmem:[%s8 + $0x1b8] sm:$0xff]
      %v3494 = vld [vmem:[%s8 + $0x1c0] sm:$0xff]
      %v3495 = vld [vmem:[%s8 + $0x1c8] sm:$0xff]
      %v3496 = vld [vmem:[%s8 + $0x1d0] sm:$0xff]
      %v3497 = vld [vmem:[%s8 + $0x1d8] sm:$0xff]
      %v3498 = vld [vmem:[%s8 + $0x1e0] sm:$0xff]
      %v3499 = vld [vmem:[%s8 + $0x1e8] sm:$0xff]
      %v3500 = vld [vmem:[%s8 + $0x1f0] sm:$0xff]
      %v3501 = vld [vmem:[%s8 + $0x1f8] sm:$0xff]
      %v3502 = vld [vmem:[%s8 + $0x200] sm:$0xff]
      %v3503 = vld [vmem:[%s8 + $0x208] sm:$0xff]
      %v3504 = vld [vmem:[%s8 + $0x210] sm:$0xff]
      %v3505 = vld [vmem:[%s8 + $0x218] sm:$0xff]
      %v3506 = vld [vmem:[%s8 + $0x220] sm:$0xff]
      %v3507 = vld [vmem:[%s8 + $0x228] sm:$0xff]
      %v3508 = vld [vmem:[%s8 + $0x230] sm:$0xff]
      %v3509 = vld [vmem:[%s8 + $0x238] sm:$0xff]
      %v3510 = vld [vmem:[%s8 + $0x240] sm:$0xff]
      %v3511 = vld [vmem:[%s8 + $0x248] sm:$0xff]
      %v3512 = vld [vmem:[%s8 + $0x250] sm:$0xff]
      %v3513 = vld [vmem:[%s8 + $0x258] sm:$0xff]
      %v3514 = vld [vmem:[%s8 + $0x260] sm:$0xff]
      %v3515 = vld [vmem:[%s8 + $0x268] sm:$0xff]
      %v3516 = vld [vmem:[%s8 + $0x270] sm:$0xff]
      %v3517 = vld [vmem:[%s8 + $0x278] sm:$0xff]
      %v3518 = vld [vmem:[%s8 + $0x280] sm:$0xff]
      %v3519 = vld [vmem:[%s8 + $0x288] sm:$0xff]
      %v3520 = vld [vmem:[%s8 + $0x290] sm:$0xff]
      %v3521 = vld [vmem:[%s8 + $0x298] sm:$0xff]
      %v3522 = vld [vmem:[%s8 + $0x2a0] sm:$0xff]
      %v3523 = vld [vmem:[%s8 + $0x2a8] sm:$0xff]
      %v3524 = vld [vmem:[%s8 + $0x2b0] sm:$0xff]
      %v3525 = vld [vmem:[%s8 + $0x2b8] sm:$0xff]
      %v3526 = vld [vmem:[%s8 + $0x2c0] sm:$0xff]
      %v3527 = vld [vmem:[%s8 + $0x2c8] sm:$0xff]
      %v3528 = vld [vmem:[%s8 + $0x2d0] sm:$0xff]
      %v3529 = vld [vmem:[%s8 + $0x2d8] sm:$0xff]
      %v3530 = vld [vmem:[%s8 + $0x2e0] sm:$0xff]
      %v3531 = vld [vmem:[%s8 + $0x2e8] sm:$0xff]
      %v3532 = vld [vmem:[%s8 + $0x2f0] sm:$0xff]
      %v3533 = vld [vmem:[%s8 + $0x2f8] sm:$0xff]
      %v3534 = vld [vmem:[%s8 + $0x300] sm:$0xff]
      %v3535 = vld [vmem:[%s8 + $0x308] sm:$0xff]
      %v3536 = vld [vmem:[%s8 + $0x310] sm:$0xff]
      %v3537 = vld [vmem:[%s8 + $0x318] sm:$0xff]
      %v3538 = vld [vmem:[%s8 + $0x320] sm:$0xff]
      %v3539 = vld [vmem:[%s8 + $0x328] sm:$0xff]
      %v3540 = vld [vmem:[%s8 + $0x330] sm:$0xff]
      %v3541 = vld [vmem:[%s8 + $0x338] sm:$0xff]
      %v3542 = vld [vmem:[%s8 + $0x340] sm:$0xff]
      %v3543 = vld [vmem:[%s8 + $0x348] sm:$0xff]
      %v3544 = vld [vmem:[%s8 + $0x350] sm:$0xff]
      %v3545 = vld [vmem:[%s8 + $0x358] sm:$0xff]
      %v3546 = vld [vmem:[%s8 + $0x360] sm:$0xff]
      %v3547 = vld [vmem:[%s8 + $0x368] sm:$0xff]
      %v3548 = vld [vmem:[%s8 + $0x370] sm:$0xff]
      %v3549 = vld [vmem:[%s8 + $0x378] sm:$0xff]
      %v3550 = vld [vmem:[%s8 + $0x380] sm:$0xff]
      %v3551 = vld [vmem:[%s8 + $0x388] sm:$0xff]
      %v3552 = vld [vmem:[%s8 + $0x390] sm:$0xff]
      %v3553 = vld [vmem:[%s8 + $0x398] sm:$0xff]
      %v3554 = vld [vmem:[%s8 + $0x3a0] sm:$0xff]
      %v3555 = vld [vmem:[%s8 + $0x3a8] sm:$0xff]
      %v3556 = vld [vmem:[%s8 + $0x3b0] sm:$0xff]
      %v3557 = vld [vmem:[%s8 + $0x3b8] sm:$0xff]
      %v3558 = vld [vmem:[%s8 + $0x3c0] sm:$0xff]
      %v3559 = vld [vmem:[%s8 + $0x3c8] sm:$0xff]
      %v3560 = vld [vmem:[%s8 + $0x3d0] sm:$0xff]
      %v3561 = vld [vmem:[%s8 + $0x3d8] sm:$0xff]
      %v3562 = vld [vmem:[%s8 + $0x3e0] sm:$0xff]
      %v3563 = vld [vmem:[%s8 + $0x3e8] sm:$0xff]
      %v3564 = vld [vmem:[%s8 + $0x3f0] sm:$0xff]
      %v3565 = vld [vmem:[%s8 + $0x3f8] sm:$0xff]
      %v3566 = vld [vmem:[%s8 + $0x400] sm:$0xff]
      %v3567 = vld [vmem:[%s8 + $0x408] sm:$0xff]
      %v3568 = vld [vmem:[%s8 + $0x410] sm:$0xff]
      %v3569 = vld [vmem:[%s8 + $0x418] sm:$0xff]
      %v3570 = vld [vmem:[%s8 + $0x420] sm:$0xff]
      %v3571 = vld [vmem:[%s8 + $0x428] sm:$0xff]
      %v3572 = vld [vmem:[%s8 + $0x430] sm:$0xff]
      %v3573 = vld [vmem:[%s8 + $0x438] sm:$0xff]
      %v3574 = vld [vmem:[%s8 + $0x440] sm:$0xff]
      %v3575 = vld [vmem:[%s8 + $0x448] sm:$0xff]
      %v3576 = vld [vmem:[%s8 + $0x450] sm:$0xff]
      %v3577 = vld [vmem:[%s8 + $0x458] sm:$0xff]
      %v3578 = vld [vmem:[%s8 + $0x460] sm:$0xff]
      %v3579 = vld [vmem:[%s8 + $0x468] sm:$0xff]
      %v3580 = vld [vmem:[%s8 + $0x470] sm:$0xff]
      %v3581 = vld [vmem:[%s8 + $0x478] sm:$0xff]
      %v3582 = vld [vmem:[%s8 + $0x480] sm:$0xff]
      %v3583 = vld [vmem:[%s8 + $0x488] sm:$0xff]
      %v3584 = vld [vmem:[%s8 + $0x490] sm:$0xff]
      %v3585 = vld [vmem:[%s8 + $0x498] sm:$0xff]
      %v3586 = vld [vmem:[%s8 + $0x4a0] sm:$0xff]
      %v3587 = vld [vmem:[%s8 + $0x4a8] sm:$0xff]
      %v3588 = vld [vmem:[%s8 + $0x4b0] sm:$0xff]
      %v3589 = vld [vmem:[%s8 + $0x4b8] sm:$0xff]
      %v3590 = vld [vmem:[%s8 + $0x4c0] sm:$0xff]
      %v3591 = vld [vmem:[%s8 + $0x4c8] sm:$0xff]
      %v3592 = vld [vmem:[%s8 + $0x4d0] sm:$0xff]
      %v3593 = vld [vmem:[%s8 + $0x4d8] sm:$0xff]
      %v3594 = vld [vmem:[%s8 + $0x4e0] sm:$0xff]
      %v3595 = vld [vmem:[%s8 + $0x4e8] sm:$0xff]
      %v3596 = vld [vmem:[%s8 + $0x4f0] sm:$0xff]
      %v3597 = vld [vmem:[%s8 + $0x4f8] sm:$0xff]
      %v3598 = vld [vmem:[%s8 + $0x500] sm:$0xff]
      %v3599 = vld [vmem:[%s8 + $0x508] sm:$0xff]
      %v3600 = vld [vmem:[%s8 + $0x510] sm:$0xff]
      %v3601 = vld [vmem:[%s8 + $0x518] sm:$0xff]
      %v3602 = vld [vmem:[%s8 + $0x520] sm:$0xff]
      %v3603 = vld [vmem:[%s8 + $0x528] sm:$0xff]
      %v3604 = vld [vmem:[%s8 + $0x530] sm:$0xff]
      %v3605 = vld [vmem:[%s8 + $0x538] sm:$0xff]
      %v3606 = vld [vmem:[%s8 + $0x540] sm:$0xff]
      %v3607 = vld [vmem:[%s8 + $0x548] sm:$0xff]
      %v3608 = vld [vmem:[%s8 + $0x550] sm:$0xff]
      %v3609 = vld [vmem:[%s8 + $0x558] sm:$0xff]
      %v3610 = vld [vmem:[%s8 + $0x560] sm:$0xff]
      %v3611 = vld [vmem:[%s8 + $0x568] sm:$0xff]
      %v3612 = vld [vmem:[%s8 + $0x570] sm:$0xff]
      %v3613 = vld [vmem:[%s8 + $0x578] sm:$0xff]
      %v3614 = vld [vmem:[%s8 + $0x580] sm:$0xff]
      %v3615 = vld [vmem:[%s8 + $0x588] sm:$0xff]
      %v3616 = vld [vmem:[%s8 + $0x590] sm:$0xff]
      %v3617 = vld [vmem:[%s8 + $0x598] sm:$0xff]
      %v3618 = vld [vmem:[%s8 + $0x5a0] sm:$0xff]
      %v3619 = vld [vmem:[%s8 + $0x5a8] sm:$0xff]
      %v3620 = vld [vmem:[%s8 + $0x5b0] sm:$0xff]
      %v3621 = vld [vmem:[%s8 + $0x5b8] sm:$0xff]
      %v3622 = vld [vmem:[%s8 + $0x5c0] sm:$0xff]
      %v3623 = vld [vmem:[%s8 + $0x5c8] sm:$0xff]
      %v3624 = vld [vmem:[%s8 + $0x5d0] sm:$0xff]
      %v3625 = vld [vmem:[%s8 + $0x5d8] sm:$0xff]
      %v3626 = vld [vmem:[%s8 + $0x5e0] sm:$0xff]
      %v3627 = vld [vmem:[%s8 + $0x5e8] sm:$0xff]
      %v3628 = vld [vmem:[%s8 + $0x5f0] sm:$0xff]
      %v3629 = vld [vmem:[%s8 + $0x5f8] sm:$0xff]
      %v3630 = vld [vmem:[%s8 + $0x600] sm:$0xff]
      %v3631 = vld [vmem:[%s8 + $0x608] sm:$0xff]
      %v3632 = vld [vmem:[%s8 + $0x610] sm:$0xff]
      %v3633 = vld [vmem:[%s8 + $0x618] sm:$0xff]
      %v3634 = vld [vmem:[%s8 + $0x620] sm:$0xff]
      %v3635 = vld [vmem:[%s8 + $0x628] sm:$0xff]
      %v3636 = vld [vmem:[%s8 + $0x630] sm:$0xff]
      %v3637 = vld [vmem:[%s8 + $0x638] sm:$0xff]
      %v3638 = vld [vmem:[%s8 + $0x640] sm:$0xff]
      %v3639 = vld [vmem:[%s8 + $0x648] sm:$0xff]
      %v3640 = vld [vmem:[%s8 + $0x650] sm:$0xff]
      %v3641 = vld [vmem:[%s8 + $0x658] sm:$0xff]
      %v3642 = vld [vmem:[%s8 + $0x660] sm:$0xff]
      %v3643 = vld [vmem:[%s8 + $0x668] sm:$0xff]
      %v3644 = vld [vmem:[%s8 + $0x670] sm:$0xff]
      %v3645 = vld [vmem:[%s8 + $0x678] sm:$0xff]
      %v3646 = vld [vmem:[%s8 + $0x680] sm:$0xff]
      %v3647 = vld [vmem:[%s8 + $0x688] sm:$0xff]
      %v3648 = vld [vmem:[%s8 + $0x690] sm:$0xff]
      %v3649 = vld [vmem:[%s8 + $0x698] sm:$0xff]
      %v3650 = vld [vmem:[%s8 + $0x6a0] sm:$0xff]
      %v3651 = vld [vmem:[%s8 + $0x6a8] sm:$0xff]
      %v3652 = vld [vmem:[%s8 + $0x6b0] sm:$0xff]
      %v3653 = vld [vmem:[%s8 + $0x6b8] sm:$0xff]
      %v3654 = vld [vmem:[%s8 + $0x6c0] sm:$0xff]
      %v3655 = vld [vmem:[%s8 + $0x6c8] sm:$0xff]
      %v3656 = vld [vmem:[%s8 + $0x6d0] sm:$0xff]
      %v3657 = vld [vmem:[%s8 + $0x6d8] sm:$0xff]
      %v3658 = vld [vmem:[%s8 + $0x6e0] sm:$0xff]
      %v3659 = vld [vmem:[%s8 + $0x6e8] sm:$0xff]
      %v3660 = vld [vmem:[%s8 + $0x6f0] sm:$0xff]
      %v3661 = vld [vmem:[%s8 + $0x6f8] sm:$0xff]
      %v3662 = vld [vmem:[%s8 + $0x700] sm:$0xff]
      %v3663 = vld [vmem:[%s8 + $0x708] sm:$0xff]
      %v3664 = vld [vmem:[%s8 + $0x710] sm:$0xff]
      %v3665 = vld [vmem:[%s8 + $0x718] sm:$0xff]
      %v3666 = vld [vmem:[%s8 + $0x720] sm:$0xff]
      %v3667 = vld [vmem:[%s8 + $0x728] sm:$0xff]
      %v3668 = vld [vmem:[%s8 + $0x730] sm:$0xff]
      %v3669 = vld [vmem:[%s8 + $0x738] sm:$0xff]
      %v3670 = vld [vmem:[%s8 + $0x740] sm:$0xff]
      %v3671 = vld [vmem:[%s8 + $0x748] sm:$0xff]
      %v3672 = vld [vmem:[%s8 + $0x750] sm:$0xff]
      %v3673 = vld [vmem:[%s8 + $0x758] sm:$0xff]
      %v3674 = vld [vmem:[%s8 + $0x760] sm:$0xff]
      %v3675 = vld [vmem:[%s8 + $0x768] sm:$0xff]
      %v3676 = vld [vmem:[%s8 + $0x770] sm:$0xff]
      %v3677 = vld [vmem:[%s8 + $0x778] sm:$0xff]
      %v3678 = vld [vmem:[%s8 + $0x780] sm:$0xff]
      %v3679 = vld [vmem:[%s8 + $0x788] sm:$0xff]
      %v3680 = vld [vmem:[%s8 + $0x790] sm:$0xff]
      %v3681 = vld [vmem:[%s8 + $0x798] sm:$0xff]
      %v3682 = vld [vmem:[%s8 + $0x7a0] sm:$0xff]
      %v3683 = vld [vmem:[%s8 + $0x7a8] sm:$0xff]
      %v3684 = vld [vmem:[%s8 + $0x7b0] sm:$0xff]
      %v3685 = vld [vmem:[%s8 + $0x7b8] sm:$0xff]
      %v3686 = vld [vmem:[%s8 + $0x7c0] sm:$0xff]
      %v3687 = vld [vmem:[%s8 + $0x7c8] sm:$0xff]
      %v3688 = vld [vmem:[%s8 + $0x7d0] sm:$0xff]
      %v3689 = vld [vmem:[%s8 + $0x7d8] sm:$0xff]
      %v3690 = vld [vmem:[%s8 + $0x7e0] sm:$0xff]
      %v3691 = vld [vmem:[%s8 + $0x7e8] sm:$0xff]
      %v3692 = vld [vmem:[%s8 + $0x7f0] sm:$0xff]
      %v3693 = vld [vmem:[%s8 + $0x7f8] sm:$0xff]
      %v3694 = vld [vmem:[%s8 + $0x800] sm:$0xff]
      %v3695 = vld [vmem:[%s8 + $0x808] sm:$0xff]
      %v3696 = vld [vmem:[%s8 + $0x810] sm:$0xff]
      %v3697 = vld [vmem:[%s8 + $0x818] sm:$0xff]
      %v3698 = vld [vmem:[%s8 + $0x820] sm:$0xff]
      %v3699 = vld [vmem:[%s8 + $0x828] sm:$0xff]
      %v3700 = vld [vmem:[%s8 + $0x830] sm:$0xff]
      %v3701 = vld [vmem:[%s8 + $0x838] sm:$0xff]
      %v3702 = vld [vmem:[%s8 + $0x840] sm:$0xff]
      %v3703 = vld [vmem:[%s8 + $0x848] sm:$0xff]
      %v3704 = vld [vmem:[%s8 + $0x850] sm:$0xff]
      %v3705 = vld [vmem:[%s8 + $0x858] sm:$0xff]
      %v3706 = vld [vmem:[%s8 + $0x860] sm:$0xff]
      %v3707 = vld [vmem:[%s8 + $0x868] sm:$0xff]
      %v3708 = vld [vmem:[%s8 + $0x870] sm:$0xff]
      %v3709 = vld [vmem:[%s8 + $0x878] sm:$0xff]
      %v3710 = vld [vmem:[%s8 + $0x880] sm:$0xff]
      %v3711 = vld [vmem:[%s8 + $0x888] sm:$0xff]
      %v3712 = vld [vmem:[%s8 + $0x890] sm:$0xff]
      %v3713 = vld [vmem:[%s8 + $0x898] sm:$0xff]
      %v3714 = vld [vmem:[%s8 + $0x8a0] sm:$0xff]
      %v3715 = vld [vmem:[%s8 + $0x8a8] sm:$0xff]
      %v3716 = vld [vmem:[%s8 + $0x8b0] sm:$0xff]
      %v3717 = vld [vmem:[%s8 + $0x8b8] sm:$0xff]
      %v3718 = vld [vmem:[%s8 + $0x8c0] sm:$0xff]
      %v3719 = vld [vmem:[%s8 + $0x8c8] sm:$0xff]
      %v3720 = vld [vmem:[%s8 + $0x8d0] sm:$0xff]
      %v3721 = vld [vmem:[%s8 + $0x8d8] sm:$0xff]
      %v3722 = vld [vmem:[%s8 + $0x8e0] sm:$0xff]
      %v3723 = vld [vmem:[%s8 + $0x8e8] sm:$0xff]
      %v3724 = vld [vmem:[%s8 + $0x8f0] sm:$0xff]
      %v3725 = vld [vmem:[%s8 + $0x8f8] sm:$0xff]
      %v3726 = vld [vmem:[%s8 + $0x900] sm:$0xff]
      %v3727 = vld [vmem:[%s8 + $0x908] sm:$0xff]
      %v3728 = vld [vmem:[%s8 + $0x910] sm:$0xff]
      %v3729 = vld [vmem:[%s8 + $0x918] sm:$0xff]
      %v3730 = vld [vmem:[%s8 + $0x920] sm:$0xff]
      %v3731 = vld [vmem:[%s8 + $0x928] sm:$0xff]
      %v3732 = vld [vmem:[%s8 + $0x930] sm:$0xff]
      %v3733 = vld [vmem:[%s8 + $0x938] sm:$0xff]
      %v3734 = vld [vmem:[%s8 + $0x940] sm:$0xff]
      %v3735 = vld [vmem:[%s8 + $0x948] sm:$0xff]
      %v3736 = vld [vmem:[%s8 + $0x950] sm:$0xff]
      %v3737 = vld [vmem:[%s8 + $0x958] sm:$0xff]
      %v3738 = vld [vmem:[%s8 + $0x960] sm:$0xff]
      %v3739 = vld [vmem:[%s8 + $0x968] sm:$0xff]
      %v3740 = vld [vmem:[%s8 + $0x970] sm:$0xff]
      %v3741 = vld [vmem:[%s8 + $0x978] sm:$0xff]
      %v3742 = vld [vmem:[%s8 + $0x980] sm:$0xff]
      %v3743 = vld [vmem:[%s8 + $0x988] sm:$0xff]
      %v3744 = vld [vmem:[%s8 + $0x990] sm:$0xff]
      %v3745 = vld [vmem:[%s8 + $0x998] sm:$0xff]
      %v3746 = vld [vmem:[%s8 + $0x9a0] sm:$0xff]
      %v3747 = vld [vmem:[%s8 + $0x9a8] sm:$0xff]
      %v3748 = vld [vmem:[%s8 + $0x9b0] sm:$0xff]
      %v3749 = vld [vmem:[%s8 + $0x9b8] sm:$0xff]
      %v3750 = vld [vmem:[%s8 + $0x9c0] sm:$0xff]
      %v3751 = vld [vmem:[%s8 + $0x9c8] sm:$0xff]
      %v3752 = vld [vmem:[%s8 + $0x9d0] sm:$0xff]
      %v3753 = vld [vmem:[%s8 + $0x9d8] sm:$0xff]
      %v3754 = vld [vmem:[%s8 + $0x9e0] sm:$0xff]
      %v3755 = vld [vmem:[%s8 + $0x9e8] sm:$0xff]
      %v3756 = vld [vmem:[%s8 + $0x9f0] sm:$0xff]
      %v3757 = vld [vmem:[%s8 + $0x9f8] sm:$0xff]
      %v3758 = vld [vmem:[%s8 + $0xa00] sm:$0xff]
      %v3759 = vld [vmem:[%s8 + $0xa08] sm:$0xff]
      %v3760 = vld [vmem:[%s8 + $0xa10] sm:$0xff]
      %v3761 = vld [vmem:[%s8 + $0xa18] sm:$0xff]
      %v3762 = vld [vmem:[%s8 + $0xa20] sm:$0xff]
      %v3763 = vld [vmem:[%s8 + $0xa28] sm:$0xff]
      %v3764 = vld [vmem:[%s8 + $0xa30] sm:$0xff]
      %v3765 = vld [vmem:[%s8 + $0xa38] sm:$0xff]
      %v3766 = vld [vmem:[%s8 + $0xa40] sm:$0xff]
      %v3767 = vld [vmem:[%s8 + $0xa48] sm:$0xff]
      %v3768 = vld [vmem:[%s8 + $0xa50] sm:$0xff]
      %v3769 = vld [vmem:[%s8 + $0xa58] sm:$0xff]
      %v3770 = vld [vmem:[%s8 + $0xa60] sm:$0xff]
      %v3771 = vld [vmem:[%s8 + $0xa68] sm:$0xff]
      %v3772 = vld [vmem:[%s8 + $0xa70] sm:$0xff]
      %v3773 = vld [vmem:[%s8 + $0xa78] sm:$0xff]
      %v3774 = vld [vmem:[%s8 + $0xa80] sm:$0xff]
      %v3775 = vld [vmem:[%s8 + $0xa88] sm:$0xff]
      %v3776 = vld [vmem:[%s8 + $0xa90] sm:$0xff]
      %v3777 = vld [vmem:[%s8 + $0xa98] sm:$0xff]
      %v3778 = vld [vmem:[%s8 + $0xaa0] sm:$0xff]
      %v3779 = vld [vmem:[%s8 + $0xaa8] sm:$0xff]
      %v3780 = vld [vmem:[%s8 + $0xab0] sm:$0xff]
      %v3781 = vld [vmem:[%s8 + $0xab8] sm:$0xff]
      %v3782 = vld [vmem:[%s8 + $0xac0] sm:$0xff]
      %v3783 = vld [vmem:[%s8 + $0xac8] sm:$0xff]
      %v3784 = vld [vmem:[%s8 + $0xad0] sm:$0xff]
      %v3785 = vld [vmem:[%s8 + $0xad8] sm:$0xff]
      %v3786 = vld [vmem:[%s8 + $0xae0] sm:$0xff]
      %v3787 = vld [vmem:[%s8 + $0xae8] sm:$0xff]
      %v3788 = vld [vmem:[%s8 + $0xaf0] sm:$0xff]
      %v3789 = vld [vmem:[%s8 + $0xaf8] sm:$0xff]
      %v3790 = vld [vmem:[%s8 + $0xb00] sm:$0xff]
      %v3791 = vld [vmem:[%s8 + $0xb08] sm:$0xff]
      %v3792 = vld [vmem:[%s8 + $0xb10] sm:$0xff]
      %v3793 = vld [vmem:[%s8 + $0xb18] sm:$0xff]
      %v3794 = vld [vmem:[%s8 + $0xb20] sm:$0xff]
      %v3795 = vld [vmem:[%s8 + $0xb28] sm:$0xff]
      %v3796 = vld [vmem:[%s8 + $0xb30] sm:$0xff]
      %v3797 = vld [vmem:[%s8 + $0xb38] sm:$0xff]
      %v3798 = vld [vmem:[%s8 + $0xb40] sm:$0xff]
      %v3799 = vld [vmem:[%s8 + $0xb48] sm:$0xff]
      %v3800 = vld [vmem:[%s8 + $0xb50] sm:$0xff]
      %v3801 = vld [vmem:[%s8 + $0xb58] sm:$0xff]
      %v3802 = vld [vmem:[%s8 + $0xb60] sm:$0xff]
      %v3803 = vld [vmem:[%s8 + $0xb68] sm:$0xff]
      %v3804 = vld [vmem:[%s8 + $0xb70] sm:$0xff]
      %v3805 = vld [vmem:[%s8 + $0xb78] sm:$0xff]
      %v3806 = vld [vmem:[%s8 + $0xb80] sm:$0xff]
      %v3807 = vld [vmem:[%s8 + $0xb88] sm:$0xff]
      %v3808 = vld [vmem:[%s8 + $0xb90] sm:$0xff]
      %v3809 = vld [vmem:[%s8 + $0xb98] sm:$0xff]
      %v3810 = vld [vmem:[%s8 + $0xba0] sm:$0xff]
      %v3811 = vld [vmem:[%s8 + $0xba8] sm:$0xff]
      %v3812 = vld [vmem:[%s8 + $0xbb0] sm:$0xff]
      %v3813 = vld [vmem:[%s8 + $0xbb8] sm:$0xff]
      %v3814 = vld [vmem:[%s8 + $0xbc0] sm:$0xff]
      %v3815 = vld [vmem:[%s8 + $0xbc8] sm:$0xff]
      %v3816 = vld [vmem:[%s8 + $0xbd0] sm:$0xff]
      %v3817 = vld [vmem:[%s8 + $0xbd8] sm:$0xff]
      %v3818 = vld [vmem:[%s8 + $0xbe0] sm:$0xff]
      %v3819 = vld [vmem:[%s8 + $0xbe8] sm:$0xff]
      %v3820 = vld [vmem:[%s8 + $0xbf0] sm:$0xff]
      %v3821 = vld [vmem:[%s8 + $0xbf8] sm:$0xff]
      %v3822 = vld [vmem:[%s8 + $0xc00] sm:$0xff]
      %v3823 = vld [vmem:[%s8 + $0xc08] sm:$0xff]
      %v3824 = vld [vmem:[%s8 + $0xc10] sm:$0xff]
      %v3825 = vld [vmem:[%s8 + $0xc18] sm:$0xff]
      %v3826 = vld [vmem:[%s8 + $0xc20] sm:$0xff]
      %v3827 = vld [vmem:[%s8 + $0xc28] sm:$0xff]
      %v3828 = vld [vmem:[%s8 + $0xc30] sm:$0xff]
      %v3829 = vld [vmem:[%s8 + $0xc38] sm:$0xff]
      %v3830 = vld [vmem:[%s8 + $0xc40] sm:$0xff]
      %v3831 = vld [vmem:[%s8 + $0xc48] sm:$0xff]
      %v3832 = vld [vmem:[%s8 + $0xc50] sm:$0xff]
      %v3833 = vld [vmem:[%s8 + $0xc58] sm:$0xff]
      %v3834 = vld [vmem:[%s8 + $0xc60] sm:$0xff]
      %v3835 = vld [vmem:[%s8 + $0xc68] sm:$0xff]
      %v3836 = vld [vmem:[%s8 + $0xc70] sm:$0xff]
      %v3837 = vld [vmem:[%s8 + $0xc78] sm:$0xff]
      %v3838 = vld [vmem:[%s8 + $0xc80] sm:$0xff]
      %v3839 = vld [vmem:[%s8 + $0xc88] sm:$0xff]
      %v3840 = vld [vmem:[%s8 + $0xc90] sm:$0xff]
      %v3841 = vld [vmem:[%s8 + $0xc98] sm:$0xff]
      %v3842 = vld [vmem:[%s8 + $0xca0] sm:$0xff]
      %v3843 = vld [vmem:[%s8 + $0xca8] sm:$0xff]
      %v3844 = vld [vmem:[%s8 + $0xcb0] sm:$0xff]
      %v3845 = vld [vmem:[%s8 + $0xcb8] sm:$0xff]
      %v3846 = vld [vmem:[%s8 + $0xcc0] sm:$0xff]
      %v3847 = vld [vmem:[%s8 + $0xcc8] sm:$0xff]
      %v3848 = vld [vmem:[%s8 + $0xcd0] sm:$0xff]
      %v3849 = vld [vmem:[%s8 + $0xcd8] sm:$0xff]
      %v3850 = vld [vmem:[%s8 + $0xce0] sm:$0xff]
      %v3851 = vld [vmem:[%s8 + $0xce8] sm:$0xff]
      %v3852 = vld [vmem:[%s8 + $0xcf0] sm:$0xff]
      %v3853 = vld [vmem:[%s8 + $0xcf8] sm:$0xff]
      %v3854 = vld [vmem:[%s8 + $0xd00] sm:$0xff]
      %v3855 = vld [vmem:[%s8 + $0xd08] sm:$0xff]
      %v3856 = vld [vmem:[%s8 + $0xd10] sm:$0xff]
      %v3857 = vld [vmem:[%s8 + $0xd18] sm:$0xff]
      %v3858 = vld [vmem:[%s8 + $0xd20] sm:$0xff]
      %v3859 = vld [vmem:[%s8 + $0xd28] sm:$0xff]
      %v3860 = vld [vmem:[%s8 + $0xd30] sm:$0xff]
      %v3861 = vld [vmem:[%s8 + $0xd38] sm:$0xff]
      %v3862 = vld [vmem:[%s8 + $0xd40] sm:$0xff]
      %v3863 = vld [vmem:[%s8 + $0xd48] sm:$0xff]
      %v3864 = vld [vmem:[%s8 + $0xd50] sm:$0xff]
      %v3865 = vld [vmem:[%s8 + $0xd58] sm:$0xff]
      %v3866 = vld [vmem:[%s8 + $0xd60] sm:$0xff]
      %v3867 = vld [vmem:[%s8 + $0xd68] sm:$0xff]
      %v3868 = vld [vmem:[%s8 + $0xd70] sm:$0xff]
      %v3869 = vld [vmem:[%s8 + $0xd78] sm:$0xff]
      %v3870 = vld [vmem:[%s8 + $0xd80] sm:$0xff]
      %v3871 = vld [vmem:[%s8 + $0xd88] sm:$0xff]
      %v3872 = vld [vmem:[%s8 + $0xd90] sm:$0xff]
      %v3873 = vld [vmem:[%s8 + $0xd98] sm:$0xff]
      %v3874 = vld [vmem:[%s8 + $0xda0] sm:$0xff]
      %v3875 = vld [vmem:[%s8 + $0xda8] sm:$0xff]
      %v3876 = vld [vmem:[%s8 + $0xdb0] sm:$0xff]
      %v3877 = vld [vmem:[%s8 + $0xdb8] sm:$0xff]
      %v3878 = vld [vmem:[%s8 + $0xdc0] sm:$0xff]
      %v3879 = vld [vmem:[%s8 + $0xdc8] sm:$0xff]
      %v3880 = vld [vmem:[%s8 + $0xdd0] sm:$0xff]
      %v3881 = vld [vmem:[%s8 + $0xdd8] sm:$0xff]
      %v3882 = vld [vmem:[%s8 + $0xde0] sm:$0xff]
      %v3883 = vld [vmem:[%s8 + $0xde8] sm:$0xff]
      %v3884 = vld [vmem:[%s8 + $0xdf0] sm:$0xff]
      %v3885 = vld [vmem:[%s8 + $0xdf8] sm:$0xff]
      %v3886 = vld [vmem:[%s9] sm:$0x7f]
      %v3888 = vlaneseq
      %v3889 = vshrl.u32 %v3888, 7
      %v3890 = vsub.s32 0, %v3889
      %v3891 = vrot.slane %v3886, %v3890
      %v3892 = vlaneseq
      %v3893 = vshrl.u32 %v3892, 7
      %v3894 = vsub.s32 1, %v3893
      %v3895 = vrot.slane %v3886, %v3894
      %v3896 = vlaneseq
      %v3897 = vshrl.u32 %v3896, 7
      %v3898 = vsub.s32 2, %v3897
      %v3899 = vrot.slane %v3886, %v3898
      %v3900 = vlaneseq
      %v3901 = vshrl.u32 %v3900, 7
      %v3902 = vsub.s32 3, %v3901
      %v3903 = vrot.slane %v3886, %v3902
      %v3904 = vlaneseq
      %v3905 = vshrl.u32 %v3904, 7
      %v3906 = vsub.s32 4, %v3905
      %v3907 = vrot.slane %v3886, %v3906
      %v3908 = vlaneseq
      %v3909 = vshrl.u32 %v3908, 7
      %v3910 = vsub.s32 5, %v3909
      %v3911 = vrot.slane %v3886, %v3910
      %v3912 = vlaneseq
      %v3913 = vshrl.u32 %v3912, 7
      %v3914 = vsub.s32 6, %v3913
      %v3915 = vrot.slane %v3886, %v3914
      %3923 = vmatprep.subr.mxu0 %v3439
      %3924 = vmatpush1.msra.mxu0 %v3438
      %3925 = vmatprep.subr.mxu0 %v3446
      %3926 = vmatpush1.msra.mxu0 %v3445
      %3927 = vmatprep.subr.mxu0 %v3453
      %3928 = vmatpush1.msra.mxu0 %v3452
      %3929 = vmatprep.subr.mxu0 %v3460
      %3930 = vmatpush1.msra.mxu0 %v3459
      %3931 = vmatprep.subr.mxu0 %v3467
      %3932 = vmatpush1.msra.mxu0 %v3466
      %3933 = vmatprep.subr.mxu0 %v3474
      %3934 = vmatpush1.msra.mxu0 %v3473
      %3935 = vmatprep.subr.mxu0 %v3481
      %3936 = vmatpush1.msra.mxu0 %v3480
      %3937 = vmatprep.subr.mxu0 %v3488
      %3938 = vmatpush1.msra.mxu0 %v3487
      %3939 = vmatprep.subr.mxu0 %v3495
      %3940 = vmatpush1.msra.mxu0 %v3494
      %3941 = vmatprep.subr.mxu0 %v3502
      %3942 = vmatpush1.msra.mxu0 %v3501
      %3943 = vmatprep.subr.mxu0 %v3509
      %3944 = vmatpush1.msra.mxu0 %v3508
      %3945 = vmatprep.subr.mxu0 %v3516
      %3946 = vmatpush1.msra.mxu0 %v3515
      %3947 = vmatprep.subr.mxu0 %v3523
      %3948 = vmatpush1.msra.mxu0 %v3522
      %3949 = vmatprep.subr.mxu0 %v3530
      %3950 = vmatpush1.msra.mxu0 %v3529
      %3951 = vmatprep.subr.mxu0 %v3537
      %3952 = vmatpush1.msra.mxu0 %v3536
      %3953 = vmatprep.subr.mxu0 %v3544
      %3954 = vmatpush1.msra.mxu0 %v3543
      %3955 = vmatprep.subr.mxu0 %v3551
      %3956 = vmatpush1.msra.mxu0 %v3550
      %3957 = vmatprep.subr.mxu0 %v3558
      %3958 = vmatpush1.msra.mxu0 %v3557
      %3959 = vmatprep.subr.mxu0 %v3565
      %3960 = vmatpush1.msra.mxu0 %v3564
      %3961 = vmatprep.subr.mxu0 %v3572
      %3962 = vmatpush1.msra.mxu0 %v3571
      %3963 = vmatprep.subr.mxu0 %v3579
      %3964 = vmatpush1.msra.mxu0 %v3578
      %3965 = vmatprep.subr.mxu0 %v3586
      %3966 = vmatpush1.msra.mxu0 %v3585
      %3967 = vmatprep.subr.mxu0 %v3593
      %3968 = vmatpush1.msra.mxu0 %v3592
      %3969 = vmatprep.subr.mxu0 %v3600
      %3970 = vmatpush1.msra.mxu0 %v3599
      %3971 = vmatprep.subr.mxu0 %v3607
      %3972 = vmatpush1.msra.mxu0 %v3606
      %3973 = vmatprep.subr.mxu0 %v3614
      %3974 = vmatpush1.msra.mxu0 %v3613
      %3975 = vmatprep.subr.mxu0 %v3621
      %3976 = vmatpush1.msra.mxu0 %v3620
      %3977 = vmatprep.subr.mxu0 %v3628
      %3978 = vmatpush1.msra.mxu0 %v3627
      %3979 = vmatprep.subr.mxu0 %v3635
      %3980 = vmatpush1.msra.mxu0 %v3634
      %3981 = vmatprep.subr.mxu0 %v3642
      %3982 = vmatpush1.msra.mxu0 %v3641
      %3983 = vmatprep.subr.mxu0 %v3649
      %3984 = vmatpush1.msra.mxu0 %v3648
      %3985 = vmatprep.subr.mxu0 %v3656
      %3986 = vmatpush1.msra.mxu0 %v3655
      %3987 = vmatprep.mubr.f32.mxu0 %v3375
      %3988 = vmatmul.mubr.f32.gmra.mrb[0].mxu0 %v3374
      %v3989 = vpop.f32.mrb[0].mxu0
      %v3990 = vadd.f32 %v3891, %v3989
      %v3991 = vpop.f32.mrb[0].mxu0
      %v3992 = vadd.f32 %v3895, %v3991
      %3993 = vmatprep.mubr.f32.mxu0 %v3379
      %3994 = vmatmul.mubr.f32.gmra.mrb[0].mxu0 %v3378
      %v3995 = vpop.f32.mrb[0].mxu0
      %v3996 = vadd.f32 %v3891, %v3995
      %v3997 = vpop.f32.mrb[0].mxu0
      %v3998 = vadd.f32 %v3895, %v3997
      %3999 = vmatprep.mubr.f32.mxu0 %v3383
      %4000 = vmatmul.mubr.f32.gmra.mrb[0].mxu0 %v3382
      %v4001 = vpop.f32.mrb[0].mxu0
      %v4002 = vadd.f32 %v3891, %v4001
      %v4003 = vpop.f32.mrb[0].mxu0
      %v4004 = vadd.f32 %v3895, %v4003
      %4005 = vmatprep.mubr.f32.mxu0 %v3387
      %4006 = vmatmul.mubr.f32.gmra.mrb[0].mxu0 %v3386
      %v4007 = vpop.f32.mrb[0].mxu0
      %v4008 = vadd.f32 %v3891, %v4007
      %v4009 = vpop.f32.mrb[0].mxu0
      %v4010 = vadd.f32 %v3895, %v4009
      %4011 = vmatprep.mubr.f32.mxu0 %v3391
      %4012 = vmatmul.mubr.f32.gmra.mrb[0].mxu0 %v3390
      %v4013 = vpop.f32.mrb[0].mxu0
      %v4014 = vadd.f32 %v3891, %v4013
      %v4015 = vpop.f32.mrb[0].mxu0
      %v4016 = vadd.f32 %v3895, %v4015
      %4017 = vmatprep.mubr.f32.mxu0 %v3395
      %4018 = vmatmul.mubr.f32.gmra.mrb[0].mxu0 %v3394
      %v4019 = vpop.f32.mrb[0].mxu0
      %v4020 = vadd.f32 %v3891, %v4019
      %v4021 = vpop.f32.mrb[0].mxu0
      %v4022 = vadd.f32 %v3895, %v4021
      %4023 = vmatprep.mubr.f32.mxu0 %v3399
      %4024 = vmatmul.mubr.f32.gmra.mrb[0].mxu0 %v3398
      %v4025 = vpop.f32.mrb[0].mxu0
      %v4026 = vadd.f32 %v3891, %v4025
      %v4027 = vpop.f32.mrb[0].mxu0
      %v4028 = vadd.f32 %v3895, %v4027
      %4029 = vmatprep.mubr.f32.mxu0 %v3403
      %4030 = vmatmul.mubr.f32.gmra.mrb[0].mxu0 %v3402
      %v4031 = vpop.f32.mrb[0].mxu0
      %v4032 = vadd.f32 %v3891, %v4031
      %v4033 = vpop.f32.mrb[0].mxu0
      %v4034 = vadd.f32 %v3895, %v4033
      %4035 = vmatprep.mubr.f32.mxu0 %v3407
      %4036 = vmatmul.mubr.f32.gmra.mrb[0].mxu0 %v3406
      %v4037 = vpop.f32.mrb[0].mxu0
      %v4038 = vadd.f32 %v3891, %v4037
      %v4039 = vpop.f32.mrb[0].mxu0
      %v4040 = vadd.f32 %v3895, %v4039
      %4041 = vmatprep.mubr.f32.mxu0 %v3411
      %4042 = vmatmul.mubr.f32.gmra.mrb[0].mxu0 %v3410
      %v4043 = vpop.f32.mrb[0].mxu0
      %v4044 = vadd.f32 %v3891, %v4043
      %v4045 = vpop.f32.mrb[0].mxu0
      %v4046 = vadd.f32 %v3895, %v4045
      %4047 = vmatprep.mubr.f32.mxu0 %v3415
      %4048 = vmatmul.mubr.f32.gmra.mrb[0].mxu0 %v3414
      %v4049 = vpop.f32.mrb[0].mxu0
      %v4050 = vadd.f32 %v3891, %v4049
      %v4051 = vpop.f32.mrb[0].mxu0
      %v4052 = vadd.f32 %v3895, %v4051
      %4053 = vmatprep.mubr.f32.mxu0 %v3419
      %4054 = vmatmul.mubr.f32.gmra.mrb[0].mxu0 %v3418
      %v4055 = vpop.f32.mrb[0].mxu0
      %v4056 = vadd.f32 %v3891, %v4055
      %v4057 = vpop.f32.mrb[0].mxu0
      %v4058 = vadd.f32 %v3895, %v4057
      %4059 = vmatprep.mubr.f32.mxu0 %v3423
      %4060 = vmatmul.mubr.f32.gmra.mrb[0].mxu0 %v3422
      %v4061 = vpop.f32.mrb[0].mxu0
      %v4062 = vadd.f32 %v3891, %v4061
      %v4063 = vpop.f32.mrb[0].mxu0
      %v4064 = vadd.f32 %v3895, %v4063
      %4065 = vmatprep.mubr.f32.mxu0 %v3427
      %4066 = vmatmul.mubr.f32.gmra.mrb[0].mxu0 %v3426
      %v4067 = vpop.f32.mrb[0].mxu0
      %v4068 = vadd.f32 %v3891, %v4067
      %v4069 = vpop.f32.mrb[0].mxu0
      %v4070 = vadd.f32 %v3895, %v4069
      %4071 = vmatprep.mubr.f32.mxu0 %v3431
      %4072 = vmatmul.mubr.f32.gmra.mrb[0].mxu0 %v3430
      %v4073 = vpop.f32.mrb[0].mxu0
      %v4074 = vadd.f32 %v3891, %v4073
      %v4075 = vpop.f32.mrb[0].mxu0
      %v4076 = vadd.f32 %v3895, %v4075
      %4077 = vmatprep.mubr.f32.mxu0 %v3435
      %4078 = vmatmul.mubr.f32.gmra.mrb[0].mxu0 %v3434
      %v4079 = vpop.f32.mrb[0].mxu0
      %v4080 = vadd.f32 %v3891, %v4079
      %v4081 = vpop.f32.mrb[0].mxu0
      %v4082 = vadd.f32 %v3895, %v4081
      %4083 = vdwg.mxu0
      %4084 = vmatprep.subr.mxu0 %v3663
      %4085 = vmatpush1.msra.mxu0 %v3662
      %4086 = vmatprep.subr.mxu0 %v3670
      %4087 = vmatpush1.msra.mxu0 %v3669
      %4088 = vmatprep.subr.mxu0 %v3677
      %4089 = vmatpush1.msra.mxu0 %v3676
      %4090 = vmatprep.subr.mxu0 %v3684
      %4091 = vmatpush1.msra.mxu0 %v3683
      %4092 = vmatprep.subr.mxu0 %v3691
      %4093 = vmatpush1.msra.mxu0 %v3690
      %4094 = vmatprep.subr.mxu0 %v3698
      %4095 = vmatpush1.msra.mxu0 %v3697
      %4096 = vmatprep.subr.mxu0 %v3705
      %4097 = vmatpush1.msra.mxu0 %v3704
      %4098 = vmatprep.subr.mxu0 %v3712
      %4099 = vmatpush1.msra.mxu0 %v3711
      %4100 = vmatprep.subr.mxu0 %v3719
      %4101 = vmatpush1.msra.mxu0 %v3718
      %4102 = vmatprep.subr.mxu0 %v3726
      %4103 = vmatpush1.msra.mxu0 %v3725
      %4104 = vmatprep.subr.mxu0 %v3733
      %4105 = vmatpush1.msra.mxu0 %v3732
      %4106 = vmatprep.subr.mxu0 %v3740
      %4107 = vmatpush1.msra.mxu0 %v3739
      %4108 = vmatprep.subr.mxu0 %v3747
      %4109 = vmatpush1.msra.mxu0 %v3746
      %4110 = vmatprep.subr.mxu0 %v3754
      %4111 = vmatpush1.msra.mxu0 %v3753
      %4112 = vmatprep.subr.mxu0 %v3761
      %4113 = vmatpush1.msra.mxu0 %v3760
      %4114 = vmatprep.subr.mxu0 %v3768
      %4115 = vmatpush1.msra.mxu0 %v3767
      %4116 = vmatprep.subr.mxu0 %v3775
      %4117 = vmatpush1.msra.mxu0 %v3774
      %4118 = vmatprep.subr.mxu0 %v3782
      %4119 = vmatpush1.msra.mxu0 %v3781
      %4120 = vmatprep.subr.mxu0 %v3789
      %4121 = vmatpush1.msra.mxu0 %v3788
      %4122 = vmatprep.subr.mxu0 %v3796
      %4123 = vmatpush1.msra.mxu0 %v3795
      %4124 = vmatprep.subr.mxu0 %v3803
      %4125 = vmatpush1.msra.mxu0 %v3802
      %4126 = vmatprep.subr.mxu0 %v3810
      %4127 = vmatpush1.msra.mxu0 %v3809
      %4128 = vmatprep.subr.mxu0 %v3817
      %4129 = vmatpush1.msra.mxu0 %v3816
      %4130 = vmatprep.subr.mxu0 %v3824
      %4131 = vmatpush1.msra.mxu0 %v3823
      %4132 = vmatprep.subr.mxu0 %v3831
      %4133 = vmatpush1.msra.mxu0 %v3830
      %4134 = vmatprep.subr.mxu0 %v3838
      %4135 = vmatpush1.msra.mxu0 %v3837
      %4136 = vmatprep.subr.mxu0 %v3845
      %4137 = vmatpush1.msra.mxu0 %v3844
      %4138 = vmatprep.subr.mxu0 %v3852
      %4139 = vmatpush1.msra.mxu0 %v3851
      %4140 = vmatprep.subr.mxu0 %v3859
      %4141 = vmatpush1.msra.mxu0 %v3858
      %4142 = vmatprep.subr.mxu0 %v3866
      %4143 = vmatpush1.msra.mxu0 %v3865
      %4144 = vmatprep.subr.mxu0 %v3873
      %4145 = vmatpush1.msra.mxu0 %v3872
      %4146 = vmatprep.subr.mxu0 %v3880
      %4147 = vmatpush1.msra.mxu0 %v3879
      %4148 = vmatprep.mubr.f32.mxu0 %v3377
      %4149 = vmatmul.mubr.f32.gmra.mrb[0].mxu0 %v3376
      %v4150 = vpop.f32.mrb[0].mxu0
      %v4151 = vadd.f32 %v3990, %v4150
      %v4152 = vpop.f32.mrb[0].mxu0
      %v4153 = vadd.f32 %v3992, %v4152
      %4154 = vmatprep.mubr.f32.mxu0 %v3381
      %4155 = vmatmul.mubr.f32.gmra.mrb[0].mxu0 %v3380
      %v4156 = vpop.f32.mrb[0].mxu0
      %v4157 = vadd.f32 %v3996, %v4156
      %v4158 = vpop.f32.mrb[0].mxu0
      %v4159 = vadd.f32 %v3998, %v4158
      %4160 = vmatprep.mubr.f32.mxu0 %v3385
      %4161 = vmatmul.mubr.f32.gmra.mrb[0].mxu0 %v3384
      %v4162 = vpop.f32.mrb[0].mxu0
      %v4163 = vadd.f32 %v4002, %v4162
      %v4164 = vpop.f32.mrb[0].mxu0
      %v4165 = vadd.f32 %v4004, %v4164
      %4166 = vmatprep.mubr.f32.mxu0 %v3389
      %4167 = vmatmul.mubr.f32.gmra.mrb[0].mxu0 %v3388
      %v4168 = vpop.f32.mrb[0].mxu0
      %v4169 = vadd.f32 %v4008, %v4168
      %v4170 = vpop.f32.mrb[0].mxu0
      %v4171 = vadd.f32 %v4010, %v4170
      %4172 = vmatprep.mubr.f32.mxu0 %v3393
      %4173 = vmatmul.mubr.f32.gmra.mrb[0].mxu0 %v3392
      %v4174 = vpop.f32.mrb[0].mxu0
      %v4175 = vadd.f32 %v4014, %v4174
      %v4176 = vpop.f32.mrb[0].mxu0
      %v4177 = vadd.f32 %v4016, %v4176
      %4178 = vmatprep.mubr.f32.mxu0 %v3397
      %4179 = vmatmul.mubr.f32.gmra.mrb[0].mxu0 %v3396
      %v4180 = vpop.f32.mrb[0].mxu0
      %v4181 = vadd.f32 %v4020, %v4180
      %v4182 = vpop.f32.mrb[0].mxu0
      %v4183 = vadd.f32 %v4022, %v4182
      %4184 = vmatprep.mubr.f32.mxu0 %v3401
      %4185 = vmatmul.mubr.f32.gmra.mrb[0].mxu0 %v3400
      %v4186 = vpop.f32.mrb[0].mxu0
      %v4187 = vadd.f32 %v4026, %v4186
      %v4188 = vpop.f32.mrb[0].mxu0
      %v4189 = vadd.f32 %v4028, %v4188
      %4190 = vmatprep.mubr.f32.mxu0 %v3405
      %4191 = vmatmul.mubr.f32.gmra.mrb[0].mxu0 %v3404
      %v4192 = vpop.f32.mrb[0].mxu0
      %v4193 = vadd.f32 %v4032, %v4192
      %v4194 = vpop.f32.mrb[0].mxu0
      %v4195 = vadd.f32 %v4034, %v4194
      %4196 = vmatprep.mubr.f32.mxu0 %v3409
      %4197 = vmatmul.mubr.f32.gmra.mrb[0].mxu0 %v3408
      %v4198 = vpop.f32.mrb[0].mxu0
      %v4199 = vadd.f32 %v4038, %v4198
      %v4200 = vpop.f32.mrb[0].mxu0
      %v4201 = vadd.f32 %v4040, %v4200
      %4202 = vmatprep.mubr.f32.mxu0 %v3413
      %4203 = vmatmul.mubr.f32.gmra.mrb[0].mxu0 %v3412
      %v4204 = vpop.f32.mrb[0].mxu0
      %v4205 = vadd.f32 %v4044, %v4204
      %v4206 = vpop.f32.mrb[0].mxu0
      %v4207 = vadd.f32 %v4046, %v4206
      %4208 = vmatprep.mubr.f32.mxu0 %v3417
      %4209 = vmatmul.mubr.f32.gmra.mrb[0].mxu0 %v3416
      %v4210 = vpop.f32.mrb[0].mxu0
      %v4211 = vadd.f32 %v4050, %v4210
      %v4212 = vpop.f32.mrb[0].mxu0
      %v4213 = vadd.f32 %v4052, %v4212
      %4214 = vmatprep.mubr.f32.mxu0 %v3421
      %4215 = vmatmul.mubr.f32.gmra.mrb[0].mxu0 %v3420
      %v4216 = vpop.f32.mrb[0].mxu0
      %v4217 = vadd.f32 %v4056, %v4216
      %v4218 = vpop.f32.mrb[0].mxu0
      %v4219 = vadd.f32 %v4058, %v4218
      %4220 = vmatprep.mubr.f32.mxu0 %v3425
      %4221 = vmatmul.mubr.f32.gmra.mrb[0].mxu0 %v3424
      %v4222 = vpop.f32.mrb[0].mxu0
      %v4223 = vadd.f32 %v4062, %v4222
      %v4224 = vpop.f32.mrb[0].mxu0
      %v4225 = vadd.f32 %v4064, %v4224
      %4226 = vmatprep.mubr.f32.mxu0 %v3429
      %4227 = vmatmul.mubr.f32.gmra.mrb[0].mxu0 %v3428
      %v4228 = vpop.f32.mrb[0].mxu0
      %v4229 = vadd.f32 %v4068, %v4228
      %v4230 = vpop.f32.mrb[0].mxu0
      %v4231 = vadd.f32 %v4070, %v4230
      %4232 = vmatprep.mubr.f32.mxu0 %v3433
      %4233 = vmatmul.mubr.f32.gmra.mrb[0].mxu0 %v3432
      %v4234 = vpop.f32.mrb[0].mxu0
      %v4235 = vadd.f32 %v4074, %v4234
      %v4236 = vpop.f32.mrb[0].mxu0
      %v4237 = vadd.f32 %v4076, %v4236
      %4238 = vmatprep.mubr.f32.mxu0 %v3437
      %4239 = vmatmul.mubr.f32.gmra.mrb[0].mxu0 %v3436
      %v4240 = vpop.f32.mrb[0].mxu0
      %v4241 = vadd.f32 %v4080, %v4240
      %v4242 = vpop.f32.mrb[0].mxu0
      %v4243 = vadd.f32 %v4082, %v4242
      %4244 = vdwg.mxu0
      %4245 = vmatprep.subr.mxu0 %v3441
      %4246 = vmatpush1.msra.mxu0 %v3440
      %4247 = vmatprep.subr.mxu0 %v3448
      %4248 = vmatpush1.msra.mxu0 %v3447
      %4249 = vmatprep.subr.mxu0 %v3455
      %4250 = vmatpush1.msra.mxu0 %v3454
      %4251 = vmatprep.subr.mxu0 %v3462
      %4252 = vmatpush1.msra.mxu0 %v3461
      %4253 = vmatprep.subr.mxu0 %v3469
      %4254 = vmatpush1.msra.mxu0 %v3468
      %4255 = vmatprep.subr.mxu0 %v3476
      %4256 = vmatpush1.msra.mxu0 %v3475
      %4257 = vmatprep.subr.mxu0 %v3483
      %4258 = vmatpush1.msra.mxu0 %v3482
      %4259 = vmatprep.subr.mxu0 %v3490
      %4260 = vmatpush1.msra.mxu0 %v3489
      %4261 = vmatprep.subr.mxu0 %v3497
      %4262 = vmatpush1.msra.mxu0 %v3496
      %4263 = vmatprep.subr.mxu0 %v3504
      %4264 = vmatpush1.msra.mxu0 %v3503
      %4265 = vmatprep.subr.mxu0 %v3511
      %4266 = vmatpush1.msra.mxu0 %v3510
      %4267 = vmatprep.subr.mxu0 %v3518
      %4268 = vmatpush1.msra.mxu0 %v3517
      %4269 = vmatprep.subr.mxu0 %v3525
      %4270 = vmatpush1.msra.mxu0 %v3524
      %4271 = vmatprep.subr.mxu0 %v3532
      %4272 = vmatpush1.msra.mxu0 %v3531
      %4273 = vmatprep.subr.mxu0 %v3539
      %4274 = vmatpush1.msra.mxu0 %v3538
      %4275 = vmatprep.subr.mxu0 %v3546
      %4276 = vmatpush1.msra.mxu0 %v3545
      %4277 = vmatprep.subr.mxu0 %v3553
      %4278 = vmatpush1.msra.mxu0 %v3552
      %4279 = vmatprep.subr.mxu0 %v3560
      %4280 = vmatpush1.msra.mxu0 %v3559
      %4281 = vmatprep.subr.mxu0 %v3567
      %4282 = vmatpush1.msra.mxu0 %v3566
      %4283 = vmatprep.subr.mxu0 %v3574
      %4284 = vmatpush1.msra.mxu0 %v3573
      %4285 = vmatprep.subr.mxu0 %v3581
      %4286 = vmatpush1.msra.mxu0 %v3580
      %4287 = vmatprep.subr.mxu0 %v3588
      %4288 = vmatpush1.msra.mxu0 %v3587
      %4289 = vmatprep.subr.mxu0 %v3595
      %4290 = vmatpush1.msra.mxu0 %v3594
      %4291 = vmatprep.subr.mxu0 %v3602
      %4292 = vmatpush1.msra.mxu0 %v3601
      %4293 = vmatprep.subr.mxu0 %v3609
      %4294 = vmatpush1.msra.mxu0 %v3608
      %4295 = vmatprep.subr.mxu0 %v3616
      %4296 = vmatpush1.msra.mxu0 %v3615
      %4297 = vmatprep.subr.mxu0 %v3623
      %4298 = vmatpush1.msra.mxu0 %v3622
      %4299 = vmatprep.subr.mxu0 %v3630
      %4300 = vmatpush1.msra.mxu0 %v3629
      %4301 = vmatprep.subr.mxu0 %v3637
      %4302 = vmatpush1.msra.mxu0 %v3636
      %4303 = vmatprep.subr.mxu0 %v3644
      %4304 = vmatpush1.msra.mxu0 %v3643
      %4305 = vmatprep.subr.mxu0 %v3651
      %4306 = vmatpush1.msra.mxu0 %v3650
      %4307 = vmatprep.subr.mxu0 %v3658
      %4308 = vmatpush1.msra.mxu0 %v3657
      %4309 = vmatprep.mubr.f32.mxu0 %v3375
      %4310 = vmatmul.mubr.f32.gmra.mrb[0].mxu0 %v3374
      %v4311 = vpop.f32.mrb[0].mxu0
      %v4312 = vadd.f32 %v3899, %v4311
      %v4313 = vpop.f32.mrb[0].mxu0
      %v4314 = vadd.f32 %v3903, %v4313
      %4315 = vmatprep.mubr.f32.mxu0 %v3379
      %4316 = vmatmul.mubr.f32.gmra.mrb[0].mxu0 %v3378
      %v4317 = vpop.f32.mrb[0].mxu0
      %v4318 = vadd.f32 %v3899, %v4317
      %v4319 = vpop.f32.mrb[0].mxu0
      %v4320 = vadd.f32 %v3903, %v4319
      %4321 = vmatprep.mubr.f32.mxu0 %v3383
      %4322 = vmatmul.mubr.f32.gmra.mrb[0].mxu0 %v3382
      %v4323 = vpop.f32.mrb[0].mxu0
      %v4324 = vadd.f32 %v3899, %v4323
      %v4325 = vpop.f32.mrb[0].mxu0
      %v4326 = vadd.f32 %v3903, %v4325
      %4327 = vmatprep.mubr.f32.mxu0 %v3387
      %4328 = vmatmul.mubr.f32.gmra.mrb[0].mxu0 %v3386
      %v4329 = vpop.f32.mrb[0].mxu0
      %v4330 = vadd.f32 %v3899, %v4329
      %v4331 = vpop.f32.mrb[0].mxu0
      %v4332 = vadd.f32 %v3903, %v4331
      %4333 = vmatprep.mubr.f32.mxu0 %v3391
      %4334 = vmatmul.mubr.f32.gmra.mrb[0].mxu0 %v3390
      %v4335 = vpop.f32.mrb[0].mxu0
      %v4336 = vadd.f32 %v3899, %v4335
      %v4337 = vpop.f32.mrb[0].mxu0
      %v4338 = vadd.f32 %v3903, %v4337
      %4339 = vmatprep.mubr.f32.mxu0 %v3395
      %4340 = vmatmul.mubr.f32.gmra.mrb[0].mxu0 %v3394
      %v4341 = vpop.f32.mrb[0].mxu0
      %v4342 = vadd.f32 %v3899, %v4341
      %v4343 = vpop.f32.mrb[0].mxu0
      %v4344 = vadd.f32 %v3903, %v4343
      %4345 = vmatprep.mubr.f32.mxu0 %v3399
      %4346 = vmatmul.mubr.f32.gmra.mrb[0].mxu0 %v3398
      %v4347 = vpop.f32.mrb[0].mxu0
      %v4348 = vadd.f32 %v3899, %v4347
      %v4349 = vpop.f32.mrb[0].mxu0
      %v4350 = vadd.f32 %v3903, %v4349
      %4351 = vmatprep.mubr.f32.mxu0 %v3403
      %4352 = vmatmul.mubr.f32.gmra.mrb[0].mxu0 %v3402
      %v4353 = vpop.f32.mrb[0].mxu0
      %v4354 = vadd.f32 %v3899, %v4353
      %v4355 = vpop.f32.mrb[0].mxu0
      %v4356 = vadd.f32 %v3903, %v4355
      %4357 = vmatprep.mubr.f32.mxu0 %v3407
      %4358 = vmatmul.mubr.f32.gmra.mrb[0].mxu0 %v3406
      %v4359 = vpop.f32.mrb[0].mxu0
      %v4360 = vadd.f32 %v3899, %v4359
      %v4361 = vpop.f32.mrb[0].mxu0
      %v4362 = vadd.f32 %v3903, %v4361
      %4363 = vmatprep.mubr.f32.mxu0 %v3411
      %4364 = vmatmul.mubr.f32.gmra.mrb[0].mxu0 %v3410
      %v4365 = vpop.f32.mrb[0].mxu0
      %v4366 = vadd.f32 %v3899, %v4365
      %v4367 = vpop.f32.mrb[0].mxu0
      %v4368 = vadd.f32 %v3903, %v4367
      %4369 = vmatprep.mubr.f32.mxu0 %v3415
      %4370 = vmatmul.mubr.f32.gmra.mrb[0].mxu0 %v3414
      %v4371 = vpop.f32.mrb[0].mxu0
      %v4372 = vadd.f32 %v3899, %v4371
      %v4373 = vpop.f32.mrb[0].mxu0
      %v4374 = vadd.f32 %v3903, %v4373
      %4375 = vmatprep.mubr.f32.mxu0 %v3419
      %4376 = vmatmul.mubr.f32.gmra.mrb[0].mxu0 %v3418
      %v4377 = vpop.f32.mrb[0].mxu0
      %v4378 = vadd.f32 %v3899, %v4377
      %v4379 = vpop.f32.mrb[0].mxu0
      %v4380 = vadd.f32 %v3903, %v4379
      %4381 = vmatprep.mubr.f32.mxu0 %v3423
      %4382 = vmatmul.mubr.f32.gmra.mrb[0].mxu0 %v3422
      %v4383 = vpop.f32.mrb[0].mxu0
      %v4384 = vadd.f32 %v3899, %v4383
      %v4385 = vpop.f32.mrb[0].mxu0
      %v4386 = vadd.f32 %v3903, %v4385
      %4387 = vmatprep.mubr.f32.mxu0 %v3427
      %4388 = vmatmul.mubr.f32.gmra.mrb[0].mxu0 %v3426
      %v4389 = vpop.f32.mrb[0].mxu0
      %v4390 = vadd.f32 %v3899, %v4389
      %v4391 = vpop.f32.mrb[0].mxu0
      %v4392 = vadd.f32 %v3903, %v4391
      %4393 = vmatprep.mubr.f32.mxu0 %v3431
      %4394 = vmatmul.mubr.f32.gmra.mrb[0].mxu0 %v3430
      %v4395 = vpop.f32.mrb[0].mxu0
      %v4396 = vadd.f32 %v3899, %v4395
      %v4397 = vpop.f32.mrb[0].mxu0
      %v4398 = vadd.f32 %v3903, %v4397
      %4399 = vmatprep.mubr.f32.mxu0 %v3435
      %4400 = vmatmul.mubr.f32.gmra.mrb[0].mxu0 %v3434
      %v4401 = vpop.f32.mrb[0].mxu0
      %v4402 = vadd.f32 %v3899, %v4401
      %v4403 = vpop.f32.mrb[0].mxu0
      %v4404 = vadd.f32 %v3903, %v4403
      %4405 = vdwg.mxu0
      %4406 = vmatprep.subr.mxu0 %v3665
      %4407 = vmatpush1.msra.mxu0 %v3664
      %4408 = vmatprep.subr.mxu0 %v3672
      %4409 = vmatpush1.msra.mxu0 %v3671
      %4410 = vmatprep.subr.mxu0 %v3679
      %4411 = vmatpush1.msra.mxu0 %v3678
      %4412 = vmatprep.subr.mxu0 %v3686
      %4413 = vmatpush1.msra.mxu0 %v3685
      %4414 = vmatprep.subr.mxu0 %v3693
      %4415 = vmatpush1.msra.mxu0 %v3692
      %4416 = vmatprep.subr.mxu0 %v3700
      %4417 = vmatpush1.msra.mxu0 %v3699
      %4418 = vmatprep.subr.mxu0 %v3707
      %4419 = vmatpush1.msra.mxu0 %v3706
      %4420 = vmatprep.subr.mxu0 %v3714
      %4421 = vmatpush1.msra.mxu0 %v3713
      %4422 = vmatprep.subr.mxu0 %v3721
      %4423 = vmatpush1.msra.mxu0 %v3720
      %4424 = vmatprep.subr.mxu0 %v3728
      %4425 = vmatpush1.msra.mxu0 %v3727
      %4426 = vmatprep.subr.mxu0 %v3735
      %4427 = vmatpush1.msra.mxu0 %v3734
      %4428 = vmatprep.subr.mxu0 %v3742
      %4429 = vmatpush1.msra.mxu0 %v3741
      %4430 = vmatprep.subr.mxu0 %v3749
      %4431 = vmatpush1.msra.mxu0 %v3748
      %4432 = vmatprep.subr.mxu0 %v3756
      %4433 = vmatpush1.msra.mxu0 %v3755
      %4434 = vmatprep.subr.mxu0 %v3763
      %4435 = vmatpush1.msra.mxu0 %v3762
      %4436 = vmatprep.subr.mxu0 %v3770
      %4437 = vmatpush1.msra.mxu0 %v3769
      %4438 = vmatprep.subr.mxu0 %v3777
      %4439 = vmatpush1.msra.mxu0 %v3776
      %4440 = vmatprep.subr.mxu0 %v3784
      %4441 = vmatpush1.msra.mxu0 %v3783
      %4442 = vmatprep.subr.mxu0 %v3791
      %4443 = vmatpush1.msra.mxu0 %v3790
      %4444 = vmatprep.subr.mxu0 %v3798
      %4445 = vmatpush1.msra.mxu0 %v3797
      %4446 = vmatprep.subr.mxu0 %v3805
      %4447 = vmatpush1.msra.mxu0 %v3804
      %4448 = vmatprep.subr.mxu0 %v3812
      %4449 = vmatpush1.msra.mxu0 %v3811
      %4450 = vmatprep.subr.mxu0 %v3819
      %4451 = vmatpush1.msra.mxu0 %v3818
      %4452 = vmatprep.subr.mxu0 %v3826
      %4453 = vmatpush1.msra.mxu0 %v3825
      %4454 = vmatprep.subr.mxu0 %v3833
      %4455 = vmatpush1.msra.mxu0 %v3832
      %4456 = vmatprep.subr.mxu0 %v3840
      %4457 = vmatpush1.msra.mxu0 %v3839
      %4458 = vmatprep.subr.mxu0 %v3847
      %4459 = vmatpush1.msra.mxu0 %v3846
      %4460 = vmatprep.subr.mxu0 %v3854
      %4461 = vmatpush1.msra.mxu0 %v3853
      %4462 = vmatprep.subr.mxu0 %v3861
      %4463 = vmatpush1.msra.mxu0 %v3860
      %4464 = vmatprep.subr.mxu0 %v3868
      %4465 = vmatpush1.msra.mxu0 %v3867
      %4466 = vmatprep.subr.mxu0 %v3875
      %4467 = vmatpush1.msra.mxu0 %v3874
      %4468 = vmatprep.subr.mxu0 %v3882
      %4469 = vmatpush1.msra.mxu0 %v3881
      %4470 = vmatprep.mubr.f32.mxu0 %v3377
      %4471 = vmatmul.mubr.f32.gmra.mrb[0].mxu0 %v3376
      %v4472 = vpop.f32.mrb[0].mxu0
      %v4473 = vadd.f32 %v4312, %v4472
      %v4474 = vpop.f32.mrb[0].mxu0
      %v4475 = vadd.f32 %v4314, %v4474
      %4476 = vmatprep.mubr.f32.mxu0 %v3381
      %4477 = vmatmul.mubr.f32.gmra.mrb[0].mxu0 %v3380
      %v4478 = vpop.f32.mrb[0].mxu0
      %v4479 = vadd.f32 %v4318, %v4478
      %v4480 = vpop.f32.mrb[0].mxu0
      %v4481 = vadd.f32 %v4320, %v4480
      %4482 = vmatprep.mubr.f32.mxu0 %v3385
      %4483 = vmatmul.mubr.f32.gmra.mrb[0].mxu0 %v3384
      %v4484 = vpop.f32.mrb[0].mxu0
      %v4485 = vadd.f32 %v4324, %v4484
      %v4486 = vpop.f32.mrb[0].mxu0
      %v4487 = vadd.f32 %v4326, %v4486
      %4488 = vmatprep.mubr.f32.mxu0 %v3389
      %4489 = vmatmul.mubr.f32.gmra.mrb[0].mxu0 %v3388
      %v4490 = vpop.f32.mrb[0].mxu0
      %v4491 = vadd.f32 %v4330, %v4490
      %v4492 = vpop.f32.mrb[0].mxu0
      %v4493 = vadd.f32 %v4332, %v4492
      %4494 = vmatprep.mubr.f32.mxu0 %v3393
      %4495 = vmatmul.mubr.f32.gmra.mrb[0].mxu0 %v3392
      %v4496 = vpop.f32.mrb[0].mxu0
      %v4497 = vadd.f32 %v4336, %v4496
      %v4498 = vpop.f32.mrb[0].mxu0
      %v4499 = vadd.f32 %v4338, %v4498
      %4500 = vmatprep.mubr.f32.mxu0 %v3397
      %4501 = vmatmul.mubr.f32.gmra.mrb[0].mxu0 %v3396
      %v4502 = vpop.f32.mrb[0].mxu0
      %v4503 = vadd.f32 %v4342, %v4502
      %v4504 = vpop.f32.mrb[0].mxu0
      %v4505 = vadd.f32 %v4344, %v4504
      %4506 = vmatprep.mubr.f32.mxu0 %v3401
      %4507 = vmatmul.mubr.f32.gmra.mrb[0].mxu0 %v3400
      %v4508 = vpop.f32.mrb[0].mxu0
      %v4509 = vadd.f32 %v4348, %v4508
      %v4510 = vpop.f32.mrb[0].mxu0
      %v4511 = vadd.f32 %v4350, %v4510
      %4512 = vmatprep.mubr.f32.mxu0 %v3405
      %4513 = vmatmul.mubr.f32.gmra.mrb[0].mxu0 %v3404
      %v4514 = vpop.f32.mrb[0].mxu0
      %v4515 = vadd.f32 %v4354, %v4514
      %v4516 = vpop.f32.mrb[0].mxu0
      %v4517 = vadd.f32 %v4356, %v4516
      %4518 = vmatprep.mubr.f32.mxu0 %v3409
      %4519 = vmatmul.mubr.f32.gmra.mrb[0].mxu0 %v3408
      %v4520 = vpop.f32.mrb[0].mxu0
      %v4521 = vadd.f32 %v4360, %v4520
      %v4522 = vpop.f32.mrb[0].mxu0
      %v4523 = vadd.f32 %v4362, %v4522
      %4524 = vmatprep.mubr.f32.mxu0 %v3413
      %4525 = vmatmul.mubr.f32.gmra.mrb[0].mxu0 %v3412
      %v4526 = vpop.f32.mrb[0].mxu0
      %v4527 = vadd.f32 %v4366, %v4526
      %v4528 = vpop.f32.mrb[0].mxu0
      %v4529 = vadd.f32 %v4368, %v4528
      %4530 = vmatprep.mubr.f32.mxu0 %v3417
      %4531 = vmatmul.mubr.f32.gmra.mrb[0].mxu0 %v3416
      %v4532 = vpop.f32.mrb[0].mxu0
      %v4533 = vadd.f32 %v4372, %v4532
      %v4534 = vpop.f32.mrb[0].mxu0
      %v4535 = vadd.f32 %v4374, %v4534
      %4536 = vmatprep.mubr.f32.mxu0 %v3421
      %4537 = vmatmul.mubr.f32.gmra.mrb[0].mxu0 %v3420
      %v4538 = vpop.f32.mrb[0].mxu0
      %v4539 = vadd.f32 %v4378, %v4538
      %v4540 = vpop.f32.mrb[0].mxu0
      %v4541 = vadd.f32 %v4380, %v4540
      %4542 = vmatprep.mubr.f32.mxu0 %v3425
      %4543 = vmatmul.mubr.f32.gmra.mrb[0].mxu0 %v3424
      %v4544 = vpop.f32.mrb[0].mxu0
      %v4545 = vadd.f32 %v4384, %v4544
      %v4546 = vpop.f32.mrb[0].mxu0
      %v4547 = vadd.f32 %v4386, %v4546
      %4548 = vmatprep.mubr.f32.mxu0 %v3429
      %4549 = vmatmul.mubr.f32.gmra.mrb[0].mxu0 %v3428
      %v4550 = vpop.f32.mrb[0].mxu0
      %v4551 = vadd.f32 %v4390, %v4550
      %v4552 = vpop.f32.mrb[0].mxu0
      %v4553 = vadd.f32 %v4392, %v4552
      %4554 = vmatprep.mubr.f32.mxu0 %v3433
      %4555 = vmatmul.mubr.f32.gmra.mrb[0].mxu0 %v3432
      %v4556 = vpop.f32.mrb[0].mxu0
      %v4557 = vadd.f32 %v4396, %v4556
      %v4558 = vpop.f32.mrb[0].mxu0
      %v4559 = vadd.f32 %v4398, %v4558
      %4560 = vmatprep.mubr.f32.mxu0 %v3437
      %4561 = vmatmul.mubr.f32.gmra.mrb[0].mxu0 %v3436
      %v4562 = vpop.f32.mrb[0].mxu0
      %v4563 = vadd.f32 %v4402, %v4562
      %v4564 = vpop.f32.mrb[0].mxu0
      %v4565 = vadd.f32 %v4404, %v4564
      %4566 = vdwg.mxu0
      %4567 = vmatprep.subr.mxu0 %v3443
      %4568 = vmatpush1.msra.mxu0 %v3442
      %4569 = vmatprep.subr.mxu0 %v3450
      %4570 = vmatpush1.msra.mxu0 %v3449
      %4571 = vmatprep.subr.mxu0 %v3457
      %4572 = vmatpush1.msra.mxu0 %v3456
      %4573 = vmatprep.subr.mxu0 %v3464
      %4574 = vmatpush1.msra.mxu0 %v3463
      %4575 = vmatprep.subr.mxu0 %v3471
      %4576 = vmatpush1.msra.mxu0 %v3470
      %4577 = vmatprep.subr.mxu0 %v3478
      %4578 = vmatpush1.msra.mxu0 %v3477
      %4579 = vmatprep.subr.mxu0 %v3485
      %4580 = vmatpush1.msra.mxu0 %v3484
      %4581 = vmatprep.subr.mxu0 %v3492
      %4582 = vmatpush1.msra.mxu0 %v3491
      %4583 = vmatprep.subr.mxu0 %v3499
      %4584 = vmatpush1.msra.mxu0 %v3498
      %4585 = vmatprep.subr.mxu0 %v3506
      %4586 = vmatpush1.msra.mxu0 %v3505
      %4587 = vmatprep.subr.mxu0 %v3513
      %4588 = vmatpush1.msra.mxu0 %v3512
      %4589 = vmatprep.subr.mxu0 %v3520
      %4590 = vmatpush1.msra.mxu0 %v3519
      %4591 = vmatprep.subr.mxu0 %v3527
      %4592 = vmatpush1.msra.mxu0 %v3526
      %4593 = vmatprep.subr.mxu0 %v3534
      %4594 = vmatpush1.msra.mxu0 %v3533
      %4595 = vmatprep.subr.mxu0 %v3541
      %4596 = vmatpush1.msra.mxu0 %v3540
      %4597 = vmatprep.subr.mxu0 %v3548
      %4598 = vmatpush1.msra.mxu0 %v3547
      %4599 = vmatprep.subr.mxu0 %v3555
      %4600 = vmatpush1.msra.mxu0 %v3554
      %4601 = vmatprep.subr.mxu0 %v3562
      %4602 = vmatpush1.msra.mxu0 %v3561
      %4603 = vmatprep.subr.mxu0 %v3569
      %4604 = vmatpush1.msra.mxu0 %v3568
      %4605 = vmatprep.subr.mxu0 %v3576
      %4606 = vmatpush1.msra.mxu0 %v3575
      %4607 = vmatprep.subr.mxu0 %v3583
      %4608 = vmatpush1.msra.mxu0 %v3582
      %4609 = vmatprep.subr.mxu0 %v3590
      %4610 = vmatpush1.msra.mxu0 %v3589
      %4611 = vmatprep.subr.mxu0 %v3597
      %4612 = vmatpush1.msra.mxu0 %v3596
      %4613 = vmatprep.subr.mxu0 %v3604
      %4614 = vmatpush1.msra.mxu0 %v3603
      %4615 = vmatprep.subr.mxu0 %v3611
      %4616 = vmatpush1.msra.mxu0 %v3610
      %4617 = vmatprep.subr.mxu0 %v3618
      %4618 = vmatpush1.msra.mxu0 %v3617
      %4619 = vmatprep.subr.mxu0 %v3625
      %4620 = vmatpush1.msra.mxu0 %v3624
      %4621 = vmatprep.subr.mxu0 %v3632
      %4622 = vmatpush1.msra.mxu0 %v3631
      %4623 = vmatprep.subr.mxu0 %v3639
      %4624 = vmatpush1.msra.mxu0 %v3638
      %4625 = vmatprep.subr.mxu0 %v3646
      %4626 = vmatpush1.msra.mxu0 %v3645
      %4627 = vmatprep.subr.mxu0 %v3653
      %4628 = vmatpush1.msra.mxu0 %v3652
      %4629 = vmatprep.subr.mxu0 %v3660
      %4630 = vmatpush1.msra.mxu0 %v3659
      %4631 = vmatprep.mubr.f32.mxu0 %v3375
      %4632 = vmatmul.mubr.f32.gmra.mrb[0].mxu0 %v3374
      %v4633 = vpop.f32.mrb[0].mxu0
      %v4634 = vadd.f32 %v3907, %v4633
      %v4635 = vpop.f32.mrb[0].mxu0
      %v4636 = vadd.f32 %v3911, %v4635
      %4637 = vmatprep.mubr.f32.mxu0 %v3379
      %4638 = vmatmul.mubr.f32.gmra.mrb[0].mxu0 %v3378
      %v4639 = vpop.f32.mrb[0].mxu0
      %v4640 = vadd.f32 %v3907, %v4639
      %v4641 = vpop.f32.mrb[0].mxu0
      %v4642 = vadd.f32 %v3911, %v4641
      %4643 = vmatprep.mubr.f32.mxu0 %v3383
      %4644 = vmatmul.mubr.f32.gmra.mrb[0].mxu0 %v3382
      %v4645 = vpop.f32.mrb[0].mxu0
      %v4646 = vadd.f32 %v3907, %v4645
      %v4647 = vpop.f32.mrb[0].mxu0
      %v4648 = vadd.f32 %v3911, %v4647
      %4649 = vmatprep.mubr.f32.mxu0 %v3387
      %4650 = vmatmul.mubr.f32.gmra.mrb[0].mxu0 %v3386
      %v4651 = vpop.f32.mrb[0].mxu0
      %v4652 = vadd.f32 %v3907, %v4651
      %v4653 = vpop.f32.mrb[0].mxu0
      %v4654 = vadd.f32 %v3911, %v4653
      %4655 = vmatprep.mubr.f32.mxu0 %v3391
      %4656 = vmatmul.mubr.f32.gmra.mrb[0].mxu0 %v3390
      %v4657 = vpop.f32.mrb[0].mxu0
      %v4658 = vadd.f32 %v3907, %v4657
      %v4659 = vpop.f32.mrb[0].mxu0
      %v4660 = vadd.f32 %v3911, %v4659
      %4661 = vmatprep.mubr.f32.mxu0 %v3395
      %4662 = vmatmul.mubr.f32.gmra.mrb[0].mxu0 %v3394
      %v4663 = vpop.f32.mrb[0].mxu0
      %v4664 = vadd.f32 %v3907, %v4663
      %v4665 = vpop.f32.mrb[0].mxu0
      %v4666 = vadd.f32 %v3911, %v4665
      %4667 = vmatprep.mubr.f32.mxu0 %v3399
      %4668 = vmatmul.mubr.f32.gmra.mrb[0].mxu0 %v3398
      %v4669 = vpop.f32.mrb[0].mxu0
      %v4670 = vadd.f32 %v3907, %v4669
      %v4671 = vpop.f32.mrb[0].mxu0
      %v4672 = vadd.f32 %v3911, %v4671
      %4673 = vmatprep.mubr.f32.mxu0 %v3403
      %4674 = vmatmul.mubr.f32.gmra.mrb[0].mxu0 %v3402
      %v4675 = vpop.f32.mrb[0].mxu0
      %v4676 = vadd.f32 %v3907, %v4675
      %v4677 = vpop.f32.mrb[0].mxu0
      %v4678 = vadd.f32 %v3911, %v4677
      %4679 = vmatprep.mubr.f32.mxu0 %v3407
      %4680 = vmatmul.mubr.f32.gmra.mrb[0].mxu0 %v3406
      %v4681 = vpop.f32.mrb[0].mxu0
      %v4682 = vadd.f32 %v3907, %v4681
      %v4683 = vpop.f32.mrb[0].mxu0
      %v4684 = vadd.f32 %v3911, %v4683
      %4685 = vmatprep.mubr.f32.mxu0 %v3411
      %4686 = vmatmul.mubr.f32.gmra.mrb[0].mxu0 %v3410
      %v4687 = vpop.f32.mrb[0].mxu0
      %v4688 = vadd.f32 %v3907, %v4687
      %v4689 = vpop.f32.mrb[0].mxu0
      %v4690 = vadd.f32 %v3911, %v4689
      %4691 = vmatprep.mubr.f32.mxu0 %v3415
      %4692 = vmatmul.mubr.f32.gmra.mrb[0].mxu0 %v3414
      %v4693 = vpop.f32.mrb[0].mxu0
      %v4694 = vadd.f32 %v3907, %v4693
      %v4695 = vpop.f32.mrb[0].mxu0
      %v4696 = vadd.f32 %v3911, %v4695
      %4697 = vmatprep.mubr.f32.mxu0 %v3419
      %4698 = vmatmul.mubr.f32.gmra.mrb[0].mxu0 %v3418
      %v4699 = vpop.f32.mrb[0].mxu0
      %v4700 = vadd.f32 %v3907, %v4699
      %v4701 = vpop.f32.mrb[0].mxu0
      %v4702 = vadd.f32 %v3911, %v4701
      %4703 = vmatprep.mubr.f32.mxu0 %v3423
      %4704 = vmatmul.mubr.f32.gmra.mrb[0].mxu0 %v3422
      %v4705 = vpop.f32.mrb[0].mxu0
      %v4706 = vadd.f32 %v3907, %v4705
      %v4707 = vpop.f32.mrb[0].mxu0
      %v4708 = vadd.f32 %v3911, %v4707
      %4709 = vmatprep.mubr.f32.mxu0 %v3427
      %4710 = vmatmul.mubr.f32.gmra.mrb[0].mxu0 %v3426
      %v4711 = vpop.f32.mrb[0].mxu0
      %v4712 = vadd.f32 %v3907, %v4711
      %v4713 = vpop.f32.mrb[0].mxu0
      %v4714 = vadd.f32 %v3911, %v4713
      %4715 = vmatprep.mubr.f32.mxu0 %v3431
      %4716 = vmatmul.mubr.f32.gmra.mrb[0].mxu0 %v3430
      %v4717 = vpop.f32.mrb[0].mxu0
      %v4718 = vadd.f32 %v3907, %v4717
      %v4719 = vpop.f32.mrb[0].mxu0
      %v4720 = vadd.f32 %v3911, %v4719
      %4721 = vmatprep.mubr.f32.mxu0 %v3435
      %4722 = vmatmul.mubr.f32.gmra.mrb[0].mxu0 %v3434
      %v4723 = vpop.f32.mrb[0].mxu0
      %v4724 = vadd.f32 %v3907, %v4723
      %v4725 = vpop.f32.mrb[0].mxu0
      %v4726 = vadd.f32 %v3911, %v4725
      %4727 = vdwg.mxu0
      %4728 = vmatprep.subr.mxu0 %v3667
      %4729 = vmatpush1.msra.mxu0 %v3666
      %4730 = vmatprep.subr.mxu0 %v3674
      %4731 = vmatpush1.msra.mxu0 %v3673
      %4732 = vmatprep.subr.mxu0 %v3681
      %4733 = vmatpush1.msra.mxu0 %v3680
      %4734 = vmatprep.subr.mxu0 %v3688
      %4735 = vmatpush1.msra.mxu0 %v3687
      %4736 = vmatprep.subr.mxu0 %v3695
      %4737 = vmatpush1.msra.mxu0 %v3694
      %4738 = vmatprep.subr.mxu0 %v3702
      %4739 = vmatpush1.msra.mxu0 %v3701
      %4740 = vmatprep.subr.mxu0 %v3709
      %4741 = vmatpush1.msra.mxu0 %v3708
      %4742 = vmatprep.subr.mxu0 %v3716
      %4743 = vmatpush1.msra.mxu0 %v3715
      %4744 = vmatprep.subr.mxu0 %v3723
      %4745 = vmatpush1.msra.mxu0 %v3722
      %4746 = vmatprep.subr.mxu0 %v3730
      %4747 = vmatpush1.msra.mxu0 %v3729
      %4748 = vmatprep.subr.mxu0 %v3737
      %4749 = vmatpush1.msra.mxu0 %v3736
      %4750 = vmatprep.subr.mxu0 %v3744
      %4751 = vmatpush1.msra.mxu0 %v3743
      %4752 = vmatprep.subr.mxu0 %v3751
      %4753 = vmatpush1.msra.mxu0 %v3750
      %4754 = vmatprep.subr.mxu0 %v3758
      %4755 = vmatpush1.msra.mxu0 %v3757
      %4756 = vmatprep.subr.mxu0 %v3765
      %4757 = vmatpush1.msra.mxu0 %v3764
      %4758 = vmatprep.subr.mxu0 %v3772
      %4759 = vmatpush1.msra.mxu0 %v3771
      %4760 = vmatprep.subr.mxu0 %v3779
      %4761 = vmatpush1.msra.mxu0 %v3778
      %4762 = vmatprep.subr.mxu0 %v3786
      %4763 = vmatpush1.msra.mxu0 %v3785
      %4764 = vmatprep.subr.mxu0 %v3793
      %4765 = vmatpush1.msra.mxu0 %v3792
      %4766 = vmatprep.subr.mxu0 %v3800
      %4767 = vmatpush1.msra.mxu0 %v3799
      %4768 = vmatprep.subr.mxu0 %v3807
      %4769 = vmatpush1.msra.mxu0 %v3806
      %4770 = vmatprep.subr.mxu0 %v3814
      %4771 = vmatpush1.msra.mxu0 %v3813
      %4772 = vmatprep.subr.mxu0 %v3821
      %4773 = vmatpush1.msra.mxu0 %v3820
      %4774 = vmatprep.subr.mxu0 %v3828
      %4775 = vmatpush1.msra.mxu0 %v3827
      %4776 = vmatprep.subr.mxu0 %v3835
      %4777 = vmatpush1.msra.mxu0 %v3834
      %4778 = vmatprep.subr.mxu0 %v3842
      %4779 = vmatpush1.msra.mxu0 %v3841
      %4780 = vmatprep.subr.mxu0 %v3849
      %4781 = vmatpush1.msra.mxu0 %v3848
      %4782 = vmatprep.subr.mxu0 %v3856
      %4783 = vmatpush1.msra.mxu0 %v3855
      %4784 = vmatprep.subr.mxu0 %v3863
      %4785 = vmatpush1.msra.mxu0 %v3862
      %4786 = vmatprep.subr.mxu0 %v3870
      %4787 = vmatpush1.msra.mxu0 %v3869
      %4788 = vmatprep.subr.mxu0 %v3877
      %4789 = vmatpush1.msra.mxu0 %v3876
      %4790 = vmatprep.subr.mxu0 %v3884
      %4791 = vmatpush1.msra.mxu0 %v3883
      %4792 = vmatprep.mubr.f32.mxu0 %v3377
      %4793 = vmatmul.mubr.f32.gmra.mrb[0].mxu0 %v3376
      %v4794 = vpop.f32.mrb[0].mxu0
      %v4795 = vadd.f32 %v4634, %v4794
      %v4796 = vpop.f32.mrb[0].mxu0
      %v4797 = vadd.f32 %v4636, %v4796
      %4798 = vmatprep.mubr.f32.mxu0 %v3381
      %4799 = vmatmul.mubr.f32.gmra.mrb[0].mxu0 %v3380
      %v4800 = vpop.f32.mrb[0].mxu0
      %v4801 = vadd.f32 %v4640, %v4800
      %v4802 = vpop.f32.mrb[0].mxu0
      %v4803 = vadd.f32 %v4642, %v4802
      %4804 = vmatprep.mubr.f32.mxu0 %v3385
      %4805 = vmatmul.mubr.f32.gmra.mrb[0].mxu0 %v3384
      %v4806 = vpop.f32.mrb[0].mxu0
      %v4807 = vadd.f32 %v4646, %v4806
      %v4808 = vpop.f32.mrb[0].mxu0
      %v4809 = vadd.f32 %v4648, %v4808
      %4810 = vmatprep.mubr.f32.mxu0 %v3389
      %4811 = vmatmul.mubr.f32.gmra.mrb[0].mxu0 %v3388
      %v4812 = vpop.f32.mrb[0].mxu0
      %v4813 = vadd.f32 %v4652, %v4812
      %v4814 = vpop.f32.mrb[0].mxu0
      %v4815 = vadd.f32 %v4654, %v4814
      %4816 = vmatprep.mubr.f32.mxu0 %v3393
      %4817 = vmatmul.mubr.f32.gmra.mrb[0].mxu0 %v3392
      %v4818 = vpop.f32.mrb[0].mxu0
      %v4819 = vadd.f32 %v4658, %v4818
      %v4820 = vpop.f32.mrb[0].mxu0
      %v4821 = vadd.f32 %v4660, %v4820
      %4822 = vmatprep.mubr.f32.mxu0 %v3397
      %4823 = vmatmul.mubr.f32.gmra.mrb[0].mxu0 %v3396
      %v4824 = vpop.f32.mrb[0].mxu0
      %v4825 = vadd.f32 %v4664, %v4824
      %v4826 = vpop.f32.mrb[0].mxu0
      %v4827 = vadd.f32 %v4666, %v4826
      %4828 = vmatprep.mubr.f32.mxu0 %v3401
      %4829 = vmatmul.mubr.f32.gmra.mrb[0].mxu0 %v3400
      %v4830 = vpop.f32.mrb[0].mxu0
      %v4831 = vadd.f32 %v4670, %v4830
      %v4832 = vpop.f32.mrb[0].mxu0
      %v4833 = vadd.f32 %v4672, %v4832
      %4834 = vmatprep.mubr.f32.mxu0 %v3405
      %4835 = vmatmul.mubr.f32.gmra.mrb[0].mxu0 %v3404
      %v4836 = vpop.f32.mrb[0].mxu0
      %v4837 = vadd.f32 %v4676, %v4836
      %v4838 = vpop.f32.mrb[0].mxu0
      %v4839 = vadd.f32 %v4678, %v4838
      %4840 = vmatprep.mubr.f32.mxu0 %v3409
      %4841 = vmatmul.mubr.f32.gmra.mrb[0].mxu0 %v3408
      %v4842 = vpop.f32.mrb[0].mxu0
      %v4843 = vadd.f32 %v4682, %v4842
      %v4844 = vpop.f32.mrb[0].mxu0
      %v4845 = vadd.f32 %v4684, %v4844
      %4846 = vmatprep.mubr.f32.mxu0 %v3413
      %4847 = vmatmul.mubr.f32.gmra.mrb[0].mxu0 %v3412
      %v4848 = vpop.f32.mrb[0].mxu0
      %v4849 = vadd.f32 %v4688, %v4848
      %v4850 = vpop.f32.mrb[0].mxu0
      %v4851 = vadd.f32 %v4690, %v4850
      %4852 = vmatprep.mubr.f32.mxu0 %v3417
      %4853 = vmatmul.mubr.f32.gmra.mrb[0].mxu0 %v3416
      %v4854 = vpop.f32.mrb[0].mxu0
      %v4855 = vadd.f32 %v4694, %v4854
      %v4856 = vpop.f32.mrb[0].mxu0
      %v4857 = vadd.f32 %v4696, %v4856
      %4858 = vmatprep.mubr.f32.mxu0 %v3421
      %4859 = vmatmul.mubr.f32.gmra.mrb[0].mxu0 %v3420
      %v4860 = vpop.f32.mrb[0].mxu0
      %v4861 = vadd.f32 %v4700, %v4860
      %v4862 = vpop.f32.mrb[0].mxu0
      %v4863 = vadd.f32 %v4702, %v4862
      %4864 = vmatprep.mubr.f32.mxu0 %v3425
      %4865 = vmatmul.mubr.f32.gmra.mrb[0].mxu0 %v3424
      %v4866 = vpop.f32.mrb[0].mxu0
      %v4867 = vadd.f32 %v4706, %v4866
      %v4868 = vpop.f32.mrb[0].mxu0
      %v4869 = vadd.f32 %v4708, %v4868
      %4870 = vmatprep.mubr.f32.mxu0 %v3429
      %4871 = vmatmul.mubr.f32.gmra.mrb[0].mxu0 %v3428
      %v4872 = vpop.f32.mrb[0].mxu0
      %v4873 = vadd.f32 %v4712, %v4872
      %v4874 = vpop.f32.mrb[0].mxu0
      %v4875 = vadd.f32 %v4714, %v4874
      %4876 = vmatprep.mubr.f32.mxu0 %v3433
      %4877 = vmatmul.mubr.f32.gmra.mrb[0].mxu0 %v3432
      %v4878 = vpop.f32.mrb[0].mxu0
      %v4879 = vadd.f32 %v4718, %v4878
      %v4880 = vpop.f32.mrb[0].mxu0
      %v4881 = vadd.f32 %v4720, %v4880
      %4882 = vmatprep.mubr.f32.mxu0 %v3437
      %4883 = vmatmul.mubr.f32.gmra.mrb[0].mxu0 %v3436
      %v4884 = vpop.f32.mrb[0].mxu0
      %v4885 = vadd.f32 %v4724, %v4884
      %v4886 = vpop.f32.mrb[0].mxu0
      %v4887 = vadd.f32 %v4726, %v4886
      %4888 = vdwg.mxu0
      %4889 = vmatprep.subr.mxu0 0.0
      %4890 = vmatpush1.msra.mxu0 %v3444
      %4891 = vmatprep.subr.mxu0 0.0
      %4892 = vmatpush1.msra.mxu0 %v3451
      %4893 = vmatprep.subr.mxu0 0.0
      %4894 = vmatpush1.msra.mxu0 %v3458
      %4895 = vmatprep.subr.mxu0 0.0
      %4896 = vmatpush1.msra.mxu0 %v3465
      %4897 = vmatprep.subr.mxu0 0.0
      %4898 = vmatpush1.msra.mxu0 %v3472
      %4899 = vmatprep.subr.mxu0 0.0
      %4900 = vmatpush1.msra.mxu0 %v3479
      %4901 = vmatprep.subr.mxu0 0.0
      %4902 = vmatpush1.msra.mxu0 %v3486
      %4903 = vmatprep.subr.mxu0 0.0
      %4904 = vmatpush1.msra.mxu0 %v3493
      %4905 = vmatprep.subr.mxu0 0.0
      %4906 = vmatpush1.msra.mxu0 %v3500
      %4907 = vmatprep.subr.mxu0 0.0
      %4908 = vmatpush1.msra.mxu0 %v3507
      %4909 = vmatprep.subr.mxu0 0.0
      %4910 = vmatpush1.msra.mxu0 %v3514
      %4911 = vmatprep.subr.mxu0 0.0
      %4912 = vmatpush1.msra.mxu0 %v3521
      %4913 = vmatprep.subr.mxu0 0.0
      %4914 = vmatpush1.msra.mxu0 %v3528
      %4915 = vmatprep.subr.mxu0 0.0
      %4916 = vmatpush1.msra.mxu0 %v3535
      %4917 = vmatprep.subr.mxu0 0.0
      %4918 = vmatpush1.msra.mxu0 %v3542
      %4919 = vmatprep.subr.mxu0 0.0
      %4920 = vmatpush1.msra.mxu0 %v3549
      %4921 = vmatprep.subr.mxu0 0.0
      %4922 = vmatpush1.msra.mxu0 %v3556
      %4923 = vmatprep.subr.mxu0 0.0
      %4924 = vmatpush1.msra.mxu0 %v3563
      %4925 = vmatprep.subr.mxu0 0.0
      %4926 = vmatpush1.msra.mxu0 %v3570
      %4927 = vmatprep.subr.mxu0 0.0
      %4928 = vmatpush1.msra.mxu0 %v3577
      %4929 = vmatprep.subr.mxu0 0.0
      %4930 = vmatpush1.msra.mxu0 %v3584
      %4931 = vmatprep.subr.mxu0 0.0
      %4932 = vmatpush1.msra.mxu0 %v3591
      %4933 = vmatprep.subr.mxu0 0.0
      %4934 = vmatpush1.msra.mxu0 %v3598
      %4935 = vmatprep.subr.mxu0 0.0
      %4936 = vmatpush1.msra.mxu0 %v3605
      %4937 = vmatprep.subr.mxu0 0.0
      %4938 = vmatpush1.msra.mxu0 %v3612
      %4939 = vmatprep.subr.mxu0 0.0
      %4940 = vmatpush1.msra.mxu0 %v3619
      %4941 = vmatprep.subr.mxu0 0.0
      %4942 = vmatpush1.msra.mxu0 %v3626
      %4943 = vmatprep.subr.mxu0 0.0
      %4944 = vmatpush1.msra.mxu0 %v3633
      %4945 = vmatprep.subr.mxu0 0.0
      %4946 = vmatpush1.msra.mxu0 %v3640
      %4947 = vmatprep.subr.mxu0 0.0
      %4948 = vmatpush1.msra.mxu0 %v3647
      %4949 = vmatprep.subr.mxu0 0.0
      %4950 = vmatpush1.msra.mxu0 %v3654
      %4951 = vmatprep.subr.mxu0 0.0
      %4952 = vmatpush1.msra.mxu0 %v3661
      %4953 = vmatprep.mubr.f32.mxu0 %v3375
      %4954 = vmatmul.mubr.f32.gmra.mrb[0].mxu0 %v3374
      %v4955 = vpop.f32.mrb[0].mxu0
      %v4956 = vadd.f32 %v3915, %v4955
      %v4957 = vpop.f32.mrb[0].mxu0
      %4958 = vmatprep.mubr.f32.mxu0 %v3379
      %4959 = vmatmul.mubr.f32.gmra.mrb[0].mxu0 %v3378
      %v4960 = vpop.f32.mrb[0].mxu0
      %v4961 = vadd.f32 %v3915, %v4960
      %v4962 = vpop.f32.mrb[0].mxu0
      %4963 = vmatprep.mubr.f32.mxu0 %v3383
      %4964 = vmatmul.mubr.f32.gmra.mrb[0].mxu0 %v3382
      %v4965 = vpop.f32.mrb[0].mxu0
      %v4966 = vadd.f32 %v3915, %v4965
      %v4967 = vpop.f32.mrb[0].mxu0
      %4968 = vmatprep.mubr.f32.mxu0 %v3387
      %4969 = vmatmul.mubr.f32.gmra.mrb[0].mxu0 %v3386
      %v4970 = vpop.f32.mrb[0].mxu0
      %v4971 = vadd.f32 %v3915, %v4970
      %v4972 = vpop.f32.mrb[0].mxu0
      %4973 = vmatprep.mubr.f32.mxu0 %v3391
      %4974 = vmatmul.mubr.f32.gmra.mrb[0].mxu0 %v3390
      %v4975 = vpop.f32.mrb[0].mxu0
      %v4976 = vadd.f32 %v3915, %v4975
      %v4977 = vpop.f32.mrb[0].mxu0
      %4978 = vmatprep.mubr.f32.mxu0 %v3395
      %4979 = vmatmul.mubr.f32.gmra.mrb[0].mxu0 %v3394
      %v4980 = vpop.f32.mrb[0].mxu0
      %v4981 = vadd.f32 %v3915, %v4980
      %v4982 = vpop.f32.mrb[0].mxu0
      %4983 = vmatprep.mubr.f32.mxu0 %v3399
      %4984 = vmatmul.mubr.f32.gmra.mrb[0].mxu0 %v3398
      %v4985 = vpop.f32.mrb[0].mxu0
      %v4986 = vadd.f32 %v3915, %v4985
      %v4987 = vpop.f32.mrb[0].mxu0
      %4988 = vmatprep.mubr.f32.mxu0 %v3403
      %4989 = vmatmul.mubr.f32.gmra.mrb[0].mxu0 %v3402
      %v4990 = vpop.f32.mrb[0].mxu0
      %v4991 = vadd.f32 %v3915, %v4990
      %v4992 = vpop.f32.mrb[0].mxu0
      %4993 = vmatprep.mubr.f32.mxu0 %v3407
      %4994 = vmatmul.mubr.f32.gmra.mrb[0].mxu0 %v3406
      %v4995 = vpop.f32.mrb[0].mxu0
      %v4996 = vadd.f32 %v3915, %v4995
      %v4997 = vpop.f32.mrb[0].mxu0
      %4998 = vmatprep.mubr.f32.mxu0 %v3411
      %4999 = vmatmul.mubr.f32.gmra.mrb[0].mxu0 %v3410
      %v5000 = vpop.f32.mrb[0].mxu0
      %v5001 = vadd.f32 %v3915, %v5000
      %v5002 = vpop.f32.mrb[0].mxu0
      %5003 = vmatprep.mubr.f32.mxu0 %v3415
      %5004 = vmatmul.mubr.f32.gmra.mrb[0].mxu0 %v3414
      %v5005 = vpop.f32.mrb[0].mxu0
      %v5006 = vadd.f32 %v3915, %v5005
      %v5007 = vpop.f32.mrb[0].mxu0
      %5008 = vmatprep.mubr.f32.mxu0 %v3419
      %5009 = vmatmul.mubr.f32.gmra.mrb[0].mxu0 %v3418
      %v5010 = vpop.f32.mrb[0].mxu0
      %v5011 = vadd.f32 %v3915, %v5010
      %v5012 = vpop.f32.mrb[0].mxu0
      %5013 = vmatprep.mubr.f32.mxu0 %v3423
      %5014 = vmatmul.mubr.f32.gmra.mrb[0].mxu0 %v3422
      %v5015 = vpop.f32.mrb[0].mxu0
      %v5016 = vadd.f32 %v3915, %v5015
      %v5017 = vpop.f32.mrb[0].mxu0
      %5018 = vmatprep.mubr.f32.mxu0 %v3427
      %5019 = vmatmul.mubr.f32.gmra.mrb[0].mxu0 %v3426
      %v5020 = vpop.f32.mrb[0].mxu0
      %v5021 = vadd.f32 %v3915, %v5020
      %v5022 = vpop.f32.mrb[0].mxu0
      %5023 = vmatprep.mubr.f32.mxu0 %v3431
      %5024 = vmatmul.mubr.f32.gmra.mrb[0].mxu0 %v3430
      %v5025 = vpop.f32.mrb[0].mxu0
      %v5026 = vadd.f32 %v3915, %v5025
      %v5027 = vpop.f32.mrb[0].mxu0
      %5028 = vmatprep.mubr.f32.mxu0 %v3435
      %5029 = vmatmul.mubr.f32.gmra.mrb[0].mxu0 %v3434
      %v5030 = vpop.f32.mrb[0].mxu0
      %v5031 = vadd.f32 %v3915, %v5030
      %v5032 = vpop.f32.mrb[0].mxu0
      %5033 = vdwg.mxu0
      %5034 = vmatprep.subr.mxu0 0.0
      %5035 = vmatpush1.msra.mxu0 %v3668
      %5036 = vmatprep.subr.mxu0 0.0
      %5037 = vmatpush1.msra.mxu0 %v3675
      %5038 = vmatprep.subr.mxu0 0.0
      %5039 = vmatpush1.msra.mxu0 %v3682
      %5040 = vmatprep.subr.mxu0 0.0
      %5041 = vmatpush1.msra.mxu0 %v3689
      %5042 = vmatprep.subr.mxu0 0.0
      %5043 = vmatpush1.msra.mxu0 %v3696
      %5044 = vmatprep.subr.mxu0 0.0
      %5045 = vmatpush1.msra.mxu0 %v3703
      %5046 = vmatprep.subr.mxu0 0.0
      %5047 = vmatpush1.msra.mxu0 %v3710
      %5048 = vmatprep.subr.mxu0 0.0
      %5049 = vmatpush1.msra.mxu0 %v3717
      %5050 = vmatprep.subr.mxu0 0.0
      %5051 = vmatpush1.msra.mxu0 %v3724
      %5052 = vmatprep.subr.mxu0 0.0
      %5053 = vmatpush1.msra.mxu0 %v3731
      %5054 = vmatprep.subr.mxu0 0.0
      %5055 = vmatpush1.msra.mxu0 %v3738
      %5056 = vmatprep.subr.mxu0 0.0
      %5057 = vmatpush1.msra.mxu0 %v3745
      %5058 = vmatprep.subr.mxu0 0.0
      %5059 = vmatpush1.msra.mxu0 %v3752
      %5060 = vmatprep.subr.mxu0 0.0
      %5061 = vmatpush1.msra.mxu0 %v3759
      %5062 = vmatprep.subr.mxu0 0.0
      %5063 = vmatpush1.msra.mxu0 %v3766
      %5064 = vmatprep.subr.mxu0 0.0
      %5065 = vmatpush1.msra.mxu0 %v3773
      %5066 = vmatprep.subr.mxu0 0.0
      %5067 = vmatpush1.msra.mxu0 %v3780
      %5068 = vmatprep.subr.mxu0 0.0
      %5069 = vmatpush1.msra.mxu0 %v3787
      %5070 = vmatprep.subr.mxu0 0.0
      %5071 = vmatpush1.msra.mxu0 %v3794
      %5072 = vmatprep.subr.mxu0 0.0
      %5073 = vmatpush1.msra.mxu0 %v3801
      %5074 = vmatprep.subr.mxu0 0.0
      %5075 = vmatpush1.msra.mxu0 %v3808
      %5076 = vmatprep.subr.mxu0 0.0
      %5077 = vmatpush1.msra.mxu0 %v3815
      %5078 = vmatprep.subr.mxu0 0.0
      %5079 = vmatpush1.msra.mxu0 %v3822
      %5080 = vmatprep.subr.mxu0 0.0
      %5081 = vmatpush1.msra.mxu0 %v3829
      %5082 = vmatprep.subr.mxu0 0.0
      %5083 = vmatpush1.msra.mxu0 %v3836
      %5084 = vmatprep.subr.mxu0 0.0
      %5085 = vmatpush1.msra.mxu0 %v3843
      %5086 = vmatprep.subr.mxu0 0.0
      %5087 = vmatpush1.msra.mxu0 %v3850
      %5088 = vmatprep.subr.mxu0 0.0
      %5089 = vmatpush1.msra.mxu0 %v3857
      %5090 = vmatprep.subr.mxu0 0.0
      %5091 = vmatpush1.msra.mxu0 %v3864
      %5092 = vmatprep.subr.mxu0 0.0
      %5093 = vmatpush1.msra.mxu0 %v3871
      %5094 = vmatprep.subr.mxu0 0.0
      %5095 = vmatpush1.msra.mxu0 %v3878
      %5096 = vmatprep.subr.mxu0 0.0
      %5097 = vmatpush1.msra.mxu0 %v3885
      %5098 = vmatprep.mubr.f32.mxu0 %v3377
      %5099 = vmatmul.mubr.f32.gmra.mrb[0].mxu0 %v3376
      %v5100 = vpop.f32.mrb[0].mxu0
      %v5101 = vadd.f32 %v4956, %v5100
      %v5102 = vpop.f32.mrb[0].mxu0
      %5103 = vmatprep.mubr.f32.mxu0 %v3381
      %5104 = vmatmul.mubr.f32.gmra.mrb[0].mxu0 %v3380
      %v5105 = vpop.f32.mrb[0].mxu0
      %v5106 = vadd.f32 %v4961, %v5105
      %v5107 = vpop.f32.mrb[0].mxu0
      %5108 = vmatprep.mubr.f32.mxu0 %v3385
      %5109 = vmatmul.mubr.f32.gmra.mrb[0].mxu0 %v3384
      %v5110 = vpop.f32.mrb[0].mxu0
      %v5111 = vadd.f32 %v4966, %v5110
      %v5112 = vpop.f32.mrb[0].mxu0
      %5113 = vmatprep.mubr.f32.mxu0 %v3389
      %5114 = vmatmul.mubr.f32.gmra.mrb[0].mxu0 %v3388
      %v5115 = vpop.f32.mrb[0].mxu0
      %v5116 = vadd.f32 %v4971, %v5115
      %v5117 = vpop.f32.mrb[0].mxu0
      %5118 = vmatprep.mubr.f32.mxu0 %v3393
      %5119 = vmatmul.mubr.f32.gmra.mrb[0].mxu0 %v3392
      %v5120 = vpop.f32.mrb[0].mxu0
      %v5121 = vadd.f32 %v4976, %v5120
      %v5122 = vpop.f32.mrb[0].mxu0
      %5123 = vmatprep.mubr.f32.mxu0 %v3397
      %5124 = vmatmul.mubr.f32.gmra.mrb[0].mxu0 %v3396
      %v5125 = vpop.f32.mrb[0].mxu0
      %v5126 = vadd.f32 %v4981, %v5125
      %v5127 = vpop.f32.mrb[0].mxu0
      %5128 = vmatprep.mubr.f32.mxu0 %v3401
      %5129 = vmatmul.mubr.f32.gmra.mrb[0].mxu0 %v3400
      %v5130 = vpop.f32.mrb[0].mxu0
      %v5131 = vadd.f32 %v4986, %v5130
      %v5132 = vpop.f32.mrb[0].mxu0
      %5133 = vmatprep.mubr.f32.mxu0 %v3405
      %5134 = vmatmul.mubr.f32.gmra.mrb[0].mxu0 %v3404
      %v5135 = vpop.f32.mrb[0].mxu0
      %v5136 = vadd.f32 %v4991, %v5135
      %v5137 = vpop.f32.mrb[0].mxu0
      %5138 = vmatprep.mubr.f32.mxu0 %v3409
      %5139 = vmatmul.mubr.f32.gmra.mrb[0].mxu0 %v3408
      %v5140 = vpop.f32.mrb[0].mxu0
      %v5141 = vadd.f32 %v4996, %v5140
      %v5142 = vpop.f32.mrb[0].mxu0
      %5143 = vmatprep.mubr.f32.mxu0 %v3413
      %5144 = vmatmul.mubr.f32.gmra.mrb[0].mxu0 %v3412
      %v5145 = vpop.f32.mrb[0].mxu0
      %v5146 = vadd.f32 %v5001, %v5145
      %v5147 = vpop.f32.mrb[0].mxu0
      %5148 = vmatprep.mubr.f32.mxu0 %v3417
      %5149 = vmatmul.mubr.f32.gmra.mrb[0].mxu0 %v3416
      %v5150 = vpop.f32.mrb[0].mxu0
      %v5151 = vadd.f32 %v5006, %v5150
      %v5152 = vpop.f32.mrb[0].mxu0
      %5153 = vmatprep.mubr.f32.mxu0 %v3421
      %5154 = vmatmul.mubr.f32.gmra.mrb[0].mxu0 %v3420
      %v5155 = vpop.f32.mrb[0].mxu0
      %v5156 = vadd.f32 %v5011, %v5155
      %v5157 = vpop.f32.mrb[0].mxu0
      %5158 = vmatprep.mubr.f32.mxu0 %v3425
      %5159 = vmatmul.mubr.f32.gmra.mrb[0].mxu0 %v3424
      %v5160 = vpop.f32.mrb[0].mxu0
      %v5161 = vadd.f32 %v5016, %v5160
      %v5162 = vpop.f32.mrb[0].mxu0
      %5163 = vmatprep.mubr.f32.mxu0 %v3429
      %5164 = vmatmul.mubr.f32.gmra.mrb[0].mxu0 %v3428
      %v5165 = vpop.f32.mrb[0].mxu0
      %v5166 = vadd.f32 %v5021, %v5165
      %v5167 = vpop.f32.mrb[0].mxu0
      %5168 = vmatprep.mubr.f32.mxu0 %v3433
      %5169 = vmatmul.mubr.f32.gmra.mrb[0].mxu0 %v3432
      %v5170 = vpop.f32.mrb[0].mxu0
      %v5171 = vadd.f32 %v5026, %v5170
      %v5172 = vpop.f32.mrb[0].mxu0
      %5173 = vmatprep.mubr.f32.mxu0 %v3437
      %5174 = vmatmul.mubr.f32.gmra.mrb[0].mxu0 %v3436
      %v5175 = vpop.f32.mrb[0].mxu0
      %v5176 = vadd.f32 %v5031, %v5175
      %v5177 = vpop.f32.mrb[0].mxu0
      %5178 = vdwg.mxu0
      %v5179 = vtanh.pop %v4151
      %v5180 = vtanh.pop %v4153
      %v5181 = vtanh.pop %v4473
      %v5182 = vtanh.pop %v4475
      %v5183 = vtanh.pop %v4795
      %v5184 = vtanh.pop %v4797
      %v5185 = vtanh.pop %v5101
      %v5186 = vtanh.pop %v4157
      %v5187 = vtanh.pop %v4159
      %v5188 = vtanh.pop %v4479
      %v5189 = vtanh.pop %v4481
      %v5190 = vtanh.pop %v4801
      %v5191 = vtanh.pop %v4803
      %v5192 = vtanh.pop %v5106
      %v5193 = vtanh.pop %v4163
      %v5194 = vtanh.pop %v4165
      %v5195 = vtanh.pop %v4485
      %v5196 = vtanh.pop %v4487
      %v5197 = vtanh.pop %v4807
      %v5198 = vtanh.pop %v4809
      %v5199 = vtanh.pop %v5111
      %v5200 = vtanh.pop %v4169
      %v5201 = vtanh.pop %v4171
      %v5202 = vtanh.pop %v4491
      %v5203 = vtanh.pop %v4493
      %v5204 = vtanh.pop %v4813
      %v5205 = vtanh.pop %v4815
      %v5206 = vtanh.pop %v5116
      %v5207 = vtanh.pop %v4175
      %v5208 = vtanh.pop %v4177
      %v5209 = vtanh.pop %v4497
      %v5210 = vtanh.pop %v4499
      %v5211 = vtanh.pop %v4819
      %v5212 = vtanh.pop %v4821
      %v5213 = vtanh.pop %v5121
      %v5214 = vtanh.pop %v4181
      %v5215 = vtanh.pop %v4183
      %v5216 = vtanh.pop %v4503
      %v5217 = vtanh.pop %v4505
      %v5218 = vtanh.pop %v4825
      %v5219 = vtanh.pop %v4827
      %v5220 = vtanh.pop %v5126
      %v5221 = vtanh.pop %v4187
      %v5222 = vtanh.pop %v4189
      %v5223 = vtanh.pop %v4509
      %v5224 = vtanh.pop %v4511
      %v5225 = vtanh.pop %v4831
      %v5226 = vtanh.pop %v4833
      %v5227 = vtanh.pop %v5131
      %v5228 = vtanh.pop %v4193
      %v5229 = vtanh.pop %v4195
      %v5230 = vtanh.pop %v4515
      %v5231 = vtanh.pop %v4517
      %v5232 = vtanh.pop %v4837
      %v5233 = vtanh.pop %v4839
      %v5234 = vtanh.pop %v5136
      %v5235 = vtanh.pop %v4199
      %v5236 = vtanh.pop %v4201
      %v5237 = vtanh.pop %v4521
      %v5238 = vtanh.pop %v4523
      %v5239 = vtanh.pop %v4843
      %v5240 = vtanh.pop %v4845
      %v5241 = vtanh.pop %v5141
      %v5242 = vtanh.pop %v4205
      %v5243 = vtanh.pop %v4207
      %v5244 = vtanh.pop %v4527
      %v5245 = vtanh.pop %v4529
      %v5246 = vtanh.pop %v4849
      %v5247 = vtanh.pop %v4851
      %v5248 = vtanh.pop %v5146
      %v5249 = vtanh.pop %v4211
      %v5250 = vtanh.pop %v4213
      %v5251 = vtanh.pop %v4533
      %v5252 = vtanh.pop %v4535
      %v5253 = vtanh.pop %v4855
      %v5254 = vtanh.pop %v4857
      %v5255 = vtanh.pop %v5151
      %v5256 = vtanh.pop %v4217
      %v5257 = vtanh.pop %v4219
      %v5258 = vtanh.pop %v4539
      %v5259 = vtanh.pop %v4541
      %v5260 = vtanh.pop %v4861
      %v5261 = vtanh.pop %v4863
      %v5262 = vtanh.pop %v5156
      %v5263 = vtanh.pop %v4223
      %v5264 = vtanh.pop %v4225
      %v5265 = vtanh.pop %v4545
      %v5266 = vtanh.pop %v4547
      %v5267 = vtanh.pop %v4867
      %v5268 = vtanh.pop %v4869
      %v5269 = vtanh.pop %v5161
      %v5270 = vtanh.pop %v4229
      %v5271 = vtanh.pop %v4231
      %v5272 = vtanh.pop %v4551
      %v5273 = vtanh.pop %v4553
      %v5274 = vtanh.pop %v4873
      %v5275 = vtanh.pop %v4875
      %v5276 = vtanh.pop %v5166
      %v5277 = vtanh.pop %v4235
      %v5278 = vtanh.pop %v4237
      %v5279 = vtanh.pop %v4557
      %v5280 = vtanh.pop %v4559
      %v5281 = vtanh.pop %v4879
      %v5282 = vtanh.pop %v4881
      %v5283 = vtanh.pop %v5171
      %v5284 = vtanh.pop %v4241
      %v5285 = vtanh.pop %v4243
      %v5286 = vtanh.pop %v4563
      %v5287 = vtanh.pop %v4565
      %v5288 = vtanh.pop %v4885
      %v5289 = vtanh.pop %v4887
      %v5290 = vtanh.pop %v5176
      %5291 = vst [vmem:[%s457] sm:$0xff] %v5179
      %5292 = vst [vmem:[%s457 + $0x8] sm:$0xff] %v5180
      %5293 = vst [vmem:[%s457 + $0x10] sm:$0xff] %v5181
      %5294 = vst [vmem:[%s457 + $0x18] sm:$0xff] %v5182
      %5295 = vst [vmem:[%s457 + $0x20] sm:$0xff] %v5183
      %5296 = vst [vmem:[%s457 + $0x28] sm:$0xff] %v5184
      %5297 = vst.msk [vmem:[%s457 + $0x30] sm:$0xff] %vm997, %v5185
      %5298 = vst [vmem:[%s457 + $0x38] sm:$0xff] %v5186
      %5299 = vst [vmem:[%s457 + $0x40] sm:$0xff] %v5187
      %5300 = vst [vmem:[%s457 + $0x48] sm:$0xff] %v5188
      %5301 = vst [vmem:[%s457 + $0x50] sm:$0xff] %v5189
      %5302 = vst [vmem:[%s457 + $0x58] sm:$0xff] %v5190
      %5303 = vst [vmem:[%s457 + $0x60] sm:$0xff] %v5191
      %5304 = vst.msk [vmem:[%s457 + $0x68] sm:$0xff] %vm997, %v5192
      %5305 = vst [vmem:[%s457 + $0x70] sm:$0xff] %v5193
      %5306 = vst [vmem:[%s457 + $0x78] sm:$0xff] %v5194
      %5307 = vst [vmem:[%s457 + $0x80] sm:$0xff] %v5195
      %5308 = vst [vmem:[%s457 + $0x88] sm:$0xff] %v5196
      %5309 = vst [vmem:[%s457 + $0x90] sm:$0xff] %v5197
      %5310 = vst [vmem:[%s457 + $0x98] sm:$0xff] %v5198
      %5311 = vst.msk [vmem:[%s457 + $0xa0] sm:$0xff] %vm997, %v5199
      %5312 = vst [vmem:[%s457 + $0xa8] sm:$0xff] %v5200
      %5313 = vst [vmem:[%s457 + $0xb0] sm:$0xff] %v5201
      %5314 = vst [vmem:[%s457 + $0xb8] sm:$0xff] %v5202
      %5315 = vst [vmem:[%s457 + $0xc0] sm:$0xff] %v5203
      %5316 = vst [vmem:[%s457 + $0xc8] sm:$0xff] %v5204
      %5317 = vst [vmem:[%s457 + $0xd0] sm:$0xff] %v5205
      %5318 = vst.msk [vmem:[%s457 + $0xd8] sm:$0xff] %vm997, %v5206
      %5319 = vst [vmem:[%s457 + $0xe0] sm:$0xff] %v5207
      %5320 = vst [vmem:[%s457 + $0xe8] sm:$0xff] %v5208
      %5321 = vst [vmem:[%s457 + $0xf0] sm:$0xff] %v5209
      %5322 = vst [vmem:[%s457 + $0xf8] sm:$0xff] %v5210
      %5323 = vst [vmem:[%s457 + $0x100] sm:$0xff] %v5211
      %5324 = vst [vmem:[%s457 + $0x108] sm:$0xff] %v5212
      %5325 = vst.msk [vmem:[%s457 + $0x110] sm:$0xff] %vm997, %v5213
      %5326 = vst [vmem:[%s457 + $0x118] sm:$0xff] %v5214
      %5327 = vst [vmem:[%s457 + $0x120] sm:$0xff] %v5215
      %5328 = vst [vmem:[%s457 + $0x128] sm:$0xff] %v5216
      %5329 = vst [vmem:[%s457 + $0x130] sm:$0xff] %v5217
      %5330 = vst [vmem:[%s457 + $0x138] sm:$0xff] %v5218
      %5331 = vst [vmem:[%s457 + $0x140] sm:$0xff] %v5219
      %5332 = vst.msk [vmem:[%s457 + $0x148] sm:$0xff] %vm997, %v5220
      %5333 = vst [vmem:[%s457 + $0x150] sm:$0xff] %v5221
      %5334 = vst [vmem:[%s457 + $0x158] sm:$0xff] %v5222
      %5335 = vst [vmem:[%s457 + $0x160] sm:$0xff] %v5223
      %5336 = vst [vmem:[%s457 + $0x168] sm:$0xff] %v5224
      %5337 = vst [vmem:[%s457 + $0x170] sm:$0xff] %v5225
      %5338 = vst [vmem:[%s457 + $0x178] sm:$0xff] %v5226
      %5339 = vst.msk [vmem:[%s457 + $0x180] sm:$0xff] %vm997, %v5227
      %5340 = vst [vmem:[%s457 + $0x188] sm:$0xff] %v5228
      %5341 = vst [vmem:[%s457 + $0x190] sm:$0xff] %v5229
      %5342 = vst [vmem:[%s457 + $0x198] sm:$0xff] %v5230
      %5343 = vst [vmem:[%s457 + $0x1a0] sm:$0xff] %v5231
      %5344 = vst [vmem:[%s457 + $0x1a8] sm:$0xff] %v5232
      %5345 = vst [vmem:[%s457 + $0x1b0] sm:$0xff] %v5233
      %5346 = vst.msk [vmem:[%s457 + $0x1b8] sm:$0xff] %vm997, %v5234
      %5347 = vst [vmem:[%s457 + $0x1c0] sm:$0xff] %v5235
      %5348 = vst [vmem:[%s457 + $0x1c8] sm:$0xff] %v5236
      %5349 = vst [vmem:[%s457 + $0x1d0] sm:$0xff] %v5237
      %5350 = vst [vmem:[%s457 + $0x1d8] sm:$0xff] %v5238
      %5351 = vst [vmem:[%s457 + $0x1e0] sm:$0xff] %v5239
      %5352 = vst [vmem:[%s457 + $0x1e8] sm:$0xff] %v5240
      %5353 = vst.msk [vmem:[%s457 + $0x1f0] sm:$0xff] %vm997, %v5241
      %5354 = vst [vmem:[%s457 + $0x1f8] sm:$0xff] %v5242
      %5355 = vst [vmem:[%s457 + $0x200] sm:$0xff] %v5243
      %5356 = vst [vmem:[%s457 + $0x208] sm:$0xff] %v5244
      %5357 = vst [vmem:[%s457 + $0x210] sm:$0xff] %v5245
      %5358 = vst [vmem:[%s457 + $0x218] sm:$0xff] %v5246
      %5359 = vst [vmem:[%s457 + $0x220] sm:$0xff] %v5247
      %5360 = vst.msk [vmem:[%s457 + $0x228] sm:$0xff] %vm997, %v5248
      %5361 = vst [vmem:[%s457 + $0x230] sm:$0xff] %v5249
      %5362 = vst [vmem:[%s457 + $0x238] sm:$0xff] %v5250
      %5363 = vst [vmem:[%s457 + $0x240] sm:$0xff] %v5251
      %5364 = vst [vmem:[%s457 + $0x248] sm:$0xff] %v5252
      %5365 = vst [vmem:[%s457 + $0x250] sm:$0xff] %v5253
      %5366 = vst [vmem:[%s457 + $0x258] sm:$0xff] %v5254
      %5367 = vst.msk [vmem:[%s457 + $0x260] sm:$0xff] %vm997, %v5255
      %5368 = vst [vmem:[%s457 + $0x268] sm:$0xff] %v5256
      %5369 = vst [vmem:[%s457 + $0x270] sm:$0xff] %v5257
      %5370 = vst [vmem:[%s457 + $0x278] sm:$0xff] %v5258
      %5371 = vst [vmem:[%s457 + $0x280] sm:$0xff] %v5259
      %5372 = vst [vmem:[%s457 + $0x288] sm:$0xff] %v5260
      %5373 = vst [vmem:[%s457 + $0x290] sm:$0xff] %v5261
      %5374 = vst.msk [vmem:[%s457 + $0x298] sm:$0xff] %vm997, %v5262
      %5375 = vst [vmem:[%s457 + $0x2a0] sm:$0xff] %v5263
      %5376 = vst [vmem:[%s457 + $0x2a8] sm:$0xff] %v5264
      %5377 = vst [vmem:[%s457 + $0x2b0] sm:$0xff] %v5265
      %5378 = vst [vmem:[%s457 + $0x2b8] sm:$0xff] %v5266
      %5379 = vst [vmem:[%s457 + $0x2c0] sm:$0xff] %v5267
      %5380 = vst [vmem:[%s457 + $0x2c8] sm:$0xff] %v5268
      %5381 = vst.msk [vmem:[%s457 + $0x2d0] sm:$0xff] %vm997, %v5269
      %5382 = vst [vmem:[%s457 + $0x2d8] sm:$0xff] %v5270
      %5383 = vst [vmem:[%s457 + $0x2e0] sm:$0xff] %v5271
      %5384 = vst [vmem:[%s457 + $0x2e8] sm:$0xff] %v5272
      %5385 = vst [vmem:[%s457 + $0x2f0] sm:$0xff] %v5273
      %5386 = vst [vmem:[%s457 + $0x2f8] sm:$0xff] %v5274
      %5387 = vst [vmem:[%s457 + $0x300] sm:$0xff] %v5275
      %5388 = vst.msk [vmem:[%s457 + $0x308] sm:$0xff] %vm997, %v5276
      %5389 = vst [vmem:[%s457 + $0x310] sm:$0xff] %v5277
      %5390 = vst [vmem:[%s457 + $0x318] sm:$0xff] %v5278
      %5391 = vst [vmem:[%s457 + $0x320] sm:$0xff] %v5279
      %5392 = vst [vmem:[%s457 + $0x328] sm:$0xff] %v5280
      %5393 = vst [vmem:[%s457 + $0x330] sm:$0xff] %v5281
      %5394 = vst [vmem:[%s457 + $0x338] sm:$0xff] %v5282
      %5395 = vst.msk [vmem:[%s457 + $0x340] sm:$0xff] %vm997, %v5283
      %5396 = vst [vmem:[%s457 + $0x348] sm:$0xff] %v5284
      %5397 = vst [vmem:[%s457 + $0x350] sm:$0xff] %v5285
      %5398 = vst [vmem:[%s457 + $0x358] sm:$0xff] %v5286
      %5399 = vst [vmem:[%s457 + $0x360] sm:$0xff] %v5287
      %5400 = vst [vmem:[%s457 + $0x368] sm:$0xff] %v5288
      %5401 = vst [vmem:[%s457 + $0x370] sm:$0xff] %v5289
      %5402 = vst.msk [vmem:[%s457 + $0x378] sm:$0xff] %vm997, %v5290
      %5403 = vst.msk [vmem:[%s463] sm:$0xff] %vm2990, %v2766
      %5404 = vst.msk [vmem:[%s463 + $0x8] sm:$0xff] %vm2990, %v2772
      %5405 = vst.msk [vmem:[%s463 + $0x10] sm:$0xff] %vm2990, %v2778
      %5406 = vst.msk [vmem:[%s463 + $0x18] sm:$0xff] %vm2990, %v2784
      %5407 = vst.msk [vmem:[%s463 + $0x20] sm:$0xff] %vm2990, %v2790
      %5408 = vst.msk [vmem:[%s463 + $0x28] sm:$0xff] %vm2990, %v2796
      %5409 = vst.msk [vmem:[%s463 + $0x30] sm:$0xff] %vm2990, %v2802
      %5410 = vst.msk [vmem:[%s463 + $0x38] sm:$0xff] %vm2990, %v2808
      %5411 = vst.msk [vmem:[%s463 + $0x40] sm:$0xff] %vm2990, %v2814
      %5412 = vst.msk [vmem:[%s463 + $0x48] sm:$0xff] %vm2990, %v2820
      %5413 = vst.msk [vmem:[%s463 + $0x50] sm:$0xff] %vm2990, %v2826
      %5414 = vst.msk [vmem:[%s463 + $0x58] sm:$0xff] %vm2990, %v2832
      %5415 = vst.msk [vmem:[%s463 + $0x60] sm:$0xff] %vm2990, %v2838
      %5416 = vst.msk [vmem:[%s463 + $0x68] sm:$0xff] %vm2990, %v2844
      %5417 = vst.msk [vmem:[%s463 + $0x70] sm:$0xff] %vm2990, %v2850
      %5418 = vst.msk [vmem:[%s463 + $0x78] sm:$0xff] %vm2990, %v2856
      %5419 = vst.msk [vmem:[%s469] sm:$0xff] %vm2990, %v2768
      %5420 = vst.msk [vmem:[%s469 + $0x8] sm:$0xff] %vm2990, %v2774
      %5421 = vst.msk [vmem:[%s469 + $0x10] sm:$0xff] %vm2990, %v2780
      %5422 = vst.msk [vmem:[%s469 + $0x18] sm:$0xff] %vm2990, %v2786
      %5423 = vst.msk [vmem:[%s469 + $0x20] sm:$0xff] %vm2990, %v2792
      %5424 = vst.msk [vmem:[%s469 + $0x28] sm:$0xff] %vm2990, %v2798
      %5425 = vst.msk [vmem:[%s469 + $0x30] sm:$0xff] %vm2990, %v2804
      %5426 = vst.msk [vmem:[%s469 + $0x38] sm:$0xff] %vm2990, %v2810
      %5427 = vst.msk [vmem:[%s469 + $0x40] sm:$0xff] %vm2990, %v2816
      %5428 = vst.msk [vmem:[%s469 + $0x48] sm:$0xff] %vm2990, %v2822
      %5429 = vst.msk [vmem:[%s469 + $0x50] sm:$0xff] %vm2990, %v2828
      %5430 = vst.msk [vmem:[%s469 + $0x58] sm:$0xff] %vm2990, %v2834
      %5431 = vst.msk [vmem:[%s469 + $0x60] sm:$0xff] %vm2990, %v2840
      %5432 = vst.msk [vmem:[%s469 + $0x68] sm:$0xff] %vm2990, %v2846
      %5433 = vst.msk [vmem:[%s469 + $0x70] sm:$0xff] %vm2990, %v2852
      %5434 = vst.msk [vmem:[%s469 + $0x78] sm:$0xff] %vm2990, %v2858
      %s5435 = smul.u32 16, %s24
      %p5436 = scmp.lt.s32.totalorder %s5435, 31
      %s5437 = scalar_select %p5436, %s5435, 31
      %s5438 = smul.addr %s5437, 7
      %s5439 = smul.addr %s5438, 8
      %s5440 = scalar_lea.vmem %s10, %s5439
      %s5441 = smul.u32 16, %s24
      %p5442 = scmp.lt.s32.totalorder %s5441, 31
      %s5443 = scalar_select %p5442, %s5441, 31
      %s5444 = smul.addr %s5443, 8
      %s5445 = scalar_lea.vmem %s11, %s5444
      %s5446 = smul.u32 16, %s24
      %p5447 = scmp.lt.s32.totalorder %s5446, 31
      %s5448 = scalar_select %p5447, %s5446, 31
      %s5449 = smul.addr %s5448, 8
      %s5450 = scalar_lea.vmem %s12, %s5449
      // Predicated region
      $region61: #{tpu_custom_call.1} parent=59 // pred_check
        %p5451 = pneg %p262
      $region62: #{tpu_custom_call.1} parent=59 // pred_check_branch
        %5453 = sbr.rel (%p5451) target = $region64
      $region63: #{tpu_custom_call.1} parent=59 // pred_region
        %s5454 = smul.u32 16, %s24
      $region64: #{tpu_custom_call.1} parent=59 // pred_fallthru
        _
      // Predicated region
      $region65: #{tpu_custom_call.1} parent=59 // pred_check
        %p5455 = pneg %p288
      $region66: #{tpu_custom_call.1} parent=59 // pred_check_branch
        %5457 = sbr.rel (%p5455) target = $region68
      $region67: #{tpu_custom_call.1} parent=59 // pred_region
        %s5458 = smul.u32 16, %s24
      $region68: #{tpu_custom_call.1} parent=59 // pred_fallthru
        _
      // Predicated region
      $region69: #{tpu_custom_call.1} parent=59 // pred_check
        %p5459 = pneg %p314
      $region70: #{tpu_custom_call.1} parent=59 // pred_check_branch
        %5461 = sbr.rel (%p5459) target = $region72
      $region71: #{tpu_custom_call.1} parent=59 // pred_region
        %s5462 = smul.u32 16, %s24
      $region72: #{tpu_custom_call.1} parent=59 // pred_fallthru
        _
    $region60: #{tpu_custom_call.1} parent=5 // pred_fallthru
      _
    %p5463 = scmp.le.s32.totalorder 2, %s19
    // Predicated region
    $region73: #{tpu_custom_call.1} parent=5 // pred_check
      %p5464 = pneg %p5463
    $region74: #{tpu_custom_call.1} parent=5 // pred_check_branch
      %5466 = sbr.rel (%p5464) target = $region76
    $region75: #{tpu_custom_call.1} parent=5 // pred_region
      %s5467 = ssub.s32 %s19, 2
      // Predicated region
      $region77: #{tpu_custom_call.1} parent=75 // pred_check
        %p5468 = pneg %p268
      $region78: #{tpu_custom_call.1} parent=75 // pred_check_branch
        %5470 = sbr.rel (%p5468) target = $region80
      $region79: #{tpu_custom_call.1} parent=75 // pred_region
        %s5471 = smul.u32 16, %s25
        %p5472 = scmp.lt.s32.totalorder %s5471, 31
        %s5473 = scalar_select %p5472, %s5471, 31
        %s5474 = smul.addr %s5473, 7
        %s5475 = smul.addr %s5474, 8
        %s5476 = scalar_lea.vmem %s10, %s5475
      $region80: #{tpu_custom_call.1} parent=75 // pred_fallthru
        _
      // Predicated region
      $region81: #{tpu_custom_call.1} parent=75 // pred_check
        %p5477 = pneg %p294
      $region82: #{tpu_custom_call.1} parent=75 // pred_check_branch
        %5479 = sbr.rel (%p5477) target = $region84
      $region83: #{tpu_custom_call.1} parent=75 // pred_region
        %s5480 = smul.u32 16, %s25
        %p5481 = scmp.lt.s32.totalorder %s5480, 31
        %s5482 = scalar_select %p5481, %s5480, 31
        %s5483 = smul.addr %s5482, 8
        %s5484 = scalar_lea.vmem %s11, %s5483
      $region84: #{tpu_custom_call.1} parent=75 // pred_fallthru
        _
      // Predicated region
      $region85: #{tpu_custom_call.1} parent=75 // pred_check
        %p5485 = pneg %p320
      $region86: #{tpu_custom_call.1} parent=75 // pred_check_branch
        %5487 = sbr.rel (%p5485) target = $region88
      $region87: #{tpu_custom_call.1} parent=75 // pred_region
        %s5488 = smul.u32 16, %s25
        %p5489 = scmp.lt.s32.totalorder %s5488, 31
        %s5490 = scalar_select %p5489, %s5488, 31
        %s5491 = smul.addr %s5490, 8
        %s5492 = scalar_lea.vmem %s12, %s5491
      $region88: #{tpu_custom_call.1} parent=75 // pred_fallthru
        _
    $region76: #{tpu_custom_call.1} parent=5 // pred_fallthru
      _
  $region6: #{tpu_custom_call.1} parent=0 // loop_footer
    %s23 = sadd.s32 1, %s19
  $region7: #{tpu_custom_call.1} parent=0 // loop_footer_branch
    %18 = sbr.rel target = $region3
  $region8: #{tpu_custom_call.1} parent=0 // loop_exit
    _

</llo_original>
